<compile_context>
chip_gen: v7x
topology: tpu7x:2x2x1
jax: 0.10.0
libtpu: 0.0.40
codegen_flags: <defaults>
</compile_context>

<pallas_src>
import functools

import jax
import jax.numpy as jnp
from jax.experimental import pallas as pl
from jax.experimental.pallas import tpu as pltpu

EPS = 1e-5          # nn.BatchNorm3d default eps
K = 3
KK = K * K * K      # 27 taps
VMEM_LIMIT = 32 * 1024 * 1024   # safe on v5e/v6e (128 MiB) and v7x (64 MiB)


# ----------------------------- Pallas kernels -------------------------------

def _conv3d_stats_kernel(p0_ref, p1_ref, p2_ref, w_ref, y_ref, st_ref,
                         *, H, W, Cin, Cout):
    """3x3x3 conv (stride 1, pad 1) for one output depth plane + tile stats.

    p{0,1,2}_ref : (H+2, W+2, Cin) bf16   halo'd input planes at depth d,d+1,d+2
    w_ref        : (27, Cin, Cout) bf16   resident weights, tap-major (kd,kh,kw)
    y_ref        : (H, W, Cout)    bf16   conv output plane (compact, no bias)
    st_ref       : (2, Cout)       f32    per-tile [sum, sum-of-squares]
    """
    planes = (p0_ref, p1_ref, p2_ref)
    acc = jnp.zeros((H * W, Cout), jnp.float32)
    for kd in range(K):
        pk = planes[kd]
        for kh in range(K):
            for kw in range(K):
                # Shifted-slice tap built in VMEM (no HBM im2col slab).
                tap = pk[kh:kh + H, kw:kw + W, :].reshape(H * W, Cin)
                acc = acc + jnp.dot(tap, w_ref[kd * 9 + kh * 3 + kw],
                                    preferred_element_type=jnp.float32)
    y_ref[...] = acc.reshape(H, W, Cout).astype(y_ref.dtype)
    # Batch-norm partial statistics from the f32 accumulator (pre-downcast),
    # written as two separate row stores (no concat).
    st_ref[0:1, :] = jnp.sum(acc, axis=0, keepdims=True)
    st_ref[1:2, :] = jnp.sum(acc * acc, axis=0, keepdims=True)


def _affine_relu_kernel(y_ref, sc_ref, sh_ref, o_ref):
    """out = relu(y*scale + shift) on a lane-dense (rows, H*W*C) tile."""
    v = y_ref[...].astype(jnp.float32) * sc_ref[...] + sh_ref[...]
    o_ref[...] = jnp.maximum(v, 0.0).astype(o_ref.dtype)


def _affine_res_relu_kernel(y_ref, sc_ref, sh_ref, r_ref, o_ref):
    """out = relu(y*scale + shift + residual)."""
    v = (y_ref[...].astype(jnp.float32) * sc_ref[...] + sh_ref[...]
         + r_ref[...].astype(jnp.float32))
    o_ref[...] = jnp.maximum(v, 0.0).astype(o_ref.dtype)


# ------------------------------- JAX glue ------------------------------------

def _pack_weight(w_oidhw):
    """(Cout, Cin, 3,3,3) -> (27, Cin, Cout) bf16, tap-major (kd, kh, kw)."""
    cout, cin = w_oidhw.shape[:2]
    wm = jnp.transpose(w_oidhw, (2, 3, 4, 1, 0)).reshape(KK, cin, cout)
    return wm.astype(jnp.bfloat16)


def _conv3d_pass(xpad, wmat, n, d, h, w, cin, cout):
    """Per-plane conv + partial stats. Grid (N, D), both axes parallel."""
    hp, wp = h + 2, w + 2
    kern = functools.partial(_conv3d_stats_kernel, H=h, W=w, Cin=cin, Cout=cout)

    def plane_spec(kd):
        return pl.BlockSpec((None, None, hp, wp, cin),
                            lambda i, j, kd=kd: (i, j + kd, 0, 0, 0))

    flops = 2 * n * d * h * w * KK * cin * cout
    bytes_accessed = (3 * xpad.size * 2 + wmat.size * 2
                      + n * d * h * w * cout * 2 + n * d * 2 * cout * 4)
    return pl.pallas_call(
        kern,
        grid=(n, d),
        in_specs=[
            plane_spec(0), plane_spec(1), plane_spec(2),          # halo'd planes
            pl.BlockSpec((KK, cin, cout), lambda i, j: (0, 0, 0)),  # resident W
        ],
        out_specs=(
            pl.BlockSpec((None, None, h, w, cout), lambda i, j: (i, j, 0, 0, 0)),
            pl.BlockSpec((None, None, 2, cout), lambda i, j: (i, j, 0, 0)),
        ),
        out_shape=(
            jax.ShapeDtypeStruct((n, d, h, w, cout), jnp.bfloat16),   # y (compact)
            jax.ShapeDtypeStruct((n, d, 2, cout), jnp.float32),       # partial stats
        ),
        compiler_params=pltpu.CompilerParams(
            dimension_semantics=("parallel", "parallel"),
            vmem_limit_bytes=VMEM_LIMIT),
        cost_estimate=pl.CostEstimate(flops=flops, transcendentals=0,
                                      bytes_accessed=bytes_accessed),
    )(xpad, xpad, xpad, wmat)


def _pick_rows(m2, row_bytes):
    """Largest sublane-aligned row tile dividing m2 under a small VMEM budget."""
    if m2 % 8 != 0:
        return m2                      # whole array as one (legal) block
    tr = 8
    for cand in (16, 32, 64, 128, 256, 512):
        if m2 % cand == 0 and cand * row_bytes <= (4 << 20):
            tr = cand
    return tr


def _affine_act_pass(y2d, scale_row, shift_row, res2d, out_dtype, tr):
    """Lane-dense fused BN-affine (+ optional residual) + ReLU."""
    m2, l = y2d.shape
    row = pl.BlockSpec((tr, l), lambda i: (i, 0))
    const = pl.BlockSpec((1, l), lambda i: (0, 0))
    if res2d is None:
        kern, in_specs, args = _affine_relu_kernel, [row, const, const], (
            y2d, scale_row, shift_row)
    else:
        kern, in_specs, args = _affine_res_relu_kernel, [row, const, const, row], (
            y2d, scale_row, shift_row, res2d)
    return pl.pallas_call(
        kern,
        grid=(m2 // tr,),
        in_specs=in_specs,
        out_specs=row,
        out_shape=jax.ShapeDtypeStruct((m2, l), out_dtype),
        compiler_params=pltpu.CompilerParams(
            dimension_semantics=("parallel",),
            vmem_limit_bytes=VMEM_LIMIT),
    )(*args)


def _bn_scale_shift(partial_stats, gamma, beta, m):
    """Reduce per-tile [sum, sumsq] and fold BN into a per-channel affine."""
    s = jnp.sum(partial_stats, axis=(0, 1))          # (2, C) f32
    mean = s[0] / m
    var = jnp.maximum(s[1] / m - mean * mean, 0.0)
    scale = gamma.astype(jnp.float32) * jax.lax.rsqrt(var + EPS)
    shift = beta.astype(jnp.float32) - mean * scale
    return scale, shift


def residual_block_forward(x_ncdhw, params):
    """ResidualBlock forward (train-mode BatchNorm, identity shortcut)."""
    n, cin, d, h, w = x_ncdhw.shape
    cout = params["w1"].shape[0]
    assert params["w1"].shape[1] == cin and cin == cout, \
        "identity shortcut requires Cin == Cout"
    m = n * d * h * w          # elements per channel (batch statistics)
    m2 = n * d                 # rows of the lane-dense elementwise view
    l = h * w * cout           # lanes of the lane-dense elementwise view

    x_ndhwc = jnp.transpose(x_ncdhw, (0, 2, 3, 4, 1)).astype(jnp.float32)

    # Conv biases b1/b2 are dropped: a per-channel constant bias is exactly
    # cancelled by BatchNorm's batch-mean subtraction, so it is a no-op here.
    w1 = _pack_weight(params["w1"])
    w2 = _pack_weight(params["w2"])

    # --- Conv1 + batch stats (taps built in-kernel from halo'd planes) -------
    xpad = jnp.pad(x_ndhwc.astype(jnp.bfloat16),
                   ((0, 0), (1, 1), (1, 1), (1, 1), (0, 0)))
    y1, st1 = _conv3d_pass(xpad, w1, n, d, h, w, cin, cout)

    # --- BN1 + ReLU (lane-dense, scale/shift precomputed once) ---------------
    scale1, shift1 = _bn_scale_shift(st1, params["g1"], params["beta1"], m)
    tr = _pick_rows(m2, l * 12)
    h1 = _affine_act_pass(y1.reshape(m2, l),
                          jnp.tile(scale1, h * w).reshape(1, l),
                          jnp.tile(shift1, h * w).reshape(1, l),
                          None, jnp.bfloat16, tr)

    # --- Conv2 + batch stats ---------------------------------------------------
    h1pad = jnp.pad(h1.reshape(n, d, h, w, cout),
                    ((0, 0), (1, 1), (1, 1), (1, 1), (0, 0)))
    y2, st2 = _conv3d_pass(h1pad, w2, n, d, h, w, cout, cout)

    # --- BN2 + residual + ReLU -------------------------------------------------
    scale2, shift2 = _bn_scale_shift(st2, params["g2"], params["beta2"], m)
    out = _affine_act_pass(y2.reshape(m2, l),
                           jnp.tile(scale2, h * w).reshape(1, l),
                           jnp.tile(shift2, h * w).reshape(1, l),
                           x_ndhwc.reshape(m2, l), jnp.float32, tr)

    out = out.reshape(n, d, h, w, cout)
    return jnp.transpose(out, (0, 4, 1, 2, 3))                  # back to NCDHW


# --------------------------- pure-JAX reference ------------------------------

def _reference_forward(x, p):
    """Reference with the kernel's precision policy: bf16 matmul operands and
    bf16-stored activations, f32 accumulation / BN math, batch statistics."""
    rnd = lambda v: v.astype(jnp.bfloat16).astype(jnp.float32)

    def conv3d(hh, wgt, b):
        y = jax.lax.conv_general_dilated(
            rnd(hh), rnd(wgt), window_strides=(1, 1, 1),
            padding=((1, 1), (1, 1), (1, 1)),
            dimension_numbers=("NCDHW", "OIDHW", "NCDHW"),
            precision=jax.lax.Precision.HIGHEST)
        return y + b.reshape(1, -1, 1, 1, 1)

    def bn(y, g, bt):
        # stats from the f32 conv output; affine applied to the bf16-stored y
        mean = jnp.mean(y, axis=(0, 2, 3, 4), keepdims=True)
        var = jnp.mean((y - mean) ** 2, axis=(0, 2, 3, 4), keepdims=True)
        scale = g.reshape(1, -1, 1, 1, 1) * jax.lax.rsqrt(var + EPS)
        shift = bt.reshape(1, -1, 1, 1, 1) - mean * scale
        return rnd(y) * scale + shift

    hh = jnp.maximum(bn(conv3d(x, p["w1"], p["b1"]), p["g1"], p["beta1"]), 0.0)
    hh = bn(conv3d(hh, p["w2"], p["b2"]), p["g2"], p["beta2"])
    return jnp.maximum(hh + x, 0.0)


# ---------------------------------- main -------------------------------------

if __name__ == "__main__":
    N, Cin, Cout, D, H, W = 2, 8, 8, 8, 8, 8   # identity shortcut needs Cin==Cout

    key = jax.random.PRNGKey(0)
    ks = jax.random.split(key, 9)
    params = {
        "w1":    0.1 * jax.random.normal(ks[0], (Cout, Cin, K, K, K), jnp.float32),
        "b1":    0.1 * jax.random.normal(ks[1], (Cout,), jnp.float32),
        "g1":    1.0 + 0.1 * jax.random.normal(ks[2], (Cout,), jnp.float32),
        "beta1": 0.1 * jax.random.normal(ks[3], (Cout,), jnp.float32),
        "w2":    0.1 * jax.random.normal(ks[4], (Cout, Cout, K, K, K), jnp.float32),
        "b2":    0.1 * jax.random.normal(ks[5], (Cout,), jnp.float32),
        "g2":    1.0 + 0.1 * jax.random.normal(ks[6], (Cout,), jnp.float32),
        "beta2": 0.1 * jax.random.normal(ks[7], (Cout,), jnp.float32),
    }
    x = jax.random.normal(ks[8], (N, Cin, D, H, W), jnp.float32)

    out = jax.block_until_ready(jax.jit(residual_block_forward)(x, params))
    ref = jax.block_until_ready(_reference_forward(x, params))

    assert out.shape == (N, Cout, D, H, W), out.shape
    # Tolerance covers bf16 storage of y1/h1/y2 intermediates (both sides use
    # the same precision policy, so agreement is typically much tighter).
    assert jnp.allclose(out, ref, atol=2e-2, rtol=2e-2), (
        float(jnp.max(jnp.abs(out - ref))))
    print("KERNEL_OK")
</pallas_src>

<mosaic_0001>
module attributes {stable_mosaic.version = 11 : i64} {
  func.func @_conv3d_stats_kernel(%arg0: i32, %arg1: i32, %arg2: memref<1x1x10x10x8xbf16, #tpu.memory_space<vmem>>, %arg3: memref<1x1x10x10x8xbf16, #tpu.memory_space<vmem>>, %arg4: memref<1x1x10x10x8xbf16, #tpu.memory_space<vmem>>, %arg5: memref<27x8x8xbf16, #tpu.memory_space<vmem>>, %arg6: memref<1x1x8x8x8xbf16, #tpu.memory_space<vmem>>, %arg7: memref<1x1x2x8xf32, #tpu.memory_space<vmem>>) attributes {dimension_semantics = [#tpu.dimension_semantics<parallel>, #tpu.dimension_semantics<parallel>], iteration_bounds = array<i64: 2, 8>, scalar_prefetch = 0 : i64, scratch_operands = 0 : i64, tpu.core_type = #tpu.core_type<tc>, window_params = [{transform_indices = @transform_0, window_bounds = array<i64: 1, 1, 10, 10, 8>}, {transform_indices = @transform_1, window_bounds = array<i64: 1, 1, 10, 10, 8>}, {transform_indices = @transform_2, window_bounds = array<i64: 1, 1, 10, 10, 8>}, {pipeline_mode = #tpu.pipeline_mode<synchronous>, transform_indices = @transform_3, window_bounds = array<i64: 27, 8, 8>}, {transform_indices = @transform_4, window_bounds = array<i64: 1, 1, 8, 8, 8>}, {transform_indices = @transform_5, window_bounds = array<i64: 1, 1, 2, 8>}]} {
    %cst = arith.constant 0.000000e+00 : f32
    %0 = vector.broadcast %cst : f32 to vector<64x8xf32>
    %c0 = arith.constant 0 : index
    %c0_0 = arith.constant 0 : index
    %c0_1 = arith.constant 0 : index
    %c0_2 = arith.constant 0 : index
    %c0_3 = arith.constant 0 : index
    %1 = vector.load %arg2[%c0, %c0_0, %c0_1, %c0_2, %c0_3] : memref<1x1x10x10x8xbf16, #tpu.memory_space<vmem>>, vector<1x1x8x8x8xbf16>
    %2 = vector.shape_cast %1 : vector<1x1x8x8x8xbf16> to vector<8x8x8xbf16>
    %3 = vector.shape_cast %2 : vector<8x8x8xbf16> to vector<64x8xbf16>
    %c0_4 = arith.constant 0 : index
    %c0_5 = arith.constant 0 : index
    %c0_6 = arith.constant 0 : index
    %4 = vector.load %arg5[%c0_4, %c0_5, %c0_6] : memref<27x8x8xbf16, #tpu.memory_space<vmem>>, vector<1x8x8xbf16>
    %5 = vector.shape_cast %4 : vector<1x8x8xbf16> to vector<8x8xbf16>
    %cst_7 = arith.constant dense<0.000000e+00> : vector<64x8xf32>
    %6 = tpu.matmul %3, %5, %cst_7 {dimension_numbers = #tpu.dot_dimension_numbers<[1], [0], [0], [1], [0, 0, 1, 1], [], []>} : vector<64x8xbf16>, vector<8x8xbf16>, vector<64x8xf32> -> vector<64x8xf32>
    %7 = arith.addf %0, %6 : vector<64x8xf32>
    %c0_8 = arith.constant 0 : index
    %c0_9 = arith.constant 0 : index
    %c0_10 = arith.constant 0 : index
    %c1 = arith.constant 1 : index
    %c0_11 = arith.constant 0 : index
    %8 = vector.load %arg2[%c0_8, %c0_9, %c0_10, %c1, %c0_11] : memref<1x1x10x10x8xbf16, #tpu.memory_space<vmem>>, vector<1x1x8x8x8xbf16>
    %9 = vector.shape_cast %8 : vector<1x1x8x8x8xbf16> to vector<8x8x8xbf16>
    %10 = vector.shape_cast %9 : vector<8x8x8xbf16> to vector<64x8xbf16>
    %c1_12 = arith.constant 1 : index
    %c0_13 = arith.constant 0 : index
    %c0_14 = arith.constant 0 : index
    %11 = vector.load %arg5[%c1_12, %c0_13, %c0_14] : memref<27x8x8xbf16, #tpu.memory_space<vmem>>, vector<1x8x8xbf16>
    %12 = vector.shape_cast %11 : vector<1x8x8xbf16> to vector<8x8xbf16>
    %cst_15 = arith.constant dense<0.000000e+00> : vector<64x8xf32>
    %13 = tpu.matmul %10, %12, %cst_15 {dimension_numbers = #tpu.dot_dimension_numbers<[1], [0], [0], [1], [0, 0, 1, 1], [], []>} : vector<64x8xbf16>, vector<8x8xbf16>, vector<64x8xf32> -> vector<64x8xf32>
    %14 = arith.addf %7, %13 : vector<64x8xf32>
    %c0_16 = arith.constant 0 : index
    %c0_17 = arith.constant 0 : index
    %c0_18 = arith.constant 0 : index
    %c2 = arith.constant 2 : index
    %c0_19 = arith.constant 0 : index
    %15 = vector.load %arg2[%c0_16, %c0_17, %c0_18, %c2, %c0_19] : memref<1x1x10x10x8xbf16, #tpu.memory_space<vmem>>, vector<1x1x8x8x8xbf16>
    %16 = vector.shape_cast %15 : vector<1x1x8x8x8xbf16> to vector<8x8x8xbf16>
    %17 = vector.shape_cast %16 : vector<8x8x8xbf16> to vector<64x8xbf16>
    %c2_20 = arith.constant 2 : index
    %c0_21 = arith.constant 0 : index
    %c0_22 = arith.constant 0 : index
    %18 = vector.load %arg5[%c2_20, %c0_21, %c0_22] : memref<27x8x8xbf16, #tpu.memory_space<vmem>>, vector<1x8x8xbf16>
    %19 = vector.shape_cast %18 : vector<1x8x8xbf16> to vector<8x8xbf16>
    %cst_23 = arith.constant dense<0.000000e+00> : vector<64x8xf32>
    %20 = tpu.matmul %17, %19, %cst_23 {dimension_numbers = #tpu.dot_dimension_numbers<[1], [0], [0], [1], [0, 0, 1, 1], [], []>} : vector<64x8xbf16>, vector<8x8xbf16>, vector<64x8xf32> -> vector<64x8xf32>
    %21 = arith.addf %14, %20 : vector<64x8xf32>
    %c0_24 = arith.constant 0 : index
    %c0_25 = arith.constant 0 : index
    %c1_26 = arith.constant 1 : index
    %c0_27 = arith.constant 0 : index
    %c0_28 = arith.constant 0 : index
    %22 = vector.load %arg2[%c0_24, %c0_25, %c1_26, %c0_27, %c0_28] : memref<1x1x10x10x8xbf16, #tpu.memory_space<vmem>>, vector<1x1x8x8x8xbf16>
    %23 = vector.shape_cast %22 : vector<1x1x8x8x8xbf16> to vector<8x8x8xbf16>
    %24 = vector.shape_cast %23 : vector<8x8x8xbf16> to vector<64x8xbf16>
    %c3 = arith.constant 3 : index
    %c0_29 = arith.constant 0 : index
    %c0_30 = arith.constant 0 : index
    %25 = vector.load %arg5[%c3, %c0_29, %c0_30] : memref<27x8x8xbf16, #tpu.memory_space<vmem>>, vector<1x8x8xbf16>
    %26 = vector.shape_cast %25 : vector<1x8x8xbf16> to vector<8x8xbf16>
    %cst_31 = arith.constant dense<0.000000e+00> : vector<64x8xf32>
    %27 = tpu.matmul %24, %26, %cst_31 {dimension_numbers = #tpu.dot_dimension_numbers<[1], [0], [0], [1], [0, 0, 1, 1], [], []>} : vector<64x8xbf16>, vector<8x8xbf16>, vector<64x8xf32> -> vector<64x8xf32>
    %28 = arith.addf %21, %27 : vector<64x8xf32>
    %c0_32 = arith.constant 0 : index
    %c0_33 = arith.constant 0 : index
    %c1_34 = arith.constant 1 : index
    %c1_35 = arith.constant 1 : index
    %c0_36 = arith.constant 0 : index
    %29 = vector.load %arg2[%c0_32, %c0_33, %c1_34, %c1_35, %c0_36] : memref<1x1x10x10x8xbf16, #tpu.memory_space<vmem>>, vector<1x1x8x8x8xbf16>
    %30 = vector.shape_cast %29 : vector<1x1x8x8x8xbf16> to vector<8x8x8xbf16>
    %31 = vector.shape_cast %30 : vector<8x8x8xbf16> to vector<64x8xbf16>
    %c4 = arith.constant 4 : index
    %c0_37 = arith.constant 0 : index
    %c0_38 = arith.constant 0 : index
    %32 = vector.load %arg5[%c4, %c0_37, %c0_38] : memref<27x8x8xbf16, #tpu.memory_space<vmem>>, vector<1x8x8xbf16>
    %33 = vector.shape_cast %32 : vector<1x8x8xbf16> to vector<8x8xbf16>
    %cst_39 = arith.constant dense<0.000000e+00> : vector<64x8xf32>
    %34 = tpu.matmul %31, %33, %cst_39 {dimension_numbers = #tpu.dot_dimension_numbers<[1], [0], [0], [1], [0, 0, 1, 1], [], []>} : vector<64x8xbf16>, vector<8x8xbf16>, vector<64x8xf32> -> vector<64x8xf32>
    %35 = arith.addf %28, %34 : vector<64x8xf32>
    %c0_40 = arith.constant 0 : index
    %c0_41 = arith.constant 0 : index
    %c1_42 = arith.constant 1 : index
    %c2_43 = arith.constant 2 : index
    %c0_44 = arith.constant 0 : index
    %36 = vector.load %arg2[%c0_40, %c0_41, %c1_42, %c2_43, %c0_44] : memref<1x1x10x10x8xbf16, #tpu.memory_space<vmem>>, vector<1x1x8x8x8xbf16>
    %37 = vector.shape_cast %36 : vector<1x1x8x8x8xbf16> to vector<8x8x8xbf16>
    %38 = vector.shape_cast %37 : vector<8x8x8xbf16> to vector<64x8xbf16>
    %c5 = arith.constant 5 : index
    %c0_45 = arith.constant 0 : index
    %c0_46 = arith.constant 0 : index
    %39 = vector.load %arg5[%c5, %c0_45, %c0_46] : memref<27x8x8xbf16, #tpu.memory_space<vmem>>, vector<1x8x8xbf16>
    %40 = vector.shape_cast %39 : vector<1x8x8xbf16> to vector<8x8xbf16>
    %cst_47 = arith.constant dense<0.000000e+00> : vector<64x8xf32>
    %41 = tpu.matmul %38, %40, %cst_47 {dimension_numbers = #tpu.dot_dimension_numbers<[1], [0], [0], [1], [0, 0, 1, 1], [], []>} : vector<64x8xbf16>, vector<8x8xbf16>, vector<64x8xf32> -> vector<64x8xf32>
    %42 = arith.addf %35, %41 : vector<64x8xf32>
    %c0_48 = arith.constant 0 : index
    %c0_49 = arith.constant 0 : index
    %c2_50 = arith.constant 2 : index
    %c0_51 = arith.constant 0 : index
    %c0_52 = arith.constant 0 : index
    %43 = vector.load %arg2[%c0_48, %c0_49, %c2_50, %c0_51, %c0_52] : memref<1x1x10x10x8xbf16, #tpu.memory_space<vmem>>, vector<1x1x8x8x8xbf16>
    %44 = vector.shape_cast %43 : vector<1x1x8x8x8xbf16> to vector<8x8x8xbf16>
    %45 = vector.shape_cast %44 : vector<8x8x8xbf16> to vector<64x8xbf16>
    %c6 = arith.constant 6 : index
    %c0_53 = arith.constant 0 : index
    %c0_54 = arith.constant 0 : index
    %46 = vector.load %arg5[%c6, %c0_53, %c0_54] : memref<27x8x8xbf16, #tpu.memory_space<vmem>>, vector<1x8x8xbf16>
    %47 = vector.shape_cast %46 : vector<1x8x8xbf16> to vector<8x8xbf16>
    %cst_55 = arith.constant dense<0.000000e+00> : vector<64x8xf32>
    %48 = tpu.matmul %45, %47, %cst_55 {dimension_numbers = #tpu.dot_dimension_numbers<[1], [0], [0], [1], [0, 0, 1, 1], [], []>} : vector<64x8xbf16>, vector<8x8xbf16>, vector<64x8xf32> -> vector<64x8xf32>
    %49 = arith.addf %42, %48 : vector<64x8xf32>
    %c0_56 = arith.constant 0 : index
    %c0_57 = arith.constant 0 : index
    %c2_58 = arith.constant 2 : index
    %c1_59 = arith.constant 1 : index
    %c0_60 = arith.constant 0 : index
    %50 = vector.load %arg2[%c0_56, %c0_57, %c2_58, %c1_59, %c0_60] : memref<1x1x10x10x8xbf16, #tpu.memory_space<vmem>>, vector<1x1x8x8x8xbf16>
    %51 = vector.shape_cast %50 : vector<1x1x8x8x8xbf16> to vector<8x8x8xbf16>
    %52 = vector.shape_cast %51 : vector<8x8x8xbf16> to vector<64x8xbf16>
    %c7 = arith.constant 7 : index
    %c0_61 = arith.constant 0 : index
    %c0_62 = arith.constant 0 : index
    %53 = vector.load %arg5[%c7, %c0_61, %c0_62] : memref<27x8x8xbf16, #tpu.memory_space<vmem>>, vector<1x8x8xbf16>
    %54 = vector.shape_cast %53 : vector<1x8x8xbf16> to vector<8x8xbf16>
    %cst_63 = arith.constant dense<0.000000e+00> : vector<64x8xf32>
    %55 = tpu.matmul %52, %54, %cst_63 {dimension_numbers = #tpu.dot_dimension_numbers<[1], [0], [0], [1], [0, 0, 1, 1], [], []>} : vector<64x8xbf16>, vector<8x8xbf16>, vector<64x8xf32> -> vector<64x8xf32>
    %56 = arith.addf %49, %55 : vector<64x8xf32>
    %c0_64 = arith.constant 0 : index
    %c0_65 = arith.constant 0 : index
    %c2_66 = arith.constant 2 : index
    %c2_67 = arith.constant 2 : index
    %c0_68 = arith.constant 0 : index
    %57 = vector.load %arg2[%c0_64, %c0_65, %c2_66, %c2_67, %c0_68] : memref<1x1x10x10x8xbf16, #tpu.memory_space<vmem>>, vector<1x1x8x8x8xbf16>
    %58 = vector.shape_cast %57 : vector<1x1x8x8x8xbf16> to vector<8x8x8xbf16>
    %59 = vector.shape_cast %58 : vector<8x8x8xbf16> to vector<64x8xbf16>
    %c8 = arith.constant 8 : index
    %c0_69 = arith.constant 0 : index
    %c0_70 = arith.constant 0 : index
    %60 = vector.load %arg5[%c8, %c0_69, %c0_70] : memref<27x8x8xbf16, #tpu.memory_space<vmem>>, vector<1x8x8xbf16>
    %61 = vector.shape_cast %60 : vector<1x8x8xbf16> to vector<8x8xbf16>
    %cst_71 = arith.constant dense<0.000000e+00> : vector<64x8xf32>
    %62 = tpu.matmul %59, %61, %cst_71 {dimension_numbers = #tpu.dot_dimension_numbers<[1], [0], [0], [1], [0, 0, 1, 1], [], []>} : vector<64x8xbf16>, vector<8x8xbf16>, vector<64x8xf32> -> vector<64x8xf32>
    %63 = arith.addf %56, %62 : vector<64x8xf32>
    %c0_72 = arith.constant 0 : index
    %c0_73 = arith.constant 0 : index
    %c0_74 = arith.constant 0 : index
    %c0_75 = arith.constant 0 : index
    %c0_76 = arith.constant 0 : index
    %64 = vector.load %arg3[%c0_72, %c0_73, %c0_74, %c0_75, %c0_76] : memref<1x1x10x10x8xbf16, #tpu.memory_space<vmem>>, vector<1x1x8x8x8xbf16>
    %65 = vector.shape_cast %64 : vector<1x1x8x8x8xbf16> to vector<8x8x8xbf16>
    %66 = vector.shape_cast %65 : vector<8x8x8xbf16> to vector<64x8xbf16>
    %c9 = arith.constant 9 : index
    %c0_77 = arith.constant 0 : index
    %c0_78 = arith.constant 0 : index
    %67 = vector.load %arg5[%c9, %c0_77, %c0_78] : memref<27x8x8xbf16, #tpu.memory_space<vmem>>, vector<1x8x8xbf16>
    %68 = vector.shape_cast %67 : vector<1x8x8xbf16> to vector<8x8xbf16>
    %cst_79 = arith.constant dense<0.000000e+00> : vector<64x8xf32>
    %69 = tpu.matmul %66, %68, %cst_79 {dimension_numbers = #tpu.dot_dimension_numbers<[1], [0], [0], [1], [0, 0, 1, 1], [], []>} : vector<64x8xbf16>, vector<8x8xbf16>, vector<64x8xf32> -> vector<64x8xf32>
    %70 = arith.addf %63, %69 : vector<64x8xf32>
    %c0_80 = arith.constant 0 : index
    %c0_81 = arith.constant 0 : index
    %c0_82 = arith.constant 0 : index
    %c1_83 = arith.constant 1 : index
    %c0_84 = arith.constant 0 : index
    %71 = vector.load %arg3[%c0_80, %c0_81, %c0_82, %c1_83, %c0_84] : memref<1x1x10x10x8xbf16, #tpu.memory_space<vmem>>, vector<1x1x8x8x8xbf16>
    %72 = vector.shape_cast %71 : vector<1x1x8x8x8xbf16> to vector<8x8x8xbf16>
    %73 = vector.shape_cast %72 : vector<8x8x8xbf16> to vector<64x8xbf16>
    %c10 = arith.constant 10 : index
    %c0_85 = arith.constant 0 : index
    %c0_86 = arith.constant 0 : index
    %74 = vector.load %arg5[%c10, %c0_85, %c0_86] : memref<27x8x8xbf16, #tpu.memory_space<vmem>>, vector<1x8x8xbf16>
    %75 = vector.shape_cast %74 : vector<1x8x8xbf16> to vector<8x8xbf16>
    %cst_87 = arith.constant dense<0.000000e+00> : vector<64x8xf32>
    %76 = tpu.matmul %73, %75, %cst_87 {dimension_numbers = #tpu.dot_dimension_numbers<[1], [0], [0], [1], [0, 0, 1, 1], [], []>} : vector<64x8xbf16>, vector<8x8xbf16>, vector<64x8xf32> -> vector<64x8xf32>
    %77 = arith.addf %70, %76 : vector<64x8xf32>
    %c0_88 = arith.constant 0 : index
    %c0_89 = arith.constant 0 : index
    %c0_90 = arith.constant 0 : index
    %c2_91 = arith.constant 2 : index
    %c0_92 = arith.constant 0 : index
    %78 = vector.load %arg3[%c0_88, %c0_89, %c0_90, %c2_91, %c0_92] : memref<1x1x10x10x8xbf16, #tpu.memory_space<vmem>>, vector<1x1x8x8x8xbf16>
    %79 = vector.shape_cast %78 : vector<1x1x8x8x8xbf16> to vector<8x8x8xbf16>
    %80 = vector.shape_cast %79 : vector<8x8x8xbf16> to vector<64x8xbf16>
    %c11 = arith.constant 11 : index
    %c0_93 = arith.constant 0 : index
    %c0_94 = arith.constant 0 : index
    %81 = vector.load %arg5[%c11, %c0_93, %c0_94] : memref<27x8x8xbf16, #tpu.memory_space<vmem>>, vector<1x8x8xbf16>
    %82 = vector.shape_cast %81 : vector<1x8x8xbf16> to vector<8x8xbf16>
    %cst_95 = arith.constant dense<0.000000e+00> : vector<64x8xf32>
    %83 = tpu.matmul %80, %82, %cst_95 {dimension_numbers = #tpu.dot_dimension_numbers<[1], [0], [0], [1], [0, 0, 1, 1], [], []>} : vector<64x8xbf16>, vector<8x8xbf16>, vector<64x8xf32> -> vector<64x8xf32>
    %84 = arith.addf %77, %83 : vector<64x8xf32>
    %c0_96 = arith.constant 0 : index
    %c0_97 = arith.constant 0 : index
    %c1_98 = arith.constant 1 : index
    %c0_99 = arith.constant 0 : index
    %c0_100 = arith.constant 0 : index
    %85 = vector.load %arg3[%c0_96, %c0_97, %c1_98, %c0_99, %c0_100] : memref<1x1x10x10x8xbf16, #tpu.memory_space<vmem>>, vector<1x1x8x8x8xbf16>
    %86 = vector.shape_cast %85 : vector<1x1x8x8x8xbf16> to vector<8x8x8xbf16>
    %87 = vector.shape_cast %86 : vector<8x8x8xbf16> to vector<64x8xbf16>
    %c12 = arith.constant 12 : index
    %c0_101 = arith.constant 0 : index
    %c0_102 = arith.constant 0 : index
    %88 = vector.load %arg5[%c12, %c0_101, %c0_102] : memref<27x8x8xbf16, #tpu.memory_space<vmem>>, vector<1x8x8xbf16>
    %89 = vector.shape_cast %88 : vector<1x8x8xbf16> to vector<8x8xbf16>
    %cst_103 = arith.constant dense<0.000000e+00> : vector<64x8xf32>
    %90 = tpu.matmul %87, %89, %cst_103 {dimension_numbers = #tpu.dot_dimension_numbers<[1], [0], [0], [1], [0, 0, 1, 1], [], []>} : vector<64x8xbf16>, vector<8x8xbf16>, vector<64x8xf32> -> vector<64x8xf32>
    %91 = arith.addf %84, %90 : vector<64x8xf32>
    %c0_104 = arith.constant 0 : index
    %c0_105 = arith.constant 0 : index
    %c1_106 = arith.constant 1 : index
    %c1_107 = arith.constant 1 : index
    %c0_108 = arith.constant 0 : index
    %92 = vector.load %arg3[%c0_104, %c0_105, %c1_106, %c1_107, %c0_108] : memref<1x1x10x10x8xbf16, #tpu.memory_space<vmem>>, vector<1x1x8x8x8xbf16>
    %93 = vector.shape_cast %92 : vector<1x1x8x8x8xbf16> to vector<8x8x8xbf16>
    %94 = vector.shape_cast %93 : vector<8x8x8xbf16> to vector<64x8xbf16>
    %c13 = arith.constant 13 : index
    %c0_109 = arith.constant 0 : index
    %c0_110 = arith.constant 0 : index
    %95 = vector.load %arg5[%c13, %c0_109, %c0_110] : memref<27x8x8xbf16, #tpu.memory_space<vmem>>, vector<1x8x8xbf16>
    %96 = vector.shape_cast %95 : vector<1x8x8xbf16> to vector<8x8xbf16>
    %cst_111 = arith.constant dense<0.000000e+00> : vector<64x8xf32>
    %97 = tpu.matmul %94, %96, %cst_111 {dimension_numbers = #tpu.dot_dimension_numbers<[1], [0], [0], [1], [0, 0, 1, 1], [], []>} : vector<64x8xbf16>, vector<8x8xbf16>, vector<64x8xf32> -> vector<64x8xf32>
    %98 = arith.addf %91, %97 : vector<64x8xf32>
    %c0_112 = arith.constant 0 : index
    %c0_113 = arith.constant 0 : index
    %c1_114 = arith.constant 1 : index
    %c2_115 = arith.constant 2 : index
    %c0_116 = arith.constant 0 : index
    %99 = vector.load %arg3[%c0_112, %c0_113, %c1_114, %c2_115, %c0_116] : memref<1x1x10x10x8xbf16, #tpu.memory_space<vmem>>, vector<1x1x8x8x8xbf16>
    %100 = vector.shape_cast %99 : vector<1x1x8x8x8xbf16> to vector<8x8x8xbf16>
    %101 = vector.shape_cast %100 : vector<8x8x8xbf16> to vector<64x8xbf16>
    %c14 = arith.constant 14 : index
    %c0_117 = arith.constant 0 : index
    %c0_118 = arith.constant 0 : index
    %102 = vector.load %arg5[%c14, %c0_117, %c0_118] : memref<27x8x8xbf16, #tpu.memory_space<vmem>>, vector<1x8x8xbf16>
    %103 = vector.shape_cast %102 : vector<1x8x8xbf16> to vector<8x8xbf16>
    %cst_119 = arith.constant dense<0.000000e+00> : vector<64x8xf32>
    %104 = tpu.matmul %101, %103, %cst_119 {dimension_numbers = #tpu.dot_dimension_numbers<[1], [0], [0], [1], [0, 0, 1, 1], [], []>} : vector<64x8xbf16>, vector<8x8xbf16>, vector<64x8xf32> -> vector<64x8xf32>
    %105 = arith.addf %98, %104 : vector<64x8xf32>
    %c0_120 = arith.constant 0 : index
    %c0_121 = arith.constant 0 : index
    %c2_122 = arith.constant 2 : index
    %c0_123 = arith.constant 0 : index
    %c0_124 = arith.constant 0 : index
    %106 = vector.load %arg3[%c0_120, %c0_121, %c2_122, %c0_123, %c0_124] : memref<1x1x10x10x8xbf16, #tpu.memory_space<vmem>>, vector<1x1x8x8x8xbf16>
    %107 = vector.shape_cast %106 : vector<1x1x8x8x8xbf16> to vector<8x8x8xbf16>
    %108 = vector.shape_cast %107 : vector<8x8x8xbf16> to vector<64x8xbf16>
    %c15 = arith.constant 15 : index
    %c0_125 = arith.constant 0 : index
    %c0_126 = arith.constant 0 : index
    %109 = vector.load %arg5[%c15, %c0_125, %c0_126] : memref<27x8x8xbf16, #tpu.memory_space<vmem>>, vector<1x8x8xbf16>
    %110 = vector.shape_cast %109 : vector<1x8x8xbf16> to vector<8x8xbf16>
    %cst_127 = arith.constant dense<0.000000e+00> : vector<64x8xf32>
    %111 = tpu.matmul %108, %110, %cst_127 {dimension_numbers = #tpu.dot_dimension_numbers<[1], [0], [0], [1], [0, 0, 1, 1], [], []>} : vector<64x8xbf16>, vector<8x8xbf16>, vector<64x8xf32> -> vector<64x8xf32>
    %112 = arith.addf %105, %111 : vector<64x8xf32>
    %c0_128 = arith.constant 0 : index
    %c0_129 = arith.constant 0 : index
    %c2_130 = arith.constant 2 : index
    %c1_131 = arith.constant 1 : index
    %c0_132 = arith.constant 0 : index
    %113 = vector.load %arg3[%c0_128, %c0_129, %c2_130, %c1_131, %c0_132] : memref<1x1x10x10x8xbf16, #tpu.memory_space<vmem>>, vector<1x1x8x8x8xbf16>
    %114 = vector.shape_cast %113 : vector<1x1x8x8x8xbf16> to vector<8x8x8xbf16>
    %115 = vector.shape_cast %114 : vector<8x8x8xbf16> to vector<64x8xbf16>
    %c16 = arith.constant 16 : index
    %c0_133 = arith.constant 0 : index
    %c0_134 = arith.constant 0 : index
    %116 = vector.load %arg5[%c16, %c0_133, %c0_134] : memref<27x8x8xbf16, #tpu.memory_space<vmem>>, vector<1x8x8xbf16>
    %117 = vector.shape_cast %116 : vector<1x8x8xbf16> to vector<8x8xbf16>
    %cst_135 = arith.constant dense<0.000000e+00> : vector<64x8xf32>
    %118 = tpu.matmul %115, %117, %cst_135 {dimension_numbers = #tpu.dot_dimension_numbers<[1], [0], [0], [1], [0, 0, 1, 1], [], []>} : vector<64x8xbf16>, vector<8x8xbf16>, vector<64x8xf32> -> vector<64x8xf32>
    %119 = arith.addf %112, %118 : vector<64x8xf32>
    %c0_136 = arith.constant 0 : index
    %c0_137 = arith.constant 0 : index
    %c2_138 = arith.constant 2 : index
    %c2_139 = arith.constant 2 : index
    %c0_140 = arith.constant 0 : index
    %120 = vector.load %arg3[%c0_136, %c0_137, %c2_138, %c2_139, %c0_140] : memref<1x1x10x10x8xbf16, #tpu.memory_space<vmem>>, vector<1x1x8x8x8xbf16>
    %121 = vector.shape_cast %120 : vector<1x1x8x8x8xbf16> to vector<8x8x8xbf16>
    %122 = vector.shape_cast %121 : vector<8x8x8xbf16> to vector<64x8xbf16>
    %c17 = arith.constant 17 : index
    %c0_141 = arith.constant 0 : index
    %c0_142 = arith.constant 0 : index
    %123 = vector.load %arg5[%c17, %c0_141, %c0_142] : memref<27x8x8xbf16, #tpu.memory_space<vmem>>, vector<1x8x8xbf16>
    %124 = vector.shape_cast %123 : vector<1x8x8xbf16> to vector<8x8xbf16>
    %cst_143 = arith.constant dense<0.000000e+00> : vector<64x8xf32>
    %125 = tpu.matmul %122, %124, %cst_143 {dimension_numbers = #tpu.dot_dimension_numbers<[1], [0], [0], [1], [0, 0, 1, 1], [], []>} : vector<64x8xbf16>, vector<8x8xbf16>, vector<64x8xf32> -> vector<64x8xf32>
    %126 = arith.addf %119, %125 : vector<64x8xf32>
    %c0_144 = arith.constant 0 : index
    %c0_145 = arith.constant 0 : index
    %c0_146 = arith.constant 0 : index
    %c0_147 = arith.constant 0 : index
    %c0_148 = arith.constant 0 : index
    %127 = vector.load %arg4[%c0_144, %c0_145, %c0_146, %c0_147, %c0_148] : memref<1x1x10x10x8xbf16, #tpu.memory_space<vmem>>, vector<1x1x8x8x8xbf16>
    %128 = vector.shape_cast %127 : vector<1x1x8x8x8xbf16> to vector<8x8x8xbf16>
    %129 = vector.shape_cast %128 : vector<8x8x8xbf16> to vector<64x8xbf16>
    %c18 = arith.constant 18 : index
    %c0_149 = arith.constant 0 : index
    %c0_150 = arith.constant 0 : index
    %130 = vector.load %arg5[%c18, %c0_149, %c0_150] : memref<27x8x8xbf16, #tpu.memory_space<vmem>>, vector<1x8x8xbf16>
    %131 = vector.shape_cast %130 : vector<1x8x8xbf16> to vector<8x8xbf16>
    %cst_151 = arith.constant dense<0.000000e+00> : vector<64x8xf32>
    %132 = tpu.matmul %129, %131, %cst_151 {dimension_numbers = #tpu.dot_dimension_numbers<[1], [0], [0], [1], [0, 0, 1, 1], [], []>} : vector<64x8xbf16>, vector<8x8xbf16>, vector<64x8xf32> -> vector<64x8xf32>
    %133 = arith.addf %126, %132 : vector<64x8xf32>
    %c0_152 = arith.constant 0 : index
    %c0_153 = arith.constant 0 : index
    %c0_154 = arith.constant 0 : index
    %c1_155 = arith.constant 1 : index
    %c0_156 = arith.constant 0 : index
    %134 = vector.load %arg4[%c0_152, %c0_153, %c0_154, %c1_155, %c0_156] : memref<1x1x10x10x8xbf16, #tpu.memory_space<vmem>>, vector<1x1x8x8x8xbf16>
    %135 = vector.shape_cast %134 : vector<1x1x8x8x8xbf16> to vector<8x8x8xbf16>
    %136 = vector.shape_cast %135 : vector<8x8x8xbf16> to vector<64x8xbf16>
    %c19 = arith.constant 19 : index
    %c0_157 = arith.constant 0 : index
    %c0_158 = arith.constant 0 : index
    %137 = vector.load %arg5[%c19, %c0_157, %c0_158] : memref<27x8x8xbf16, #tpu.memory_space<vmem>>, vector<1x8x8xbf16>
    %138 = vector.shape_cast %137 : vector<1x8x8xbf16> to vector<8x8xbf16>
    %cst_159 = arith.constant dense<0.000000e+00> : vector<64x8xf32>
    %139 = tpu.matmul %136, %138, %cst_159 {dimension_numbers = #tpu.dot_dimension_numbers<[1], [0], [0], [1], [0, 0, 1, 1], [], []>} : vector<64x8xbf16>, vector<8x8xbf16>, vector<64x8xf32> -> vector<64x8xf32>
    %140 = arith.addf %133, %139 : vector<64x8xf32>
    %c0_160 = arith.constant 0 : index
    %c0_161 = arith.constant 0 : index
    %c0_162 = arith.constant 0 : index
    %c2_163 = arith.constant 2 : index
    %c0_164 = arith.constant 0 : index
    %141 = vector.load %arg4[%c0_160, %c0_161, %c0_162, %c2_163, %c0_164] : memref<1x1x10x10x8xbf16, #tpu.memory_space<vmem>>, vector<1x1x8x8x8xbf16>
    %142 = vector.shape_cast %141 : vector<1x1x8x8x8xbf16> to vector<8x8x8xbf16>
    %143 = vector.shape_cast %142 : vector<8x8x8xbf16> to vector<64x8xbf16>
    %c20 = arith.constant 20 : index
    %c0_165 = arith.constant 0 : index
    %c0_166 = arith.constant 0 : index
    %144 = vector.load %arg5[%c20, %c0_165, %c0_166] : memref<27x8x8xbf16, #tpu.memory_space<vmem>>, vector<1x8x8xbf16>
    %145 = vector.shape_cast %144 : vector<1x8x8xbf16> to vector<8x8xbf16>
    %cst_167 = arith.constant dense<0.000000e+00> : vector<64x8xf32>
    %146 = tpu.matmul %143, %145, %cst_167 {dimension_numbers = #tpu.dot_dimension_numbers<[1], [0], [0], [1], [0, 0, 1, 1], [], []>} : vector<64x8xbf16>, vector<8x8xbf16>, vector<64x8xf32> -> vector<64x8xf32>
    %147 = arith.addf %140, %146 : vector<64x8xf32>
    %c0_168 = arith.constant 0 : index
    %c0_169 = arith.constant 0 : index
    %c1_170 = arith.constant 1 : index
    %c0_171 = arith.constant 0 : index
    %c0_172 = arith.constant 0 : index
    %148 = vector.load %arg4[%c0_168, %c0_169, %c1_170, %c0_171, %c0_172] : memref<1x1x10x10x8xbf16, #tpu.memory_space<vmem>>, vector<1x1x8x8x8xbf16>
    %149 = vector.shape_cast %148 : vector<1x1x8x8x8xbf16> to vector<8x8x8xbf16>
    %150 = vector.shape_cast %149 : vector<8x8x8xbf16> to vector<64x8xbf16>
    %c21 = arith.constant 21 : index
    %c0_173 = arith.constant 0 : index
    %c0_174 = arith.constant 0 : index
    %151 = vector.load %arg5[%c21, %c0_173, %c0_174] : memref<27x8x8xbf16, #tpu.memory_space<vmem>>, vector<1x8x8xbf16>
    %152 = vector.shape_cast %151 : vector<1x8x8xbf16> to vector<8x8xbf16>
    %cst_175 = arith.constant dense<0.000000e+00> : vector<64x8xf32>
    %153 = tpu.matmul %150, %152, %cst_175 {dimension_numbers = #tpu.dot_dimension_numbers<[1], [0], [0], [1], [0, 0, 1, 1], [], []>} : vector<64x8xbf16>, vector<8x8xbf16>, vector<64x8xf32> -> vector<64x8xf32>
    %154 = arith.addf %147, %153 : vector<64x8xf32>
    %c0_176 = arith.constant 0 : index
    %c0_177 = arith.constant 0 : index
    %c1_178 = arith.constant 1 : index
    %c1_179 = arith.constant 1 : index
    %c0_180 = arith.constant 0 : index
    %155 = vector.load %arg4[%c0_176, %c0_177, %c1_178, %c1_179, %c0_180] : memref<1x1x10x10x8xbf16, #tpu.memory_space<vmem>>, vector<1x1x8x8x8xbf16>
    %156 = vector.shape_cast %155 : vector<1x1x8x8x8xbf16> to vector<8x8x8xbf16>
    %157 = vector.shape_cast %156 : vector<8x8x8xbf16> to vector<64x8xbf16>
    %c22 = arith.constant 22 : index
    %c0_181 = arith.constant 0 : index
    %c0_182 = arith.constant 0 : index
    %158 = vector.load %arg5[%c22, %c0_181, %c0_182] : memref<27x8x8xbf16, #tpu.memory_space<vmem>>, vector<1x8x8xbf16>
    %159 = vector.shape_cast %158 : vector<1x8x8xbf16> to vector<8x8xbf16>
    %cst_183 = arith.constant dense<0.000000e+00> : vector<64x8xf32>
    %160 = tpu.matmul %157, %159, %cst_183 {dimension_numbers = #tpu.dot_dimension_numbers<[1], [0], [0], [1], [0, 0, 1, 1], [], []>} : vector<64x8xbf16>, vector<8x8xbf16>, vector<64x8xf32> -> vector<64x8xf32>
    %161 = arith.addf %154, %160 : vector<64x8xf32>
    %c0_184 = arith.constant 0 : index
    %c0_185 = arith.constant 0 : index
    %c1_186 = arith.constant 1 : index
    %c2_187 = arith.constant 2 : index
    %c0_188 = arith.constant 0 : index
    %162 = vector.load %arg4[%c0_184, %c0_185, %c1_186, %c2_187, %c0_188] : memref<1x1x10x10x8xbf16, #tpu.memory_space<vmem>>, vector<1x1x8x8x8xbf16>
    %163 = vector.shape_cast %162 : vector<1x1x8x8x8xbf16> to vector<8x8x8xbf16>
    %164 = vector.shape_cast %163 : vector<8x8x8xbf16> to vector<64x8xbf16>
    %c23 = arith.constant 23 : index
    %c0_189 = arith.constant 0 : index
    %c0_190 = arith.constant 0 : index
    %165 = vector.load %arg5[%c23, %c0_189, %c0_190] : memref<27x8x8xbf16, #tpu.memory_space<vmem>>, vector<1x8x8xbf16>
    %166 = vector.shape_cast %165 : vector<1x8x8xbf16> to vector<8x8xbf16>
    %cst_191 = arith.constant dense<0.000000e+00> : vector<64x8xf32>
    %167 = tpu.matmul %164, %166, %cst_191 {dimension_numbers = #tpu.dot_dimension_numbers<[1], [0], [0], [1], [0, 0, 1, 1], [], []>} : vector<64x8xbf16>, vector<8x8xbf16>, vector<64x8xf32> -> vector<64x8xf32>
    %168 = arith.addf %161, %167 : vector<64x8xf32>
    %c0_192 = arith.constant 0 : index
    %c0_193 = arith.constant 0 : index
    %c2_194 = arith.constant 2 : index
    %c0_195 = arith.constant 0 : index
    %c0_196 = arith.constant 0 : index
    %169 = vector.load %arg4[%c0_192, %c0_193, %c2_194, %c0_195, %c0_196] : memref<1x1x10x10x8xbf16, #tpu.memory_space<vmem>>, vector<1x1x8x8x8xbf16>
    %170 = vector.shape_cast %169 : vector<1x1x8x8x8xbf16> to vector<8x8x8xbf16>
    %171 = vector.shape_cast %170 : vector<8x8x8xbf16> to vector<64x8xbf16>
    %c24 = arith.constant 24 : index
    %c0_197 = arith.constant 0 : index
    %c0_198 = arith.constant 0 : index
    %172 = vector.load %arg5[%c24, %c0_197, %c0_198] : memref<27x8x8xbf16, #tpu.memory_space<vmem>>, vector<1x8x8xbf16>
    %173 = vector.shape_cast %172 : vector<1x8x8xbf16> to vector<8x8xbf16>
    %cst_199 = arith.constant dense<0.000000e+00> : vector<64x8xf32>
    %174 = tpu.matmul %171, %173, %cst_199 {dimension_numbers = #tpu.dot_dimension_numbers<[1], [0], [0], [1], [0, 0, 1, 1], [], []>} : vector<64x8xbf16>, vector<8x8xbf16>, vector<64x8xf32> -> vector<64x8xf32>
    %175 = arith.addf %168, %174 : vector<64x8xf32>
    %c0_200 = arith.constant 0 : index
    %c0_201 = arith.constant 0 : index
    %c2_202 = arith.constant 2 : index
    %c1_203 = arith.constant 1 : index
    %c0_204 = arith.constant 0 : index
    %176 = vector.load %arg4[%c0_200, %c0_201, %c2_202, %c1_203, %c0_204] : memref<1x1x10x10x8xbf16, #tpu.memory_space<vmem>>, vector<1x1x8x8x8xbf16>
    %177 = vector.shape_cast %176 : vector<1x1x8x8x8xbf16> to vector<8x8x8xbf16>
    %178 = vector.shape_cast %177 : vector<8x8x8xbf16> to vector<64x8xbf16>
    %c25 = arith.constant 25 : index
    %c0_205 = arith.constant 0 : index
    %c0_206 = arith.constant 0 : index
    %179 = vector.load %arg5[%c25, %c0_205, %c0_206] : memref<27x8x8xbf16, #tpu.memory_space<vmem>>, vector<1x8x8xbf16>
    %180 = vector.shape_cast %179 : vector<1x8x8xbf16> to vector<8x8xbf16>
    %cst_207 = arith.constant dense<0.000000e+00> : vector<64x8xf32>
    %181 = tpu.matmul %178, %180, %cst_207 {dimension_numbers = #tpu.dot_dimension_numbers<[1], [0], [0], [1], [0, 0, 1, 1], [], []>} : vector<64x8xbf16>, vector<8x8xbf16>, vector<64x8xf32> -> vector<64x8xf32>
    %182 = arith.addf %175, %181 : vector<64x8xf32>
    %c0_208 = arith.constant 0 : index
    %c0_209 = arith.constant 0 : index
    %c2_210 = arith.constant 2 : index
    %c2_211 = arith.constant 2 : index
    %c0_212 = arith.constant 0 : index
    %183 = vector.load %arg4[%c0_208, %c0_209, %c2_210, %c2_211, %c0_212] : memref<1x1x10x10x8xbf16, #tpu.memory_space<vmem>>, vector<1x1x8x8x8xbf16>
    %184 = vector.shape_cast %183 : vector<1x1x8x8x8xbf16> to vector<8x8x8xbf16>
    %185 = vector.shape_cast %184 : vector<8x8x8xbf16> to vector<64x8xbf16>
    %c26 = arith.constant 26 : index
    %c0_213 = arith.constant 0 : index
    %c0_214 = arith.constant 0 : index
    %186 = vector.load %arg5[%c26, %c0_213, %c0_214] : memref<27x8x8xbf16, #tpu.memory_space<vmem>>, vector<1x8x8xbf16>
    %187 = vector.shape_cast %186 : vector<1x8x8xbf16> to vector<8x8xbf16>
    %cst_215 = arith.constant dense<0.000000e+00> : vector<64x8xf32>
    %188 = tpu.matmul %185, %187, %cst_215 {dimension_numbers = #tpu.dot_dimension_numbers<[1], [0], [0], [1], [0, 0, 1, 1], [], []>} : vector<64x8xbf16>, vector<8x8xbf16>, vector<64x8xf32> -> vector<64x8xf32>
    %189 = arith.addf %182, %188 : vector<64x8xf32>
    %190 = vector.shape_cast %189 : vector<64x8xf32> to vector<8x8x8xf32>
    %191 = arith.truncf %190 : vector<8x8x8xf32> to vector<8x8x8xbf16>
    %c0_216 = arith.constant 0 : index
    %c0_217 = arith.constant 0 : index
    %c0_218 = arith.constant 0 : index
    %c0_219 = arith.constant 0 : index
    %c0_220 = arith.constant 0 : index
    %192 = vector.load %arg6[%c0_216, %c0_217, %c0_218, %c0_219, %c0_220] : memref<1x1x8x8x8xbf16, #tpu.memory_space<vmem>>, vector<1x1x8x8x8xbf16>
    %193 = vector.shape_cast %192 : vector<1x1x8x8x8xbf16> to vector<8x8x8xbf16>
    %194 = vector.shape_cast %191 : vector<8x8x8xbf16> to vector<1x1x8x8x8xbf16>
    tpu.vector_store %arg6[%c0_216, %c0_217, %c0_218, %c0_219, %c0_220], %194 {strides = array<i32>} : memref<1x1x8x8x8xbf16, #tpu.memory_space<vmem>>, vector<1x1x8x8x8xbf16>,
    %cst_221 = arith.constant dense<0.000000e+00> : vector<8xf32>
    %195 = vector.multi_reduction <add>, %189, %cst_221 [0] : vector<64x8xf32> to vector<8xf32>
    %196 = vector.shape_cast %195 : vector<8xf32> to vector<1x8xf32>
    %c0_222 = arith.constant 0 : index
    %c0_223 = arith.constant 0 : index
    %c0_224 = arith.constant 0 : index
    %c0_225 = arith.constant 0 : index
    %197 = vector.load %arg7[%c0_222, %c0_223, %c0_224, %c0_225] : memref<1x1x2x8xf32, #tpu.memory_space<vmem>>, vector<1x1x1x8xf32>
    %198 = vector.shape_cast %197 : vector<1x1x1x8xf32> to vector<1x8xf32>
    %199 = vector.shape_cast %196 : vector<1x8xf32> to vector<1x1x1x8xf32>
    tpu.vector_store %arg7[%c0_222, %c0_223, %c0_224, %c0_225], %199 {strides = array<i32>} : memref<1x1x2x8xf32, #tpu.memory_space<vmem>>, vector<1x1x1x8xf32>,
    %200 = arith.mulf %189, %189 : vector<64x8xf32>
    %cst_226 = arith.constant dense<0.000000e+00> : vector<8xf32>
    %201 = vector.multi_reduction <add>, %200, %cst_226 [0] : vector<64x8xf32> to vector<8xf32>
    %202 = vector.shape_cast %201 : vector<8xf32> to vector<1x8xf32>
    %c0_227 = arith.constant 0 : index
    %c0_228 = arith.constant 0 : index
    %c1_229 = arith.constant 1 : index
    %c0_230 = arith.constant 0 : index
    %203 = vector.load %arg7[%c0_227, %c0_228, %c1_229, %c0_230] : memref<1x1x2x8xf32, #tpu.memory_space<vmem>>, vector<1x1x1x8xf32>
    %204 = vector.shape_cast %203 : vector<1x1x1x8xf32> to vector<1x8xf32>
    %205 = vector.shape_cast %202 : vector<1x8xf32> to vector<1x1x1x8xf32>
    tpu.vector_store %arg7[%c0_227, %c0_228, %c1_229, %c0_230], %205 {strides = array<i32>} : memref<1x1x2x8xf32, #tpu.memory_space<vmem>>, vector<1x1x1x8xf32>,
    return
  }
  func.func @transform_0(%arg0: i32, %arg1: i32) -> (i32, i32, i32, i32, i32) {
    %c0_i32 = arith.constant 0 : i32
    %0 = arith.addi %arg1, %c0_i32 : i32
    %c0_i32_0 = arith.constant 0 : i32
    %c0_i32_1 = arith.constant 0 : i32
    %c0_i32_2 = arith.constant 0 : i32
    %c0_i32_3 = arith.constant 0 : i32
    return %arg0, %0, %c0_i32_0, %c0_i32_1, %c0_i32_2 : i32, i32, i32, i32, i32
  }
  func.func @transform_1(%arg0: i32, %arg1: i32) -> (i32, i32, i32, i32, i32) {
    %c1_i32 = arith.constant 1 : i32
    %0 = arith.addi %arg1, %c1_i32 : i32
    %c0_i32 = arith.constant 0 : i32
    %c0_i32_0 = arith.constant 0 : i32
    %c0_i32_1 = arith.constant 0 : i32
    %c0_i32_2 = arith.constant 0 : i32
    return %arg0, %0, %c0_i32, %c0_i32_0, %c0_i32_1 : i32, i32, i32, i32, i32
  }
  func.func @transform_2(%arg0: i32, %arg1: i32) -> (i32, i32, i32, i32, i32) {
    %c2_i32 = arith.constant 2 : i32
    %0 = arith.addi %arg1, %c2_i32 : i32
    %c0_i32 = arith.constant 0 : i32
    %c0_i32_0 = arith.constant 0 : i32
    %c0_i32_1 = arith.constant 0 : i32
    %c0_i32_2 = arith.constant 0 : i32
    return %arg0, %0, %c0_i32, %c0_i32_0, %c0_i32_1 : i32, i32, i32, i32, i32
  }
  func.func @transform_3(%arg0: i32, %arg1: i32) -> (i32, i32, i32) {
    %c0_i32 = arith.constant 0 : i32
    %c0_i32_0 = arith.constant 0 : i32
    %c0_i32_1 = arith.constant 0 : i32
    %c0_i32_2 = arith.constant 0 : i32
    return %c0_i32, %c0_i32_0, %c0_i32_1 : i32, i32, i32
  }
  func.func @transform_4(%arg0: i32, %arg1: i32) -> (i32, i32, i32, i32, i32) {
    %c0_i32 = arith.constant 0 : i32
    %c0_i32_0 = arith.constant 0 : i32
    %c0_i32_1 = arith.constant 0 : i32
    %c0_i32_2 = arith.constant 0 : i32
    return %arg0, %arg1, %c0_i32, %c0_i32_0, %c0_i32_1 : i32, i32, i32, i32, i32
  }
  func.func @transform_5(%arg0: i32, %arg1: i32) -> (i32, i32, i32, i32) {
    %c0_i32 = arith.constant 0 : i32
    %c0_i32_0 = arith.constant 0 : i32
    %c0_i32_1 = arith.constant 0 : i32
    return %arg0, %arg1, %c0_i32, %c0_i32_0 : i32, i32, i32, i32
  }
}

module attributes {stable_mosaic.version = 11 : i64} {
  func.func @_affine_relu_kernel(%arg0: i32, %arg1: memref<16x512xbf16, #tpu.memory_space<vmem>>, %arg2: memref<1x512xf32, #tpu.memory_space<vmem>>, %arg3: memref<1x512xf32, #tpu.memory_space<vmem>>, %arg4: memref<16x512xbf16, #tpu.memory_space<vmem>>) attributes {dimension_semantics = [#tpu.dimension_semantics<parallel>], iteration_bounds = array<i64: 1>, scalar_prefetch = 0 : i64, scratch_operands = 0 : i64, tpu.core_type = #tpu.core_type<tc>, window_params = [{transform_indices = @transform_0, window_bounds = array<i64: 16, 512>}, {pipeline_mode = #tpu.pipeline_mode<synchronous>, transform_indices = @transform_1, window_bounds = array<i64: 1, 512>}, {pipeline_mode = #tpu.pipeline_mode<synchronous>, transform_indices = @transform_2, window_bounds = array<i64: 1, 512>}, {transform_indices = @transform_3, window_bounds = array<i64: 16, 512>}]} {
    %c0 = arith.constant 0 : index
    %c0_0 = arith.constant 0 : index
    %0 = vector.load %arg1[%c0, %c0_0] : memref<16x512xbf16, #tpu.memory_space<vmem>>, vector<16x512xbf16>
    %1 = arith.extf %0 : vector<16x512xbf16> to vector<16x512xf32>
    %c0_1 = arith.constant 0 : index
    %c0_2 = arith.constant 0 : index
    %2 = vector.load %arg2[%c0_1, %c0_2] : memref<1x512xf32, #tpu.memory_space<vmem>>, vector<1x512xf32>
    %3 = vector.broadcast %2 : vector<1x512xf32> to vector<16x512xf32>
    %4 = arith.mulf %1, %3 : vector<16x512xf32>
    %c0_3 = arith.constant 0 : index
    %c0_4 = arith.constant 0 : index
    %5 = vector.load %arg3[%c0_3, %c0_4] : memref<1x512xf32, #tpu.memory_space<vmem>>, vector<1x512xf32>
    %6 = vector.broadcast %5 : vector<1x512xf32> to vector<16x512xf32>
    %7 = arith.addf %4, %6 : vector<16x512xf32>
    %cst = arith.constant 0.000000e+00 : f32
    %8 = vector.broadcast %cst : f32 to vector<16x512xf32>
    %9 = arith.maximumf %7, %8 : vector<16x512xf32>
    %10 = arith.truncf %9 : vector<16x512xf32> to vector<16x512xbf16>
    %c0_5 = arith.constant 0 : index
    %c0_6 = arith.constant 0 : index
    %11 = vector.load %arg4[%c0_5, %c0_6] : memref<16x512xbf16, #tpu.memory_space<vmem>>, vector<16x512xbf16>
    tpu.vector_store %arg4[%c0_5, %c0_6], %10 {strides = array<i32>} : memref<16x512xbf16, #tpu.memory_space<vmem>>, vector<16x512xbf16>,
    return
  }
  func.func @transform_0(%arg0: i32) -> (i32, i32) {
    %c0_i32 = arith.constant 0 : i32
    %c0_i32_0 = arith.constant 0 : i32
    return %arg0, %c0_i32 : i32, i32
  }
  func.func @transform_1(%arg0: i32) -> (i32, i32) {
    %c0_i32 = arith.constant 0 : i32
    %c0_i32_0 = arith.constant 0 : i32
    %c0_i32_1 = arith.constant 0 : i32
    return %c0_i32, %c0_i32_0 : i32, i32
  }
  func.func @transform_2(%arg0: i32) -> (i32, i32) {
    %c0_i32 = arith.constant 0 : i32
    %c0_i32_0 = arith.constant 0 : i32
    %c0_i32_1 = arith.constant 0 : i32
    return %c0_i32, %c0_i32_0 : i32, i32
  }
  func.func @transform_3(%arg0: i32) -> (i32, i32) {
    %c0_i32 = arith.constant 0 : i32
    %c0_i32_0 = arith.constant 0 : i32
    return %arg0, %c0_i32 : i32, i32
  }
}

module attributes {stable_mosaic.version = 11 : i64} {
  func.func @_affine_res_relu_kernel(%arg0: i32, %arg1: memref<16x512xbf16, #tpu.memory_space<vmem>>, %arg2: memref<1x512xf32, #tpu.memory_space<vmem>>, %arg3: memref<1x512xf32, #tpu.memory_space<vmem>>, %arg4: memref<16x512xf32, #tpu.memory_space<vmem>>, %arg5: memref<16x512xf32, #tpu.memory_space<vmem>>) attributes {dimension_semantics = [#tpu.dimension_semantics<parallel>], iteration_bounds = array<i64: 1>, scalar_prefetch = 0 : i64, scratch_operands = 0 : i64, tpu.core_type = #tpu.core_type<tc>, window_params = [{transform_indices = @transform_0, window_bounds = array<i64: 16, 512>}, {pipeline_mode = #tpu.pipeline_mode<synchronous>, transform_indices = @transform_1, window_bounds = array<i64: 1, 512>}, {pipeline_mode = #tpu.pipeline_mode<synchronous>, transform_indices = @transform_2, window_bounds = array<i64: 1, 512>}, {transform_indices = @transform_3, window_bounds = array<i64: 16, 512>}, {transform_indices = @transform_4, window_bounds = array<i64: 16, 512>}]} {
    %c0 = arith.constant 0 : index
    %c0_0 = arith.constant 0 : index
    %0 = vector.load %arg1[%c0, %c0_0] : memref<16x512xbf16, #tpu.memory_space<vmem>>, vector<16x512xbf16>
    %1 = arith.extf %0 : vector<16x512xbf16> to vector<16x512xf32>
    %c0_1 = arith.constant 0 : index
    %c0_2 = arith.constant 0 : index
    %2 = vector.load %arg2[%c0_1, %c0_2] : memref<1x512xf32, #tpu.memory_space<vmem>>, vector<1x512xf32>
    %3 = vector.broadcast %2 : vector<1x512xf32> to vector<16x512xf32>
    %4 = arith.mulf %1, %3 : vector<16x512xf32>
    %c0_3 = arith.constant 0 : index
    %c0_4 = arith.constant 0 : index
    %5 = vector.load %arg3[%c0_3, %c0_4] : memref<1x512xf32, #tpu.memory_space<vmem>>, vector<1x512xf32>
    %6 = vector.broadcast %5 : vector<1x512xf32> to vector<16x512xf32>
    %7 = arith.addf %4, %6 : vector<16x512xf32>
    %c0_5 = arith.constant 0 : index
    %c0_6 = arith.constant 0 : index
    %8 = vector.load %arg4[%c0_5, %c0_6] : memref<16x512xf32, #tpu.memory_space<vmem>>, vector<16x512xf32>
    %9 = arith.addf %7, %8 : vector<16x512xf32>
    %cst = arith.constant 0.000000e+00 : f32
    %10 = vector.broadcast %cst : f32 to vector<16x512xf32>
    %11 = arith.maximumf %9, %10 : vector<16x512xf32>
    %c0_7 = arith.constant 0 : index
    %c0_8 = arith.constant 0 : index
    %12 = vector.load %arg5[%c0_7, %c0_8] : memref<16x512xf32, #tpu.memory_space<vmem>>, vector<16x512xf32>
    tpu.vector_store %arg5[%c0_7, %c0_8], %11 {strides = array<i32>} : memref<16x512xf32, #tpu.memory_space<vmem>>, vector<16x512xf32>,
    return
  }
  func.func @transform_0(%arg0: i32) -> (i32, i32) {
    %c0_i32 = arith.constant 0 : i32
    %c0_i32_0 = arith.constant 0 : i32
    return %arg0, %c0_i32 : i32, i32
  }
  func.func @transform_1(%arg0: i32) -> (i32, i32) {
    %c0_i32 = arith.constant 0 : i32
    %c0_i32_0 = arith.constant 0 : i32
    %c0_i32_1 = arith.constant 0 : i32
    return %c0_i32, %c0_i32_0 : i32, i32
  }
  func.func @transform_2(%arg0: i32) -> (i32, i32) {
    %c0_i32 = arith.constant 0 : i32
    %c0_i32_0 = arith.constant 0 : i32
    %c0_i32_1 = arith.constant 0 : i32
    return %c0_i32, %c0_i32_0 : i32, i32
  }
  func.func @transform_3(%arg0: i32) -> (i32, i32) {
    %c0_i32 = arith.constant 0 : i32
    %c0_i32_0 = arith.constant 0 : i32
    return %arg0, %c0_i32 : i32, i32
  }
  func.func @transform_4(%arg0: i32) -> (i32, i32) {
    %c0_i32 = arith.constant 0 : i32
    %c0_i32_0 = arith.constant 0 : i32
    return %arg0, %c0_i32 : i32, i32
  }
}

</mosaic_0001>

<llo_original>
// kernel: tile.28
$region0: #{tile.28}
  #allocation0 [shape = 's32[1]{0}', space=sflag, size = 0x4, scoped, tag = 'scoped memory for tile.28']
  %s0 = inlined_call_operand.vmem [shape: f32[8], index: 0, kind: input, shape index: {}]
  %s1 = inlined_call_operand.vmem [shape: f32[64,8], index: 1, kind: output, shape index: {}]
  // Predicated region
  $region2: #{tile.28} parent=0 // pred_check
    _
  $region3: #{tile.28} parent=0 // pred_check_branch
    %3 = sbr.rel (0) target = $region5
  $region4: #{tile.28} parent=0 // pred_region
    _
  $region5: #{tile.28} parent=0 // pred_fallthru
    _
  %v4 = vld [vmem:[%s0] ss:$0 sm:$0xff]
  %5 = vst [vmem:[%s1] sm:$0xff] %v4
  %s6 = scalar_lea.vmem %s1, 8
  %7 = vst [vmem:[%s6] sm:$0xff] %v4
  %s8 = scalar_lea.vmem %s1, 16
  %9 = vst [vmem:[%s8] sm:$0xff] %v4
  %s10 = scalar_lea.vmem %s1, 24
  %11 = vst [vmem:[%s10] sm:$0xff] %v4
  %s12 = scalar_lea.vmem %s1, 32
  %13 = vst [vmem:[%s12] sm:$0xff] %v4
  %s14 = scalar_lea.vmem %s1, 40
  %15 = vst [vmem:[%s14] sm:$0xff] %v4
  %s16 = scalar_lea.vmem %s1, 48
  %17 = vst [vmem:[%s16] sm:$0xff] %v4
  %s18 = scalar_lea.vmem %s1, 56
  %19 = vst [vmem:[%s18] sm:$0xff] %v4

// kernel: tile.29
$region0: #{tile.29}
  %s0 = inlined_call_operand.vmem [shape: f32[64,8], index: 0, kind: input, shape index: {}]
  %s1 = inlined_call_operand.vmem [shape: f32[1,512], index: 1, kind: output, shape index: {}]
  $region1: #{tile.29} parent=0
    #allocation0 [shape = 'u8[16384]{0}', space=vmem, size = 0x4000, scoped, tag = 'scoped mem for output reshape']
    %s2 = smov 3
    %v3 = vld [vmem:[%s0] ss:$16 sm:%s2]
    %s4 = smov 12
    %v5 = vld [vmem:[%s0] ss:$16 sm:%s4]
    %vm6 = vcmask 1043458
    %v7 = vsel %vm6, %v5, %v3
    %vm8 = vcmask 64512
    %9 = vst.msk [vmem:[#allocation0] ss:$8 sm:$0xf] %vm8, %v7
    %s10 = scalar_lea.vmem %s0, 15
    %s11 = smov 3
    %v12 = vld [vmem:[%s10] ss:$16 sm:%s11]
    %s13 = scalar_lea.vmem %s0, 15
    %s14 = smov 12
    %v15 = vld [vmem:[%s13] ss:$16 sm:%s14]
    %vm16 = vcmask 1043458
    %v17 = vsel %vm16, %v15, %v12
    %18 = vrot.lane.b32.xlu0 %v17, 120
    %v19 = vpop.permute.xlu0 %18
    %vm20 = vcmask 1048512
    %21 = vst.msk [vmem:[#allocation0] ss:$8 sm:$0xf] %vm20, %v19
    %s22 = scalar_lea.vmem %s0, 14
    %s23 = smov 3
    %v24 = vld [vmem:[%s22] ss:$16 sm:%s23]
    %s25 = scalar_lea.vmem %s0, 14
    %s26 = smov 12
    %v27 = vld [vmem:[%s25] ss:$16 sm:%s26]
    %vm28 = vcmask 1043458
    %v29 = vsel %vm28, %v27, %v24
    %30 = vrot.lane.b32.xlu0 %v29, 112
    %v31 = vpop.permute.xlu0 %30
    %vm32 = vcmask 982912
    %33 = vst.msk [vmem:[#allocation0] ss:$8 sm:$0xf] %vm32, %v31
    %s34 = scalar_lea.vmem %s0, 13
    %s35 = smov 3
    %v36 = vld [vmem:[%s34] ss:$16 sm:%s35]
    %s37 = scalar_lea.vmem %s0, 13
    %s38 = smov 12
    %v39 = vld [vmem:[%s37] ss:$16 sm:%s38]
    %vm40 = vcmask 1043458
    %v41 = vsel %vm40, %v39, %v36
    %42 = vrot.lane.b32.xlu0 %v41, 104
    %v43 = vpop.permute.xlu0 %42
    %vm44 = vcmask 917312
    %45 = vst.msk [vmem:[#allocation0] ss:$8 sm:$0xf] %vm44, %v43
    %s46 = scalar_lea.vmem %s0, 12
    %s47 = smov 3
    %v48 = vld [vmem:[%s46] ss:$16 sm:%s47]
    %s49 = scalar_lea.vmem %s0, 12
    %s50 = smov 12
    %v51 = vld [vmem:[%s49] ss:$16 sm:%s50]
    %vm52 = vcmask 1043458
    %v53 = vsel %vm52, %v51, %v48
    %54 = vrot.lane.b32.xlu0 %v53, 96
    %v55 = vpop.permute.xlu0 %54
    %vm56 = vcmask 851712
    %57 = vst.msk [vmem:[#allocation0] ss:$8 sm:$0xf] %vm56, %v55
    %s58 = scalar_lea.vmem %s0, 11
    %s59 = smov 3
    %v60 = vld [vmem:[%s58] ss:$16 sm:%s59]
    %s61 = scalar_lea.vmem %s0, 11
    %s62 = smov 12
    %v63 = vld [vmem:[%s61] ss:$16 sm:%s62]
    %vm64 = vcmask 1043458
    %v65 = vsel %vm64, %v63, %v60
    %66 = vrot.lane.b32.xlu0 %v65, 88
    %v67 = vpop.permute.xlu0 %66
    %vm68 = vcmask 786112
    %69 = vst.msk [vmem:[#allocation0] ss:$8 sm:$0xf] %vm68, %v67
    %s70 = scalar_lea.vmem %s0, 10
    %s71 = smov 3
    %v72 = vld [vmem:[%s70] ss:$16 sm:%s71]
    %s73 = scalar_lea.vmem %s0, 10
    %s74 = smov 12
    %v75 = vld [vmem:[%s73] ss:$16 sm:%s74]
    %vm76 = vcmask 1043458
    %v77 = vsel %vm76, %v75, %v72
    %78 = vrot.lane.b32.xlu0 %v77, 80
    %v79 = vpop.permute.xlu0 %78
    %vm80 = vcmask 720512
    %81 = vst.msk [vmem:[#allocation0] ss:$8 sm:$0xf] %vm80, %v79
    %s82 = scalar_lea.vmem %s0, 9
    %s83 = smov 3
    %v84 = vld [vmem:[%s82] ss:$16 sm:%s83]
    %s85 = scalar_lea.vmem %s0, 9
    %s86 = smov 12
    %v87 = vld [vmem:[%s85] ss:$16 sm:%s86]
    %vm88 = vcmask 1043458
    %v89 = vsel %vm88, %v87, %v84
    %90 = vrot.lane.b32.xlu0 %v89, 72
    %v91 = vpop.permute.xlu0 %90
    %vm92 = vcmask 654912
    %93 = vst.msk [vmem:[#allocation0] ss:$8 sm:$0xf] %vm92, %v91
    %s94 = scalar_lea.vmem %s0, 8
    %s95 = smov 3
    %v96 = vld [vmem:[%s94] ss:$16 sm:%s95]
    %s97 = scalar_lea.vmem %s0, 8
    %s98 = smov 12
    %v99 = vld [vmem:[%s97] ss:$16 sm:%s98]
    %vm100 = vcmask 1043458
    %v101 = vsel %vm100, %v99, %v96
    %102 = vrot.lane.b32.xlu0 %v101, 64
    %v103 = vpop.permute.xlu0 %102
    %vm104 = vcmask 589312
    %105 = vst.msk [vmem:[#allocation0] ss:$8 sm:$0xf] %vm104, %v103
    %s106 = scalar_lea.vmem %s0, 7
    %s107 = smov 3
    %v108 = vld [vmem:[%s106] ss:$16 sm:%s107]
    %s109 = scalar_lea.vmem %s0, 7
    %s110 = smov 12
    %v111 = vld [vmem:[%s109] ss:$16 sm:%s110]
    %vm112 = vcmask 1043458
    %v113 = vsel %vm112, %v111, %v108
    %114 = vrot.lane.b32.xlu0 %v113, 56
    %v115 = vpop.permute.xlu0 %114
    %vm116 = vcmask 523712
    %117 = vst.msk [vmem:[#allocation0] ss:$8 sm:$0xf] %vm116, %v115
    %s118 = scalar_lea.vmem %s0, 6
    %s119 = smov 3
    %v120 = vld [vmem:[%s118] ss:$16 sm:%s119]
    %s121 = scalar_lea.vmem %s0, 6
    %s122 = smov 12
    %v123 = vld [vmem:[%s121] ss:$16 sm:%s122]
    %vm124 = vcmask 1043458
    %v125 = vsel %vm124, %v123, %v120
    %126 = vrot.lane.b32.xlu0 %v125, 48
    %v127 = vpop.permute.xlu0 %126
    %vm128 = vcmask 458112
    %129 = vst.msk [vmem:[#allocation0] ss:$8 sm:$0xf] %vm128, %v127
    %s130 = scalar_lea.vmem %s0, 5
    %s131 = smov 3
    %v132 = vld [vmem:[%s130] ss:$16 sm:%s131]
    %s133 = scalar_lea.vmem %s0, 5
    %s134 = smov 12
    %v135 = vld [vmem:[%s133] ss:$16 sm:%s134]
    %vm136 = vcmask 1043458
    %v137 = vsel %vm136, %v135, %v132
    %138 = vrot.lane.b32.xlu0 %v137, 40
    %v139 = vpop.permute.xlu0 %138
    %vm140 = vcmask 392512
    %141 = vst.msk [vmem:[#allocation0] ss:$8 sm:$0xf] %vm140, %v139
    %s142 = scalar_lea.vmem %s0, 4
    %s143 = smov 3
    %v144 = vld [vmem:[%s142] ss:$16 sm:%s143]
    %s145 = scalar_lea.vmem %s0, 4
    %s146 = smov 12
    %v147 = vld [vmem:[%s145] ss:$16 sm:%s146]
    %vm148 = vcmask 1043458
    %v149 = vsel %vm148, %v147, %v144
    %150 = vrot.lane.b32.xlu0 %v149, 32
    %v151 = vpop.permute.xlu0 %150
    %vm152 = vcmask 326912
    %153 = vst.msk [vmem:[#allocation0] ss:$8 sm:$0xf] %vm152, %v151
    %s154 = scalar_lea.vmem %s0, 3
    %s155 = smov 3
    %v156 = vld [vmem:[%s154] ss:$16 sm:%s155]
    %s157 = scalar_lea.vmem %s0, 3
    %s158 = smov 12
    %v159 = vld [vmem:[%s157] ss:$16 sm:%s158]
    %vm160 = vcmask 1043458
    %v161 = vsel %vm160, %v159, %v156
    %162 = vrot.lane.b32.xlu0 %v161, 24
    %v163 = vpop.permute.xlu0 %162
    %vm164 = vcmask 261312
    %165 = vst.msk [vmem:[#allocation0] ss:$8 sm:$0xf] %vm164, %v163
    %s166 = scalar_lea.vmem %s0, 2
    %s167 = smov 3
    %v168 = vld [vmem:[%s166] ss:$16 sm:%s167]
    %s169 = scalar_lea.vmem %s0, 2
    %s170 = smov 12
    %v171 = vld [vmem:[%s169] ss:$16 sm:%s170]
    %vm172 = vcmask 1043458
    %v173 = vsel %vm172, %v171, %v168
    %174 = vrot.lane.b32.xlu0 %v173, 16
    %v175 = vpop.permute.xlu0 %174
    %vm176 = vcmask 195712
    %177 = vst.msk [vmem:[#allocation0] ss:$8 sm:$0xf] %vm176, %v175
    %s178 = scalar_lea.vmem %s0, 1
    %s179 = smov 3
    %v180 = vld [vmem:[%s178] ss:$16 sm:%s179]
    %s181 = scalar_lea.vmem %s0, 1
    %s182 = smov 12
    %v183 = vld [vmem:[%s181] ss:$16 sm:%s182]
    %vm184 = vcmask 1043458
    %v185 = vsel %vm184, %v183, %v180
    %186 = vrot.lane.b32.xlu0 %v185, 8
    %v187 = vpop.permute.xlu0 %186
    %vm188 = vcmask 130112
    %189 = vst.msk [vmem:[#allocation0] ss:$8 sm:$0xf] %vm188, %v187
    %s191 = sshllo.u32 0, 1
    %v193 = vld [vmem:[#allocation0] sm:%s191]
    %s194 = sshllo.u32 0, 1
    %195 = vst [vmem:[%s1] sm:%s194] %v193
    %s196 = scalar_lea.vmem [#allocation0], 8
    %v197 = vld [vmem:[%s196] sm:%s191]
    %s198 = sshllo.u32 0, 1
    %s199 = scalar_lea.vmem %s1, 1
    %200 = vst [vmem:[%s199] sm:%s198] %v197
    %s201 = scalar_lea.vmem [#allocation0], 16
    %v202 = vld [vmem:[%s201] sm:%s191]
    %s203 = sshllo.u32 0, 1
    %s204 = smul.addr 1, 2
    %s205 = scalar_lea.vmem %s1, %s204
    %206 = vst [vmem:[%s205] sm:%s203] %v202
    %s207 = scalar_lea.vmem [#allocation0], 24
    %v208 = vld [vmem:[%s207] sm:%s191]
    %s209 = sshllo.u32 0, 1
    %s210 = smul.addr 1, 3
    %s211 = scalar_lea.vmem %s1, %s210
    %212 = vst [vmem:[%s211] sm:%s209] %v208

// kernel: residual_block_forward.5
$region0: #{residual_block_forward.5}
  #allocation0 [shape = 'u32[]', space=smem, size = 0x4, offset = 0x4, fixed_abs, tag = 'smem constant byte address 0x4 - core index']
  #allocation1 [shape = 'u32[144,128]{1,0:T(1,128)}', space=vmem, size = 0x12000, scoped, tag = 'internal scratch']
  %s0 = inlined_call_operand.vmem [shape: bf16[16,512], index: 0, kind: input, shape index: {}]
  %s1 = inlined_call_operand.vmem [shape: f32[1,512], index: 1, kind: input, shape index: {}]
  %s2 = inlined_call_operand.vmem [shape: f32[1,512], index: 2, kind: input, shape index: {}]
  %s3 = inlined_call_operand.vmem [shape: bf16[16,512], index: 3, kind: output, shape index: {}]
  %s4 = sld [smem:[#allocation0]]
  $region22: #{residual_block_forward.5} parent=0
    _
  %s6 = ssub.s32 1, %s4
  %s7 = scalar_select 0, %s6, %s4
  // Predicated region
  $region2: #{residual_block_forward.5} parent=0 // pred_check
    _
  $region3: #{residual_block_forward.5} parent=0 // pred_check_branch
    %9 = sbr.rel (0) target = $region5
  $region4: #{residual_block_forward.5} parent=0 // pred_region
    _
  $region5: #{residual_block_forward.5} parent=0 // pred_fallthru
    _
  // Predicated region
  $region6: #{residual_block_forward.5} parent=0 // pred_check
    _
  $region7: #{residual_block_forward.5} parent=0 // pred_check_branch
    %11 = sbr.rel (0) target = $region9
  $region8: #{residual_block_forward.5} parent=0 // pred_region
    _
  $region9: #{residual_block_forward.5} parent=0 // pred_fallthru
    _
  // Predicated region
  $region10: #{residual_block_forward.5} parent=0 // pred_check
    _
  $region11: #{residual_block_forward.5} parent=0 // pred_check_branch
    %13 = sbr.rel (0) target = $region13
  $region12: #{residual_block_forward.5} parent=0 // pred_region
    _
  $region13: #{residual_block_forward.5} parent=0 // pred_fallthru
    _
  %v14 = vld [vmem:[%s0] sm:$0xff]
  %v15 = vld [vmem:[%s0 + $0x8] sm:$0xff]
  %v16 = vld [vmem:[%s0 + $0x10] sm:$0xff]
  %v17 = vld [vmem:[%s0 + $0x18] sm:$0xff]
  %v18 = vunpack.c.l.bf16 %v14
  %v19 = vunpack.c.h.bf16 %v14
  %v20 = vunpack.c.l.bf16 %v15
  %v21 = vunpack.c.h.bf16 %v15
  %v22 = vunpack.c.l.bf16 %v16
  %v23 = vunpack.c.h.bf16 %v16
  %v24 = vunpack.c.l.bf16 %v17
  %v25 = vunpack.c.h.bf16 %v17
  %v26 = vld [vmem:[%s1] sm:$0xf]
  %v28 = vlaneseq
  %v29 = vshrl.u32 %v28, 7
  %v30 = vsub.s32 0, %v29
  %v31 = vrot.slane %v26, %v30
  %v32 = vlaneseq
  %v33 = vshrl.u32 %v32, 7
  %v34 = vsub.s32 1, %v33
  %v35 = vrot.slane %v26, %v34
  %v36 = vlaneseq
  %v37 = vshrl.u32 %v36, 7
  %v38 = vsub.s32 2, %v37
  %v39 = vrot.slane %v26, %v38
  %v40 = vlaneseq
  %v41 = vshrl.u32 %v40, 7
  %v42 = vsub.s32 3, %v41
  %v43 = vrot.slane %v26, %v42
  %v48 = vmul.f32 %v18, %v31
  %v49 = vmul.f32 %v19, %v35
  %v50 = vmul.f32 %v20, %v39
  %v51 = vmul.f32 %v21, %v43
  %v52 = vmul.f32 %v22, %v31
  %v53 = vmul.f32 %v23, %v35
  %v54 = vmul.f32 %v24, %v39
  %v55 = vmul.f32 %v25, %v43
  %v56 = vld [vmem:[%s2] sm:$0xf]
  %v58 = vlaneseq
  %v59 = vshrl.u32 %v58, 7
  %v60 = vsub.s32 0, %v59
  %v61 = vrot.slane %v56, %v60
  %v62 = vlaneseq
  %v63 = vshrl.u32 %v62, 7
  %v64 = vsub.s32 1, %v63
  %v65 = vrot.slane %v56, %v64
  %v66 = vlaneseq
  %v67 = vshrl.u32 %v66, 7
  %v68 = vsub.s32 2, %v67
  %v69 = vrot.slane %v56, %v68
  %v70 = vlaneseq
  %v71 = vshrl.u32 %v70, 7
  %v72 = vsub.s32 3, %v71
  %v73 = vrot.slane %v56, %v72
  %v78 = vadd.f32 %v48, %v61
  %v79 = vadd.f32 %v49, %v65
  %v80 = vadd.f32 %v50, %v69
  %v81 = vadd.f32 %v51, %v73
  %v82 = vadd.f32 %v52, %v61
  %v83 = vadd.f32 %v53, %v65
  %v84 = vadd.f32 %v54, %v69
  %v85 = vadd.f32 %v55, %v73
  %v86 = vmax.f32 %v78, 0.0
  %v87 = vmax.f32 %v79, 0.0
  %v88 = vmax.f32 %v80, 0.0
  %v89 = vmax.f32 %v81, 0.0
  %v90 = vmax.f32 %v82, 0.0
  %v91 = vmax.f32 %v83, 0.0
  %v92 = vmax.f32 %v84, 0.0
  %v93 = vmax.f32 %v85, 0.0
  %v94 = vpack.c.bf16 %v90, %v86
  %v95 = vpack.c.bf16 %v91, %v87
  %v96 = vpack.c.bf16 %v92, %v88
  %v97 = vpack.c.bf16 %v93, %v89
  %v102 = vunpack.c.l.b16 %v94
  %v103 = vunpack.c.l.b16 %v95
  %v104 = vunpack.c.l.b16 %v96
  %v105 = vunpack.c.l.b16 %v97
  %v106 = vunpack.c.h.b16 %v94
  %v107 = vunpack.c.h.b16 %v95
  %v108 = vunpack.c.h.b16 %v96
  %v109 = vunpack.c.h.b16 %v97
  %v110 = vpack.c.b16 %v103, %v102
  %v111 = vpack.c.b16 %v105, %v104
  %v112 = vpack.c.b16 %v107, %v106
  %v113 = vpack.c.b16 %v109, %v108
  %118 = vst [vmem:[%s3] sm:$0xff] %v110
  %119 = vst [vmem:[%s3 + $0x8] sm:$0xff] %v111
  %120 = vst [vmem:[%s3 + $0x10] sm:$0xff] %v112
  %121 = vst [vmem:[%s3 + $0x18] sm:$0xff] %v113
  // Predicated region
  $region14: #{residual_block_forward.5} parent=0 // pred_check
    _
  $region15: #{residual_block_forward.5} parent=0 // pred_check_branch
    %123 = sbr.rel (0) target = $region17
  $region16: #{residual_block_forward.5} parent=0 // pred_region
    _
  $region17: #{residual_block_forward.5} parent=0 // pred_fallthru
    _
  // Predicated region
  $region18: #{residual_block_forward.5} parent=0 // pred_check
    _
  $region19: #{residual_block_forward.5} parent=0 // pred_check_branch
    %125 = sbr.rel (0) target = $region21
  $region20: #{residual_block_forward.5} parent=0 // pred_region
    _
  $region21: #{residual_block_forward.5} parent=0 // pred_fallthru
    _

// kernel: residual_block_forward.7
$region0: #{residual_block_forward.7}
  #allocation0 [shape = 'u32[]', space=smem, size = 0x4, offset = 0x4, fixed_abs, tag = 'smem constant byte address 0x4 - core index']
  #allocation1 [shape = 'u32[144,128]{1,0:T(1,128)}', space=vmem, size = 0x12000, scoped, tag = 'internal scratch']
  %s0 = inlined_call_operand.vmem [shape: bf16[16,512], index: 0, kind: input, shape index: {}]
  %s1 = inlined_call_operand.vmem [shape: f32[1,512], index: 1, kind: input, shape index: {}]
  %s2 = inlined_call_operand.vmem [shape: f32[1,512], index: 2, kind: input, shape index: {}]
  %s3 = inlined_call_operand.vmem [shape: f32[16,512], index: 3, kind: input, shape index: {}]
  %s4 = inlined_call_operand.vmem [shape: f32[16,512], index: 4, kind: output, shape index: {}]
  %s5 = sld [smem:[#allocation0]]
  $region26: #{residual_block_forward.7} parent=0
    _
  %s7 = ssub.s32 1, %s5
  %s8 = scalar_select 0, %s7, %s5
  // Predicated region
  $region2: #{residual_block_forward.7} parent=0 // pred_check
    _
  $region3: #{residual_block_forward.7} parent=0 // pred_check_branch
    %10 = sbr.rel (0) target = $region5
  $region4: #{residual_block_forward.7} parent=0 // pred_region
    _
  $region5: #{residual_block_forward.7} parent=0 // pred_fallthru
    _
  // Predicated region
  $region6: #{residual_block_forward.7} parent=0 // pred_check
    _
  $region7: #{residual_block_forward.7} parent=0 // pred_check_branch
    %12 = sbr.rel (0) target = $region9
  $region8: #{residual_block_forward.7} parent=0 // pred_region
    _
  $region9: #{residual_block_forward.7} parent=0 // pred_fallthru
    _
  // Predicated region
  $region10: #{residual_block_forward.7} parent=0 // pred_check
    _
  $region11: #{residual_block_forward.7} parent=0 // pred_check_branch
    %14 = sbr.rel (0) target = $region13
  $region12: #{residual_block_forward.7} parent=0 // pred_region
    _
  $region13: #{residual_block_forward.7} parent=0 // pred_fallthru
    _
  // Predicated region
  $region14: #{residual_block_forward.7} parent=0 // pred_check
    _
  $region15: #{residual_block_forward.7} parent=0 // pred_check_branch
    %16 = sbr.rel (0) target = $region17
  $region16: #{residual_block_forward.7} parent=0 // pred_region
    _
  $region17: #{residual_block_forward.7} parent=0 // pred_fallthru
    _
  %v17 = vld [vmem:[%s0] sm:$0xff]
  %v18 = vld [vmem:[%s0 + $0x8] sm:$0xff]
  %v19 = vld [vmem:[%s0 + $0x10] sm:$0xff]
  %v20 = vld [vmem:[%s0 + $0x18] sm:$0xff]
  %v21 = vunpack.c.l.bf16 %v17
  %v22 = vunpack.c.h.bf16 %v17
  %v23 = vunpack.c.l.bf16 %v18
  %v24 = vunpack.c.h.bf16 %v18
  %v25 = vunpack.c.l.bf16 %v19
  %v26 = vunpack.c.h.bf16 %v19
  %v27 = vunpack.c.l.bf16 %v20
  %v28 = vunpack.c.h.bf16 %v20
  %v29 = vld [vmem:[%s1] sm:$0xf]
  %v31 = vlaneseq
  %v32 = vshrl.u32 %v31, 7
  %v33 = vsub.s32 0, %v32
  %v34 = vrot.slane %v29, %v33
  %v35 = vlaneseq
  %v36 = vshrl.u32 %v35, 7
  %v37 = vsub.s32 1, %v36
  %v38 = vrot.slane %v29, %v37
  %v39 = vlaneseq
  %v40 = vshrl.u32 %v39, 7
  %v41 = vsub.s32 2, %v40
  %v42 = vrot.slane %v29, %v41
  %v43 = vlaneseq
  %v44 = vshrl.u32 %v43, 7
  %v45 = vsub.s32 3, %v44
  %v46 = vrot.slane %v29, %v45
  %v51 = vmul.f32 %v21, %v34
  %v52 = vmul.f32 %v22, %v38
  %v53 = vmul.f32 %v23, %v42
  %v54 = vmul.f32 %v24, %v46
  %v55 = vmul.f32 %v25, %v34
  %v56 = vmul.f32 %v26, %v38
  %v57 = vmul.f32 %v27, %v42
  %v58 = vmul.f32 %v28, %v46
  %v59 = vld [vmem:[%s2] sm:$0xf]
  %v61 = vlaneseq
  %v62 = vshrl.u32 %v61, 7
  %v63 = vsub.s32 0, %v62
  %v64 = vrot.slane %v59, %v63
  %v65 = vlaneseq
  %v66 = vshrl.u32 %v65, 7
  %v67 = vsub.s32 1, %v66
  %v68 = vrot.slane %v59, %v67
  %v69 = vlaneseq
  %v70 = vshrl.u32 %v69, 7
  %v71 = vsub.s32 2, %v70
  %v72 = vrot.slane %v59, %v71
  %v73 = vlaneseq
  %v74 = vshrl.u32 %v73, 7
  %v75 = vsub.s32 3, %v74
  %v76 = vrot.slane %v59, %v75
  %v81 = vadd.f32 %v51, %v64
  %v82 = vadd.f32 %v52, %v68
  %v83 = vadd.f32 %v53, %v72
  %v84 = vadd.f32 %v54, %v76
  %v85 = vadd.f32 %v55, %v64
  %v86 = vadd.f32 %v56, %v68
  %v87 = vadd.f32 %v57, %v72
  %v88 = vadd.f32 %v58, %v76
  %v89 = vld [vmem:[%s3] sm:$0xff]
  %v90 = vld [vmem:[%s3 + $0x8] sm:$0xff]
  %v91 = vld [vmem:[%s3 + $0x10] sm:$0xff]
  %v92 = vld [vmem:[%s3 + $0x18] sm:$0xff]
  %v93 = vld [vmem:[%s3 + $0x20] sm:$0xff]
  %v94 = vld [vmem:[%s3 + $0x28] sm:$0xff]
  %v95 = vld [vmem:[%s3 + $0x30] sm:$0xff]
  %v96 = vld [vmem:[%s3 + $0x38] sm:$0xff]
  %v97 = vadd.f32 %v81, %v89
  %v98 = vadd.f32 %v82, %v90
  %v99 = vadd.f32 %v83, %v91
  %v100 = vadd.f32 %v84, %v92
  %v101 = vadd.f32 %v85, %v93
  %v102 = vadd.f32 %v86, %v94
  %v103 = vadd.f32 %v87, %v95
  %v104 = vadd.f32 %v88, %v96
  %v105 = vmax.f32 %v97, 0.0
  %v106 = vmax.f32 %v98, 0.0
  %v107 = vmax.f32 %v99, 0.0
  %v108 = vmax.f32 %v100, 0.0
  %v109 = vmax.f32 %v101, 0.0
  %v110 = vmax.f32 %v102, 0.0
  %v111 = vmax.f32 %v103, 0.0
  %v112 = vmax.f32 %v104, 0.0
  %113 = vst [vmem:[%s4] sm:$0xff] %v105
  %114 = vst [vmem:[%s4 + $0x8] sm:$0xff] %v106
  %115 = vst [vmem:[%s4 + $0x10] sm:$0xff] %v107
  %116 = vst [vmem:[%s4 + $0x18] sm:$0xff] %v108
  %117 = vst [vmem:[%s4 + $0x20] sm:$0xff] %v109
  %118 = vst [vmem:[%s4 + $0x28] sm:$0xff] %v110
  %119 = vst [vmem:[%s4 + $0x30] sm:$0xff] %v111
  %120 = vst [vmem:[%s4 + $0x38] sm:$0xff] %v112
  // Predicated region
  $region18: #{residual_block_forward.7} parent=0 // pred_check
    _
  $region19: #{residual_block_forward.7} parent=0 // pred_check_branch
    %122 = sbr.rel (0) target = $region21
  $region20: #{residual_block_forward.7} parent=0 // pred_region
    _
  $region21: #{residual_block_forward.7} parent=0 // pred_fallthru
    _
  // Predicated region
  $region22: #{residual_block_forward.7} parent=0 // pred_check
    _
  $region23: #{residual_block_forward.7} parent=0 // pred_check_branch
    %124 = sbr.rel (0) target = $region25
  $region24: #{residual_block_forward.7} parent=0 // pred_region
    _
  $region25: #{residual_block_forward.7} parent=0 // pred_fallthru
    _

// kernel: residual_block_forward.4
$region0: #{residual_block_forward.4}
  #allocation0 [shape = 'u32[]', space=smem, size = 0x4, offset = 0x4, fixed_abs, tag = 'smem constant byte address 0x4 - core index']
  #allocation1 [shape = 'u32[144,128]{1,0:T(1,128)}', space=vmem, size = 0x12000, scoped, tag = 'internal scratch']
  %s0 = inlined_call_operand.vmem [shape: bf16[2,10,10,10,8], index: 0, kind: input, shape index: {}, may-alias: {0,1,2}]
  %s1 = inlined_call_operand.vmem [shape: bf16[2,10,10,10,8], index: 1, kind: input, shape index: {}, may-alias: {0,1,2}]
  %s2 = inlined_call_operand.vmem [shape: bf16[2,10,10,10,8], index: 2, kind: input, shape index: {}, may-alias: {0,1,2}]
  %s3 = inlined_call_operand.vmem [shape: bf16[27,8,8], index: 3, kind: input, shape index: {}]
  %s4 = inlined_call_operand.vmem [shape: bf16[2,8,8,8,8], index: 4, kind: output, shape index: {0}]
  %s5 = inlined_call_operand.vmem [shape: f32[2,8,2,8], index: 5, kind: output, shape index: {1}]
  %6 = xla_tuple %s4, %s5
  %s7 = sld [smem:[#allocation0]]
  $region57: #{residual_block_forward.4} parent=0
    _
  %s9 = ssub.s32 1, %s7
  %s10 = scalar_select 0, %s9, %s7
  loop: start=0, step=1, limit=18
  $region2: #{residual_block_forward.4} parent=0 // loop_pre_header
    _
  $region3: #{residual_block_forward.4} parent=0 // loop_header
    %s12 = sphi 0, %s16
    %p13 = scmp.ge.s32.totalorder %s12, 18
    %s19 = sphi 0, %s31
    %s20 = sphi 0, %s27
    %s21 = sphi 0, %s19
    %s22 = sphi 0, %s20
    %s23 = sphi 0, %s21
    %s24 = sphi 0, %s22
    %s36 = sphi 0, %s38
    %s39 = sphi 0, %s36
    %s40 = sphi 0, %s39
    %s56 = sphi 0, %s40
    %s66 = sphi 0, %s68
    %s69 = sphi 0, %s66
    %s70 = sphi 0, %s69
    %s86 = sphi 0, %s70
    %s96 = sphi 0, %s98
    %s99 = sphi 0, %s96
    %s100 = sphi 0, %s99
    %s116 = sphi 0, %s100
    %s120 = sphi 0, %s120
    %s122 = sphi 0, %s120
    %s123 = sphi 0, %s122
    %s137 = sphi 0, %s123
    %s145 = sphi 0, %s147
    %s148 = sphi 0, %s145
    %s149 = sphi 0, %s148
    %s165 = sphi 0, %s149
    %s173 = sphi 0, %s175
    %s176 = sphi 0, %s173
    %s177 = sphi 0, %s176
    %s193 = sphi 0, %s177
  $region4: #{residual_block_forward.4} parent=0 // loop_header_branch
    %15 = sbr.rel (%p13) target = $region8
  $region5: #{residual_block_forward.4} parent=0 // loop_body
    %s17 = ssub.s32 %s12, 1
    %s18 = ssub.s32 %s12, 2
    %s25 = sadd.s32 1, %s20
    %p26 = scmp.ge.s32.totalorder %s25, 8
    %s27 = scalar_select %p26, 0, %s25
    %s28 = sadd.s32 1, %s19
    %s29 = scalar_select %p26, %s28, %s19
    %p30 = scmp.ge.s32.totalorder %s29, 2
    %s31 = scalar_select %p30, 0, %s29
    %s32 = ssub.s32 %s19, %s31
    %s33 = ssub.s32 %s20, %s27
    %s34 = sor.u32 %s32, %s33
    %p35 = scmp.eq.s32.totalorder %s34, 0
    %s37 = sadd.s32 %s36, 1
    %s38 = scalar_select %p35, %s36, %s37
    %p41 = pneg %p35
    %p42 = scmp.eq.s32.totalorder %s12, 15
    %p43 = por %p41, %p42
    %p44 = scmp.ne.s32.totalorder %s36, %s39
    %p45 = scmp.eq.s32.totalorder %s12, 0
    %p46 = por %p44, %p45
    %p47 = scmp.ne.s32.totalorder %s36, %s39
    %p48 = scmp.eq.s32.totalorder %s17, 15
    %p49 = por %p47, %p48
    %p50 = scmp.ne.s32.totalorder %s39, %s40
    %p51 = scmp.eq.s32.totalorder %s17, 0
    %p52 = por %p50, %p51
    %p53 = scmp.ne.s32.totalorder %s39, %s40
    %p54 = scmp.eq.s32.totalorder %s18, 15
    %p55 = por %p53, %p54
    %p57 = scmp.ne.s32.totalorder %s40, %s56
    %p58 = scmp.eq.s32.totalorder %s18, 0
    %p59 = por %p57, %p58
    %s60 = sadd.s32 %s20, 1
    %s61 = sadd.s32 %s27, 1
    %s62 = ssub.s32 %s19, %s31
    %s63 = ssub.s32 %s60, %s61
    %s64 = sor.u32 %s62, %s63
    %p65 = scmp.eq.s32.totalorder %s64, 0
    %s67 = sadd.s32 %s66, 1
    %s68 = scalar_select %p65, %s66, %s67
    %p71 = pneg %p65
    %p72 = scmp.eq.s32.totalorder %s12, 15
    %p73 = por %p71, %p72
    %p74 = scmp.ne.s32.totalorder %s66, %s69
    %p75 = scmp.eq.s32.totalorder %s12, 0
    %p76 = por %p74, %p75
    %p77 = scmp.ne.s32.totalorder %s66, %s69
    %p78 = scmp.eq.s32.totalorder %s17, 15
    %p79 = por %p77, %p78
    %p80 = scmp.ne.s32.totalorder %s69, %s70
    %p81 = scmp.eq.s32.totalorder %s17, 0
    %p82 = por %p80, %p81
    %p83 = scmp.ne.s32.totalorder %s69, %s70
    %p84 = scmp.eq.s32.totalorder %s18, 15
    %p85 = por %p83, %p84
    %p87 = scmp.ne.s32.totalorder %s70, %s86
    %p88 = scmp.eq.s32.totalorder %s18, 0
    %p89 = por %p87, %p88
    %s90 = sadd.s32 %s20, 2
    %s91 = sadd.s32 %s27, 2
    %s92 = ssub.s32 %s19, %s31
    %s93 = ssub.s32 %s90, %s91
    %s94 = sor.u32 %s92, %s93
    %p95 = scmp.eq.s32.totalorder %s94, 0
    %s97 = sadd.s32 %s96, 1
    %s98 = scalar_select %p95, %s96, %s97
    %p101 = pneg %p95
    %p102 = scmp.eq.s32.totalorder %s12, 15
    %p103 = por %p101, %p102
    %p104 = scmp.ne.s32.totalorder %s96, %s99
    %p105 = scmp.eq.s32.totalorder %s12, 0
    %p106 = por %p104, %p105
    %p107 = scmp.ne.s32.totalorder %s96, %s99
    %p108 = scmp.eq.s32.totalorder %s17, 15
    %p109 = por %p107, %p108
    %p110 = scmp.ne.s32.totalorder %s99, %s100
    %p111 = scmp.eq.s32.totalorder %s17, 0
    %p112 = por %p110, %p111
    %p113 = scmp.ne.s32.totalorder %s99, %s100
    %p114 = scmp.eq.s32.totalorder %s18, 15
    %p115 = por %p113, %p114
    %p117 = scmp.ne.s32.totalorder %s100, %s116
    %p118 = scmp.eq.s32.totalorder %s18, 0
    %p119 = por %p117, %p118
    %s121 = sadd.s32 %s120, 1
    %p124 = scmp.eq.s32.totalorder %s12, 15
    %p125 = scmp.ne.s32.totalorder %s120, %s122
    %p126 = scmp.eq.s32.totalorder %s12, 0
    %p127 = por %p125, %p126
    %p128 = scmp.ne.s32.totalorder %s120, %s122
    %p129 = scmp.eq.s32.totalorder %s17, 15
    %p130 = por %p128, %p129
    %p131 = scmp.ne.s32.totalorder %s122, %s123
    %p132 = scmp.eq.s32.totalorder %s17, 0
    %p133 = por %p131, %p132
    %p134 = scmp.ne.s32.totalorder %s122, %s123
    %p135 = scmp.eq.s32.totalorder %s18, 15
    %p136 = por %p134, %p135
    %p138 = scmp.ne.s32.totalorder %s123, %s137
    %p139 = scmp.eq.s32.totalorder %s18, 0
    %p140 = por %p138, %p139
    %s141 = ssub.s32 %s19, %s31
    %s142 = ssub.s32 %s20, %s27
    %s143 = sor.u32 %s141, %s142
    %p144 = scmp.eq.s32.totalorder %s143, 0
    %s146 = sadd.s32 %s145, 1
    %s147 = scalar_select %p144, %s145, %s146
    %p150 = pneg %p144
    %p151 = scmp.eq.s32.totalorder %s12, 15
    %p152 = por %p150, %p151
    %p153 = scmp.ne.s32.totalorder %s145, %s148
    %p154 = scmp.eq.s32.totalorder %s12, 0
    %p155 = por %p153, %p154
    %p156 = scmp.ne.s32.totalorder %s145, %s148
    %p157 = scmp.eq.s32.totalorder %s17, 15
    %p158 = por %p156, %p157
    %p159 = scmp.ne.s32.totalorder %s148, %s149
    %p160 = scmp.eq.s32.totalorder %s17, 0
    %p161 = por %p159, %p160
    %p162 = scmp.ne.s32.totalorder %s148, %s149
    %p163 = scmp.eq.s32.totalorder %s18, 15
    %p164 = por %p162, %p163
    %p166 = scmp.ne.s32.totalorder %s149, %s165
    %p167 = scmp.eq.s32.totalorder %s18, 0
    %p168 = por %p166, %p167
    %s169 = ssub.s32 %s19, %s31
    %s170 = ssub.s32 %s20, %s27
    %s171 = sor.u32 %s169, %s170
    %p172 = scmp.eq.s32.totalorder %s171, 0
    %s174 = sadd.s32 %s173, 1
    %s175 = scalar_select %p172, %s173, %s174
    %p178 = pneg %p172
    %p179 = scmp.eq.s32.totalorder %s12, 15
    %p180 = por %p178, %p179
    %p181 = scmp.ne.s32.totalorder %s173, %s176
    %p182 = scmp.eq.s32.totalorder %s12, 0
    %p183 = por %p181, %p182
    %p184 = scmp.ne.s32.totalorder %s173, %s176
    %p185 = scmp.eq.s32.totalorder %s17, 15
    %p186 = por %p184, %p185
    %p187 = scmp.ne.s32.totalorder %s176, %s177
    %p188 = scmp.eq.s32.totalorder %s17, 0
    %p189 = por %p187, %p188
    %p190 = scmp.ne.s32.totalorder %s176, %s177
    %p191 = scmp.eq.s32.totalorder %s18, 15
    %p192 = por %p190, %p191
    %p194 = scmp.ne.s32.totalorder %s177, %s193
    %p195 = scmp.eq.s32.totalorder %s18, 0
    %p196 = por %p194, %p195
    %p197 = scmp.le.s32.totalorder 1, %s12
    %p198 = scmp.lt.s32.totalorder %s12, 17
    %p199 = pnand %p197, %p198
    %p200 = pneg %p199
    // Predicated region
    $region9: #{residual_block_forward.4} parent=5 // pred_check
      _
    $region10: #{residual_block_forward.4} parent=5 // pred_check_branch
      %202 = sbr.rel (%p199) target = $region12
    $region11: #{residual_block_forward.4} parent=5 // pred_region
      %s203 = ssub.s32 %s12, 1
      // Predicated region
      $region13: #{residual_block_forward.4} parent=11 // pred_check
        %p204 = pneg %p133
      $region14: #{residual_block_forward.4} parent=11 // pred_check_branch
        %206 = sbr.rel (%p204) target = $region16
      $region15: #{residual_block_forward.4} parent=11 // pred_region
        _
      $region16: #{residual_block_forward.4} parent=11 // pred_fallthru
        _
    $region12: #{residual_block_forward.4} parent=5 // pred_fallthru
      _
    %p207 = scmp.lt.s32.totalorder %s12, 16
    // Predicated region
    $region17: #{residual_block_forward.4} parent=5 // pred_check
      %p208 = pneg %p207
    $region18: #{residual_block_forward.4} parent=5 // pred_check_branch
      %210 = sbr.rel (%p208) target = $region20
    $region19: #{residual_block_forward.4} parent=5 // pred_region
      // Predicated region
      $region21: #{residual_block_forward.4} parent=19 // pred_check
        %p211 = pneg %p46
      $region22: #{residual_block_forward.4} parent=19 // pred_check_branch
        %213 = sbr.rel (%p211) target = $region24
      $region23: #{residual_block_forward.4} parent=19 // pred_region
        %p214 = scmp.lt.s32.totalorder %s19, 1
        %s215 = scalar_select %p214, %s19, 1
        %p216 = scmp.lt.s32.totalorder %s20, 9
        %s217 = scalar_select %p216, %s20, 9
        %s218 = smul.addr %s217, 20
        %s219 = smul.addr %s215, 200
        %s220 = sadd.s32 %s218, %s219
        %s221 = smul.addr %s220, 4
        %s222 = scalar_lea.vmem %s0, %s221
      $region24: #{residual_block_forward.4} parent=19 // pred_fallthru
        _
      // Predicated region
      $region25: #{residual_block_forward.4} parent=19 // pred_check
        %p223 = pneg %p76
      $region26: #{residual_block_forward.4} parent=19 // pred_check_branch
        %225 = sbr.rel (%p223) target = $region28
      $region27: #{residual_block_forward.4} parent=19 // pred_region
        %s226 = sadd.s32 %s20, 1
        %p227 = scmp.lt.s32.totalorder %s19, 1
        %s228 = scalar_select %p227, %s19, 1
        %p229 = scmp.lt.s32.totalorder %s226, 9
        %s230 = scalar_select %p229, %s226, 9
        %s231 = smul.addr %s230, 20
        %s232 = smul.addr %s228, 200
        %s233 = sadd.s32 %s231, %s232
        %s234 = smul.addr %s233, 4
        %s235 = scalar_lea.vmem %s1, %s234
        %s236 = sadd.s32 %s20, 1
      $region28: #{residual_block_forward.4} parent=19 // pred_fallthru
        _
      // Predicated region
      $region29: #{residual_block_forward.4} parent=19 // pred_check
        %p237 = pneg %p106
      $region30: #{residual_block_forward.4} parent=19 // pred_check_branch
        %239 = sbr.rel (%p237) target = $region32
      $region31: #{residual_block_forward.4} parent=19 // pred_region
        %s240 = sadd.s32 %s20, 2
        %p241 = scmp.lt.s32.totalorder %s19, 1
        %s242 = scalar_select %p241, %s19, 1
        %p243 = scmp.lt.s32.totalorder %s240, 9
        %s244 = scalar_select %p243, %s240, 9
        %s245 = smul.addr %s244, 20
        %s246 = smul.addr %s242, 200
        %s247 = sadd.s32 %s245, %s246
        %s248 = smul.addr %s247, 4
        %s249 = scalar_lea.vmem %s2, %s248
        %s250 = sadd.s32 %s20, 2
      $region32: #{residual_block_forward.4} parent=19 // pred_fallthru
        _
    $region20: #{residual_block_forward.4} parent=5 // pred_fallthru
      _
    %p251 = scmp.le.s32.totalorder 1, %s12
    %p252 = scmp.lt.s32.totalorder %s12, 17
    %p253 = pnand %p251, %p252
    %p254 = pneg %p253
    // Predicated region
    $region33: #{residual_block_forward.4} parent=5 // pred_check
      _
    $region34: #{residual_block_forward.4} parent=5 // pred_check_branch
      %256 = sbr.rel (%p253) target = $region36
    $region35: #{residual_block_forward.4} parent=5 // pred_region
      %s257 = ssub.s32 %s12, 1
      %p258 = scmp.lt.s32.totalorder %s21, 1
      %s259 = scalar_select %p258, %s21, 1
      %p260 = scmp.lt.s32.totalorder %s22, 9
      %s261 = scalar_select %p260, %s22, 9
      %s262 = smul.addr %s261, 20
      %s263 = smul.addr %s259, 200
      %s264 = sadd.s32 %s262, %s263
      %s265 = smul.addr %s264, 4
      %s266 = scalar_lea.vmem %s0, %s265
      %p267 = pneg %p52
      %p268 = pneg %p49
      %s269 = sadd.s32 %s22, 1
      %p270 = scmp.lt.s32.totalorder %s21, 1
      %s271 = scalar_select %p270, %s21, 1
      %p272 = scmp.lt.s32.totalorder %s269, 9
      %s273 = scalar_select %p272, %s269, 9
      %s274 = smul.addr %s273, 20
      %s275 = smul.addr %s271, 200
      %s276 = sadd.s32 %s274, %s275
      %s277 = smul.addr %s276, 4
      %s278 = scalar_lea.vmem %s1, %s277
      %p279 = pneg %p82
      %p280 = pneg %p79
      %s281 = sadd.s32 %s22, 2
      %p282 = scmp.lt.s32.totalorder %s21, 1
      %s283 = scalar_select %p282, %s21, 1
      %p284 = scmp.lt.s32.totalorder %s281, 9
      %s285 = scalar_select %p284, %s281, 9
      %s286 = smul.addr %s285, 20
      %s287 = smul.addr %s283, 200
      %s288 = sadd.s32 %s286, %s287
      %s289 = smul.addr %s288, 4
      %s290 = scalar_lea.vmem %s2, %s289
      %p291 = pneg %p112
      %p292 = pneg %p109
      %p293 = pneg %p133
      %p294 = pneg %p130
      %p295 = pneg %p161
      %p296 = pneg %p158
      %p297 = scmp.lt.s32.totalorder %s21, 1
      %s298 = scalar_select %p297, %s21, 1
      %p299 = scmp.lt.s32.totalorder %s22, 7
      %s300 = scalar_select %p299, %s22, 7
      %s301 = smul.addr %s300, 8
      %s302 = smul.addr %s298, 64
      %s303 = sadd.s32 %s301, %s302
      %s304 = smul.addr %s303, 4
      %s305 = scalar_lea.vmem %s4, %s304
      %p306 = pneg %p189
      %p307 = pneg %p186
      %p308 = scmp.lt.s32.totalorder %s21, 1
      %s309 = scalar_select %p308, %s21, 1
      %p310 = scmp.lt.s32.totalorder %s22, 7
      %s311 = scalar_select %p310, %s22, 7
      %s312 = smul.addr %s309, 8
      %s313 = sadd.s32 %s311, %s312
      %s314 = smul.addr %s313, 2
      %s315 = scalar_lea.vmem %s5, %s314
      %p316 = scmp.lt.s32.totalorder %s21, 1
      %s317 = scalar_select %p316, %s21, 1
      %p318 = scmp.lt.s32.totalorder %s22, 9
      %s319 = scalar_select %p318, %s22, 9
      %s320 = smul.addr %s319, 20
      %s321 = smul.addr %s317, 200
      %s322 = sadd.s32 %s320, %s321
      %s323 = smul.addr %s322, 4
      %s324 = scalar_lea.vmem %s0, %s323
      %s325 = sadd.s32 %s22, 1
      %p326 = scmp.lt.s32.totalorder %s21, 1
      %s327 = scalar_select %p326, %s21, 1
      %p328 = scmp.lt.s32.totalorder %s325, 9
      %s329 = scalar_select %p328, %s325, 9
      %s330 = smul.addr %s329, 20
      %s331 = smul.addr %s327, 200
      %s332 = sadd.s32 %s330, %s331
      %s333 = smul.addr %s332, 4
      %s334 = scalar_lea.vmem %s1, %s333
      %s335 = sadd.s32 %s22, 1
      %s336 = sadd.s32 %s22, 2
      %p337 = scmp.lt.s32.totalorder %s21, 1
      %s338 = scalar_select %p337, %s21, 1
      %p339 = scmp.lt.s32.totalorder %s336, 9
      %s340 = scalar_select %p339, %s336, 9
      %s341 = smul.addr %s340, 20
      %s342 = smul.addr %s338, 200
      %s343 = sadd.s32 %s341, %s342
      %s344 = smul.addr %s343, 4
      %s345 = scalar_lea.vmem %s2, %s344
      %s346 = sadd.s32 %s22, 2
      %p347 = scmp.lt.s32.totalorder %s21, 1
      %s348 = scalar_select %p347, %s21, 1
      %p349 = scmp.lt.s32.totalorder %s22, 7
      %s350 = scalar_select %p349, %s22, 7
      %s351 = smul.addr %s350, 8
      %s352 = smul.addr %s348, 64
      %s353 = sadd.s32 %s351, %s352
      %s354 = smul.addr %s353, 4
      %s355 = scalar_lea.vmem %s4, %s354
      %p356 = scmp.lt.s32.totalorder %s21, 1
      %s357 = scalar_select %p356, %s21, 1
      %p358 = scmp.lt.s32.totalorder %s22, 7
      %s359 = scalar_select %p358, %s22, 7
      %s360 = smul.addr %s357, 8
      %s361 = sadd.s32 %s359, %s360
      %s362 = smul.addr %s361, 2
      %s363 = scalar_lea.vmem %s5, %s362
      %v365 = vld [vmem:[%s324] sm:$0xf]
      %v366 = vld [vmem:[%s324 + $0x8] sm:$0xf]
      %v367 = vld [vmem:[%s324 + $0x10] sm:$0xf]
      %v368 = vld [vmem:[%s324 + $0x18] sm:$0xf]
      %v369 = vld [vmem:[%s324 + $0x20] sm:$0xf]
      %v370 = vld [vmem:[%s324 + $0x28] sm:$0xf]
      %v371 = vld [vmem:[%s324 + $0x30] sm:$0xf]
      %v372 = vld [vmem:[%s324 + $0x38] sm:$0xf]
      %v373 = vld [vmem:[%s3] sm:$0xf]
      %v374 = vld [vmem:[%s324 + $0x4] sm:$0x1]
      %v375 = vld [vmem:[%s324 + $0xc] sm:$0x1]
      %v376 = vld [vmem:[%s324 + $0x14] sm:$0x1]
      %v377 = vld [vmem:[%s324 + $0x1c] sm:$0x1]
      %v378 = vld [vmem:[%s324 + $0x24] sm:$0x1]
      %v379 = vld [vmem:[%s324 + $0x2c] sm:$0x1]
      %v380 = vld [vmem:[%s324 + $0x34] sm:$0x1]
      %v381 = vld [vmem:[%s324 + $0x3c] sm:$0x1]
      %vm382 = vsmask.f32 3328
      %vm383 = vsmask.f32 7440
      %vm384 = vmor %vm382, %vm383
      %v386 = vshrl.u32 %v365, 16
      %v388 = vrot.slane %v386, 4
      %v389 = vshll.u32 %v365, 16
      %v391 = vrot.slane %v389, 5
      %v392 = vor.u32 %v388, %v391
      %v393 = vrot.slane %v392, 4
      %v395 = vshll.u32 %v374, 16
      %v397 = vrot.slane %v395, 5
      %v398 = vsel %vm384, %v393, %v397
      %v400 = vshrl.u32 %v366, 16
      %v402 = vrot.slane %v400, 4
      %v403 = vshll.u32 %v366, 16
      %v405 = vrot.slane %v403, 5
      %v406 = vor.u32 %v402, %v405
      %v407 = vrot.slane %v406, 4
      %v409 = vshll.u32 %v375, 16
      %v411 = vrot.slane %v409, 5
      %v412 = vsel %vm384, %v407, %v411
      %v414 = vshrl.u32 %v367, 16
      %v416 = vrot.slane %v414, 4
      %v417 = vshll.u32 %v367, 16
      %v419 = vrot.slane %v417, 5
      %v420 = vor.u32 %v416, %v419
      %v421 = vrot.slane %v420, 4
      %v423 = vshll.u32 %v376, 16
      %v425 = vrot.slane %v423, 5
      %v426 = vsel %vm384, %v421, %v425
      %v428 = vshrl.u32 %v368, 16
      %v430 = vrot.slane %v428, 4
      %v431 = vshll.u32 %v368, 16
      %v433 = vrot.slane %v431, 5
      %v434 = vor.u32 %v430, %v433
      %v435 = vrot.slane %v434, 4
      %v437 = vshll.u32 %v377, 16
      %v439 = vrot.slane %v437, 5
      %v440 = vsel %vm384, %v435, %v439
      %v442 = vshrl.u32 %v369, 16
      %v444 = vrot.slane %v442, 4
      %v445 = vshll.u32 %v369, 16
      %v447 = vrot.slane %v445, 5
      %v448 = vor.u32 %v444, %v447
      %v449 = vrot.slane %v448, 4
      %v451 = vshll.u32 %v378, 16
      %v453 = vrot.slane %v451, 5
      %v454 = vsel %vm384, %v449, %v453
      %v456 = vshrl.u32 %v370, 16
      %v458 = vrot.slane %v456, 4
      %v459 = vshll.u32 %v370, 16
      %v461 = vrot.slane %v459, 5
      %v462 = vor.u32 %v458, %v461
      %v463 = vrot.slane %v462, 4
      %v465 = vshll.u32 %v379, 16
      %v467 = vrot.slane %v465, 5
      %v468 = vsel %vm384, %v463, %v467
      %v470 = vshrl.u32 %v371, 16
      %v472 = vrot.slane %v470, 4
      %v473 = vshll.u32 %v371, 16
      %v475 = vrot.slane %v473, 5
      %v476 = vor.u32 %v472, %v475
      %v477 = vrot.slane %v476, 4
      %v479 = vshll.u32 %v380, 16
      %v481 = vrot.slane %v479, 5
      %v482 = vsel %vm384, %v477, %v481
      %v484 = vshrl.u32 %v372, 16
      %v486 = vrot.slane %v484, 4
      %v487 = vshll.u32 %v372, 16
      %v489 = vrot.slane %v487, 5
      %v490 = vor.u32 %v486, %v489
      %v491 = vrot.slane %v490, 4
      %v493 = vshll.u32 %v381, 16
      %v495 = vrot.slane %v493, 5
      %v496 = vsel %vm384, %v491, %v495
      %s497 = scalar_lea.vmem %s3, 4
      %v498 = vld [vmem:[%s497] sm:$0xf]
      %v499 = vunpack.c.l.b16 %v398
      %v500 = vunpack.c.l.b16 %v412
      %v501 = vunpack.c.l.b16 %v426
      %v502 = vunpack.c.l.b16 %v440
      %v503 = vunpack.c.l.b16 %v454
      %v504 = vunpack.c.l.b16 %v468
      %v505 = vunpack.c.l.b16 %v482
      %v506 = vunpack.c.l.b16 %v496
      %v507 = vpack.c.b16 %v500, %v499
      %v508 = vpack.c.b16 %v502, %v501
      %v509 = vpack.c.b16 %v504, %v503
      %v510 = vpack.c.b16 %v506, %v505
      %vm511 = vcmask 64512
      %v513 = vsel %vm511, %v507, 0
      %v516 = vsel %vm511, %v508, 0
      %v519 = vsel %vm511, %v509, 0
      %v522 = vsel %vm511, %v510, 0
      %vm524 = vcmask 1043456
      %v526 = vsel %vm524, %v498, 0
      %528 = vmatprep.subr.bf16.mxu0 0
      %529 = vmatpush1.bf16.msra.mxu0 %v526
      %530 = vmatprep.subr.bf16.mxu0 0
      %531 = vmatpush1.bf16.msra.mxu0 0
      %532 = vmatprep.subr.bf16.mxu0 0
      %533 = vmatpush1.bf16.msra.mxu0 0
      %534 = vmatprep.subr.bf16.mxu0 0
      %535 = vmatpush1.bf16.msra.mxu0 0
      %536 = vmatprep.subr.bf16.mxu0 0
      %537 = vmatpush1.bf16.msra.mxu0 0
      %538 = vmatprep.subr.bf16.mxu0 0
      %539 = vmatpush1.bf16.msra.mxu0 0
      %540 = vmatprep.subr.bf16.mxu0 0
      %541 = vmatpush1.bf16.msra.mxu0 0
      %542 = vmatprep.subr.bf16.mxu0 0
      %543 = vmatpush1.bf16.msra.mxu0 0
      %544 = vmatprep.subr.bf16.mxu0 0
      %545 = vmatpush1.bf16.msra.mxu0 0
      %546 = vmatprep.subr.bf16.mxu0 0
      %547 = vmatpush1.bf16.msra.mxu0 0
      %548 = vmatprep.subr.bf16.mxu0 0
      %549 = vmatpush1.bf16.msra.mxu0 0
      %550 = vmatprep.subr.bf16.mxu0 0
      %551 = vmatpush1.bf16.msra.mxu0 0
      %552 = vmatprep.subr.bf16.mxu0 0
      %553 = vmatpush1.bf16.msra.mxu0 0
      %554 = vmatprep.subr.bf16.mxu0 0
      %555 = vmatpush1.bf16.msra.mxu0 0
      %556 = vmatprep.subr.bf16.mxu0 0
      %557 = vmatpush1.bf16.msra.mxu0 0
      %558 = vmatprep.subr.bf16.mxu0 0
      %559 = vmatpush1.bf16.msra.mxu0 0
      %560 = vmatprep.mubr.bf16.mxu0 0
      %561 = vmatmul.mubr.bf16.gmra.mrb[0].mxu0 %v513
      %v562 = vpop.f32.mrb[0].mxu0
      %v563 = vadd.f32 0.0, %v562
      %v564 = vpop.f32.mrb[0].mxu0
      %v565 = vpop.f32.mrb[0].mxu0
      %v566 = vadd.f32 0.0, %v565
      %v567 = vpop.f32.mrb[0].mxu0
      %568 = vmatprep.mubr.bf16.mxu0 0
      %569 = vmatmul.mubr.bf16.gmra.mrb[0].mxu0 %v516
      %v570 = vpop.f32.mrb[0].mxu0
      %v571 = vadd.f32 0.0, %v570
      %v572 = vpop.f32.mrb[0].mxu0
      %v573 = vpop.f32.mrb[0].mxu0
      %v574 = vadd.f32 0.0, %v573
      %v575 = vpop.f32.mrb[0].mxu0
      %576 = vmatprep.mubr.bf16.mxu0 0
      %577 = vmatmul.mubr.bf16.gmra.mrb[0].mxu0 %v519
      %v578 = vpop.f32.mrb[0].mxu0
      %v579 = vadd.f32 0.0, %v578
      %v580 = vpop.f32.mrb[0].mxu0
      %v581 = vpop.f32.mrb[0].mxu0
      %v582 = vadd.f32 0.0, %v581
      %v583 = vpop.f32.mrb[0].mxu0
      %584 = vmatprep.mubr.bf16.mxu0 0
      %585 = vmatmul.mubr.bf16.gmra.mrb[0].mxu0 %v522
      %v586 = vpop.f32.mrb[0].mxu0
      %v587 = vadd.f32 0.0, %v586
      %v588 = vpop.f32.mrb[0].mxu0
      %v589 = vpop.f32.mrb[0].mxu0
      %v590 = vadd.f32 0.0, %v589
      %v591 = vpop.f32.mrb[0].mxu0
      %592 = vdwg.mxu0
      %v601 = vunpack.c.l.b16 %v365
      %v602 = vunpack.c.l.b16 %v366
      %v603 = vunpack.c.l.b16 %v367
      %v604 = vunpack.c.l.b16 %v368
      %v605 = vunpack.c.l.b16 %v369
      %v606 = vunpack.c.l.b16 %v370
      %v607 = vunpack.c.l.b16 %v371
      %v608 = vunpack.c.l.b16 %v372
      %v609 = vpack.c.b16 %v602, %v601
      %v610 = vpack.c.b16 %v604, %v603
      %v611 = vpack.c.b16 %v606, %v605
      %v612 = vpack.c.b16 %v608, %v607
      %v614 = vsel %vm511, %v609, 0
      %v617 = vsel %vm511, %v610, 0
      %v620 = vsel %vm511, %v611, 0
      %v623 = vsel %vm511, %v612, 0
      %v626 = vsel %vm524, %v373, 0
      %628 = vmatprep.subr.bf16.mxu0 0
      %629 = vmatpush1.bf16.msra.mxu0 %v626
      %630 = vmatprep.subr.bf16.mxu0 0
      %631 = vmatpush1.bf16.msra.mxu0 0
      %632 = vmatprep.subr.bf16.mxu0 0
      %633 = vmatpush1.bf16.msra.mxu0 0
      %634 = vmatprep.subr.bf16.mxu0 0
      %635 = vmatpush1.bf16.msra.mxu0 0
      %636 = vmatprep.subr.bf16.mxu0 0
      %637 = vmatpush1.bf16.msra.mxu0 0
      %638 = vmatprep.subr.bf16.mxu0 0
      %639 = vmatpush1.bf16.msra.mxu0 0
      %640 = vmatprep.subr.bf16.mxu0 0
      %641 = vmatpush1.bf16.msra.mxu0 0
      %642 = vmatprep.subr.bf16.mxu0 0
      %643 = vmatpush1.bf16.msra.mxu0 0
      %644 = vmatprep.subr.bf16.mxu0 0
      %645 = vmatpush1.bf16.msra.mxu0 0
      %646 = vmatprep.subr.bf16.mxu0 0
      %647 = vmatpush1.bf16.msra.mxu0 0
      %648 = vmatprep.subr.bf16.mxu0 0
      %649 = vmatpush1.bf16.msra.mxu0 0
      %650 = vmatprep.subr.bf16.mxu0 0
      %651 = vmatpush1.bf16.msra.mxu0 0
      %652 = vmatprep.subr.bf16.mxu0 0
      %653 = vmatpush1.bf16.msra.mxu0 0
      %654 = vmatprep.subr.bf16.mxu0 0
      %655 = vmatpush1.bf16.msra.mxu0 0
      %656 = vmatprep.subr.bf16.mxu0 0
      %657 = vmatpush1.bf16.msra.mxu0 0
      %658 = vmatprep.subr.bf16.mxu0 0
      %659 = vmatpush1.bf16.msra.mxu0 0
      %660 = vmatprep.mubr.bf16.mxu0 0
      %661 = vmatmul.mubr.bf16.gmra.mrb[0].mxu0 %v614
      %v662 = vpop.f32.mrb[0].mxu0
      %v663 = vadd.f32 %v563, %v662
      %v664 = vpop.f32.mrb[0].mxu0
      %v665 = vpop.f32.mrb[0].mxu0
      %v666 = vadd.f32 %v566, %v665
      %v667 = vpop.f32.mrb[0].mxu0
      %668 = vmatprep.mubr.bf16.mxu0 0
      %669 = vmatmul.mubr.bf16.gmra.mrb[0].mxu0 %v617
      %v670 = vpop.f32.mrb[0].mxu0
      %v671 = vadd.f32 %v571, %v670
      %v672 = vpop.f32.mrb[0].mxu0
      %v673 = vpop.f32.mrb[0].mxu0
      %v674 = vadd.f32 %v574, %v673
      %v675 = vpop.f32.mrb[0].mxu0
      %676 = vmatprep.mubr.bf16.mxu0 0
      %677 = vmatmul.mubr.bf16.gmra.mrb[0].mxu0 %v620
      %v678 = vpop.f32.mrb[0].mxu0
      %v679 = vadd.f32 %v579, %v678
      %v680 = vpop.f32.mrb[0].mxu0
      %v681 = vpop.f32.mrb[0].mxu0
      %v682 = vadd.f32 %v582, %v681
      %v683 = vpop.f32.mrb[0].mxu0
      %684 = vmatprep.mubr.bf16.mxu0 0
      %685 = vmatmul.mubr.bf16.gmra.mrb[0].mxu0 %v623
      %v686 = vpop.f32.mrb[0].mxu0
      %v687 = vadd.f32 %v587, %v686
      %v688 = vpop.f32.mrb[0].mxu0
      %v689 = vpop.f32.mrb[0].mxu0
      %v690 = vadd.f32 %v590, %v689
      %v691 = vpop.f32.mrb[0].mxu0
      %692 = vdwg.mxu0
      %v693 = vld [vmem:[%s324] sm:$0xe]
      %v694 = vld [vmem:[%s324 + $0x8] sm:$0xe]
      %v695 = vld [vmem:[%s324 + $0x10] sm:$0xe]
      %v696 = vld [vmem:[%s324 + $0x18] sm:$0xe]
      %v697 = vld [vmem:[%s324 + $0x20] sm:$0xe]
      %v698 = vld [vmem:[%s324 + $0x28] sm:$0xe]
      %v699 = vld [vmem:[%s324 + $0x30] sm:$0xe]
      %v700 = vld [vmem:[%s324 + $0x38] sm:$0xe]
      %vm717 = vcmask 1042432
      %vm718 = vcmask 1046532
      %vm719 = vmor %vm717, %vm718
      %v720 = vrot.slane %v693, 5
      %v721 = vrot.slane %v720, 4
      %v722 = vrot.slane %v374, 5
      %v723 = vsel %vm719, %v721, %v722
      %v724 = vrot.slane %v694, 5
      %v725 = vrot.slane %v724, 4
      %v726 = vrot.slane %v375, 5
      %v727 = vsel %vm719, %v725, %v726
      %v728 = vrot.slane %v695, 5
      %v729 = vrot.slane %v728, 4
      %v730 = vrot.slane %v376, 5
      %v731 = vsel %vm719, %v729, %v730
      %v732 = vrot.slane %v696, 5
      %v733 = vrot.slane %v732, 4
      %v734 = vrot.slane %v377, 5
      %v735 = vsel %vm719, %v733, %v734
      %v736 = vrot.slane %v697, 5
      %v737 = vrot.slane %v736, 4
      %v738 = vrot.slane %v378, 5
      %v739 = vsel %vm719, %v737, %v738
      %v740 = vrot.slane %v698, 5
      %v741 = vrot.slane %v740, 4
      %v742 = vrot.slane %v379, 5
      %v743 = vsel %vm719, %v741, %v742
      %v744 = vrot.slane %v699, 5
      %v745 = vrot.slane %v744, 4
      %v746 = vrot.slane %v380, 5
      %v747 = vsel %vm719, %v745, %v746
      %v748 = vrot.slane %v700, 5
      %v749 = vrot.slane %v748, 4
      %v750 = vrot.slane %v381, 5
      %v751 = vsel %vm719, %v749, %v750
      %s752 = scalar_lea.vmem %s3, 8
      %v753 = vld [vmem:[%s752] sm:$0xf]
      %v754 = vunpack.c.l.b16 %v723
      %v755 = vunpack.c.l.b16 %v727
      %v756 = vunpack.c.l.b16 %v731
      %v757 = vunpack.c.l.b16 %v735
      %v758 = vunpack.c.l.b16 %v739
      %v759 = vunpack.c.l.b16 %v743
      %v760 = vunpack.c.l.b16 %v747
      %v761 = vunpack.c.l.b16 %v751
      %v762 = vpack.c.b16 %v755, %v754
      %v763 = vpack.c.b16 %v757, %v756
      %v764 = vpack.c.b16 %v759, %v758
      %v765 = vpack.c.b16 %v761, %v760
      %v767 = vsel %vm511, %v762, 0
      %v770 = vsel %vm511, %v763, 0
      %v773 = vsel %vm511, %v764, 0
      %v776 = vsel %vm511, %v765, 0
      %v779 = vsel %vm524, %v753, 0
      %781 = vmatprep.subr.bf16.mxu0 0
      %782 = vmatpush1.bf16.msra.mxu0 %v779
      %783 = vmatprep.subr.bf16.mxu0 0
      %784 = vmatpush1.bf16.msra.mxu0 0
      %785 = vmatprep.subr.bf16.mxu0 0
      %786 = vmatpush1.bf16.msra.mxu0 0
      %787 = vmatprep.subr.bf16.mxu0 0
      %788 = vmatpush1.bf16.msra.mxu0 0
      %789 = vmatprep.subr.bf16.mxu0 0
      %790 = vmatpush1.bf16.msra.mxu0 0
      %791 = vmatprep.subr.bf16.mxu0 0
      %792 = vmatpush1.bf16.msra.mxu0 0
      %793 = vmatprep.subr.bf16.mxu0 0
      %794 = vmatpush1.bf16.msra.mxu0 0
      %795 = vmatprep.subr.bf16.mxu0 0
      %796 = vmatpush1.bf16.msra.mxu0 0
      %797 = vmatprep.subr.bf16.mxu0 0
      %798 = vmatpush1.bf16.msra.mxu0 0
      %799 = vmatprep.subr.bf16.mxu0 0
      %800 = vmatpush1.bf16.msra.mxu0 0
      %801 = vmatprep.subr.bf16.mxu0 0
      %802 = vmatpush1.bf16.msra.mxu0 0
      %803 = vmatprep.subr.bf16.mxu0 0
      %804 = vmatpush1.bf16.msra.mxu0 0
      %805 = vmatprep.subr.bf16.mxu0 0
      %806 = vmatpush1.bf16.msra.mxu0 0
      %807 = vmatprep.subr.bf16.mxu0 0
      %808 = vmatpush1.bf16.msra.mxu0 0
      %809 = vmatprep.subr.bf16.mxu0 0
      %810 = vmatpush1.bf16.msra.mxu0 0
      %811 = vmatprep.subr.bf16.mxu0 0
      %812 = vmatpush1.bf16.msra.mxu0 0
      %813 = vmatprep.mubr.bf16.mxu0 0
      %814 = vmatmul.mubr.bf16.gmra.mrb[0].mxu0 %v767
      %v815 = vpop.f32.mrb[0].mxu0
      %v816 = vadd.f32 0.0, %v815
      %v817 = vpop.f32.mrb[0].mxu0
      %v818 = vpop.f32.mrb[0].mxu0
      %v819 = vadd.f32 0.0, %v818
      %v820 = vpop.f32.mrb[0].mxu0
      %821 = vmatprep.mubr.bf16.mxu0 0
      %822 = vmatmul.mubr.bf16.gmra.mrb[0].mxu0 %v770
      %v823 = vpop.f32.mrb[0].mxu0
      %v824 = vadd.f32 0.0, %v823
      %v825 = vpop.f32.mrb[0].mxu0
      %v826 = vpop.f32.mrb[0].mxu0
      %v827 = vadd.f32 0.0, %v826
      %v828 = vpop.f32.mrb[0].mxu0
      %829 = vmatprep.mubr.bf16.mxu0 0
      %830 = vmatmul.mubr.bf16.gmra.mrb[0].mxu0 %v773
      %v831 = vpop.f32.mrb[0].mxu0
      %v832 = vadd.f32 0.0, %v831
      %v833 = vpop.f32.mrb[0].mxu0
      %v834 = vpop.f32.mrb[0].mxu0
      %v835 = vadd.f32 0.0, %v834
      %v836 = vpop.f32.mrb[0].mxu0
      %837 = vmatprep.mubr.bf16.mxu0 0
      %838 = vmatmul.mubr.bf16.gmra.mrb[0].mxu0 %v776
      %v839 = vpop.f32.mrb[0].mxu0
      %v840 = vadd.f32 0.0, %v839
      %v841 = vpop.f32.mrb[0].mxu0
      %v842 = vpop.f32.mrb[0].mxu0
      %v843 = vadd.f32 0.0, %v842
      %v844 = vpop.f32.mrb[0].mxu0
      %845 = vdwg.mxu0
      %v846 = vadd.f32 %v663, %v816
      %v847 = vadd.f32 %v666, %v819
      %v848 = vadd.f32 %v671, %v824
      %v849 = vadd.f32 %v674, %v827
      %v850 = vadd.f32 %v679, %v832
      %v851 = vadd.f32 %v682, %v835
      %v852 = vadd.f32 %v687, %v840
      %v853 = vadd.f32 %v690, %v843
      %s854 = scalar_lea.vmem %s324, 8
      %v855 = vld [vmem:[%s854] sm:$0xf]
      %v856 = vld [vmem:[%s854 + $0x8] sm:$0xf]
      %v857 = vld [vmem:[%s854 + $0x10] sm:$0xf]
      %v858 = vld [vmem:[%s854 + $0x18] sm:$0xf]
      %v859 = vld [vmem:[%s854 + $0x20] sm:$0xf]
      %v860 = vld [vmem:[%s854 + $0x28] sm:$0xf]
      %v861 = vld [vmem:[%s854 + $0x30] sm:$0xf]
      %v862 = vld [vmem:[%s854 + $0x38] sm:$0xf]
      %s863 = scalar_lea.vmem %s3, 12
      %v864 = vld [vmem:[%s863] sm:$0xf]
      %v873 = vunpack.c.l.b16 %v855
      %v874 = vunpack.c.l.b16 %v856
      %v875 = vunpack.c.l.b16 %v857
      %v876 = vunpack.c.l.b16 %v858
      %v877 = vunpack.c.l.b16 %v859
      %v878 = vunpack.c.l.b16 %v860
      %v879 = vunpack.c.l.b16 %v861
      %v880 = vunpack.c.l.b16 %v862
      %v881 = vpack.c.b16 %v874, %v873
      %v882 = vpack.c.b16 %v876, %v875
      %v883 = vpack.c.b16 %v878, %v877
      %v884 = vpack.c.b16 %v880, %v879
      %v886 = vsel %vm511, %v881, 0
      %v889 = vsel %vm511, %v882, 0
      %v892 = vsel %vm511, %v883, 0
      %v895 = vsel %vm511, %v884, 0
      %v898 = vsel %vm524, %v864, 0
      %900 = vmatprep.subr.bf16.mxu0 0
      %901 = vmatpush1.bf16.msra.mxu0 %v898
      %902 = vmatprep.subr.bf16.mxu0 0
      %903 = vmatpush1.bf16.msra.mxu0 0
      %904 = vmatprep.subr.bf16.mxu0 0
      %905 = vmatpush1.bf16.msra.mxu0 0
      %906 = vmatprep.subr.bf16.mxu0 0
      %907 = vmatpush1.bf16.msra.mxu0 0
      %908 = vmatprep.subr.bf16.mxu0 0
      %909 = vmatpush1.bf16.msra.mxu0 0
      %910 = vmatprep.subr.bf16.mxu0 0
      %911 = vmatpush1.bf16.msra.mxu0 0
      %912 = vmatprep.subr.bf16.mxu0 0
      %913 = vmatpush1.bf16.msra.mxu0 0
      %914 = vmatprep.subr.bf16.mxu0 0
      %915 = vmatpush1.bf16.msra.mxu0 0
      %916 = vmatprep.subr.bf16.mxu0 0
      %917 = vmatpush1.bf16.msra.mxu0 0
      %918 = vmatprep.subr.bf16.mxu0 0
      %919 = vmatpush1.bf16.msra.mxu0 0
      %920 = vmatprep.subr.bf16.mxu0 0
      %921 = vmatpush1.bf16.msra.mxu0 0
      %922 = vmatprep.subr.bf16.mxu0 0
      %923 = vmatpush1.bf16.msra.mxu0 0
      %924 = vmatprep.subr.bf16.mxu0 0
      %925 = vmatpush1.bf16.msra.mxu0 0
      %926 = vmatprep.subr.bf16.mxu0 0
      %927 = vmatpush1.bf16.msra.mxu0 0
      %928 = vmatprep.subr.bf16.mxu0 0
      %929 = vmatpush1.bf16.msra.mxu0 0
      %930 = vmatprep.subr.bf16.mxu0 0
      %931 = vmatpush1.bf16.msra.mxu0 0
      %932 = vmatprep.mubr.bf16.mxu0 0
      %933 = vmatmul.mubr.bf16.gmra.mrb[0].mxu0 %v886
      %v934 = vpop.f32.mrb[0].mxu0
      %v935 = vadd.f32 0.0, %v934
      %v936 = vpop.f32.mrb[0].mxu0
      %v937 = vpop.f32.mrb[0].mxu0
      %v938 = vadd.f32 0.0, %v937
      %v939 = vpop.f32.mrb[0].mxu0
      %940 = vmatprep.mubr.bf16.mxu0 0
      %941 = vmatmul.mubr.bf16.gmra.mrb[0].mxu0 %v889
      %v942 = vpop.f32.mrb[0].mxu0
      %v943 = vadd.f32 0.0, %v942
      %v944 = vpop.f32.mrb[0].mxu0
      %v945 = vpop.f32.mrb[0].mxu0
      %v946 = vadd.f32 0.0, %v945
      %v947 = vpop.f32.mrb[0].mxu0
      %948 = vmatprep.mubr.bf16.mxu0 0
      %949 = vmatmul.mubr.bf16.gmra.mrb[0].mxu0 %v892
      %v950 = vpop.f32.mrb[0].mxu0
      %v951 = vadd.f32 0.0, %v950
      %v952 = vpop.f32.mrb[0].mxu0
      %v953 = vpop.f32.mrb[0].mxu0
      %v954 = vadd.f32 0.0, %v953
      %v955 = vpop.f32.mrb[0].mxu0
      %956 = vmatprep.mubr.bf16.mxu0 0
      %957 = vmatmul.mubr.bf16.gmra.mrb[0].mxu0 %v895
      %v958 = vpop.f32.mrb[0].mxu0
      %v959 = vadd.f32 0.0, %v958
      %v960 = vpop.f32.mrb[0].mxu0
      %v961 = vpop.f32.mrb[0].mxu0
      %v962 = vadd.f32 0.0, %v961
      %v963 = vpop.f32.mrb[0].mxu0
      %964 = vdwg.mxu0
      %v965 = vadd.f32 %v846, %v935
      %v966 = vadd.f32 %v847, %v938
      %v967 = vadd.f32 %v848, %v943
      %v968 = vadd.f32 %v849, %v946
      %v969 = vadd.f32 %v850, %v951
      %v970 = vadd.f32 %v851, %v954
      %v971 = vadd.f32 %v852, %v959
      %v972 = vadd.f32 %v853, %v962
      %v973 = vld [vmem:[%s854] sm:$0xf]
      %v974 = vld [vmem:[%s854 + $0x4] sm:$0x1]
      %v975 = vld [vmem:[%s854 + $0x8] sm:$0xf]
      %v976 = vld [vmem:[%s854 + $0xc] sm:$0x1]
      %v977 = vld [vmem:[%s854 + $0x10] sm:$0xf]
      %v978 = vld [vmem:[%s854 + $0x14] sm:$0x1]
      %v979 = vld [vmem:[%s854 + $0x18] sm:$0xf]
      %v980 = vld [vmem:[%s854 + $0x1c] sm:$0x1]
      %v981 = vld [vmem:[%s854 + $0x20] sm:$0xf]
      %v982 = vld [vmem:[%s854 + $0x24] sm:$0x1]
      %v983 = vld [vmem:[%s854 + $0x28] sm:$0xf]
      %v984 = vld [vmem:[%s854 + $0x2c] sm:$0x1]
      %v985 = vld [vmem:[%s854 + $0x30] sm:$0xf]
      %v986 = vld [vmem:[%s854 + $0x34] sm:$0x1]
      %v987 = vld [vmem:[%s854 + $0x38] sm:$0xf]
      %v988 = vld [vmem:[%s854 + $0x3c] sm:$0x1]
      %v990 = vshrl.u32 %v973, 16
      %v992 = vrot.slane %v990, 4
      %v993 = vshll.u32 %v973, 16
      %v995 = vrot.slane %v993, 5
      %v996 = vor.u32 %v992, %v995
      %v997 = vrot.slane %v996, 4
      %v999 = vshll.u32 %v974, 16
      %v1001 = vrot.slane %v999, 5
      %v1002 = vsel %vm384, %v997, %v1001
      %v1004 = vshrl.u32 %v975, 16
      %v1006 = vrot.slane %v1004, 4
      %v1007 = vshll.u32 %v975, 16
      %v1009 = vrot.slane %v1007, 5
      %v1010 = vor.u32 %v1006, %v1009
      %v1011 = vrot.slane %v1010, 4
      %v1013 = vshll.u32 %v976, 16
      %v1015 = vrot.slane %v1013, 5
      %v1016 = vsel %vm384, %v1011, %v1015
      %v1018 = vshrl.u32 %v977, 16
      %v1020 = vrot.slane %v1018, 4
      %v1021 = vshll.u32 %v977, 16
      %v1023 = vrot.slane %v1021, 5
      %v1024 = vor.u32 %v1020, %v1023
      %v1025 = vrot.slane %v1024, 4
      %v1027 = vshll.u32 %v978, 16
      %v1029 = vrot.slane %v1027, 5
      %v1030 = vsel %vm384, %v1025, %v1029
      %v1032 = vshrl.u32 %v979, 16
      %v1034 = vrot.slane %v1032, 4
      %v1035 = vshll.u32 %v979, 16
      %v1037 = vrot.slane %v1035, 5
      %v1038 = vor.u32 %v1034, %v1037
      %v1039 = vrot.slane %v1038, 4
      %v1041 = vshll.u32 %v980, 16
      %v1043 = vrot.slane %v1041, 5
      %v1044 = vsel %vm384, %v1039, %v1043
      %v1046 = vshrl.u32 %v981, 16
      %v1048 = vrot.slane %v1046, 4
      %v1049 = vshll.u32 %v981, 16
      %v1051 = vrot.slane %v1049, 5
      %v1052 = vor.u32 %v1048, %v1051
      %v1053 = vrot.slane %v1052, 4
      %v1055 = vshll.u32 %v982, 16
      %v1057 = vrot.slane %v1055, 5
      %v1058 = vsel %vm384, %v1053, %v1057
      %v1060 = vshrl.u32 %v983, 16
      %v1062 = vrot.slane %v1060, 4
      %v1063 = vshll.u32 %v983, 16
      %v1065 = vrot.slane %v1063, 5
      %v1066 = vor.u32 %v1062, %v1065
      %v1067 = vrot.slane %v1066, 4
      %v1069 = vshll.u32 %v984, 16
      %v1071 = vrot.slane %v1069, 5
      %v1072 = vsel %vm384, %v1067, %v1071
      %v1074 = vshrl.u32 %v985, 16
      %v1076 = vrot.slane %v1074, 4
      %v1077 = vshll.u32 %v985, 16
      %v1079 = vrot.slane %v1077, 5
      %v1080 = vor.u32 %v1076, %v1079
      %v1081 = vrot.slane %v1080, 4
      %v1083 = vshll.u32 %v986, 16
      %v1085 = vrot.slane %v1083, 5
      %v1086 = vsel %vm384, %v1081, %v1085
      %v1088 = vshrl.u32 %v987, 16
      %v1090 = vrot.slane %v1088, 4
      %v1091 = vshll.u32 %v987, 16
      %v1093 = vrot.slane %v1091, 5
      %v1094 = vor.u32 %v1090, %v1093
      %v1095 = vrot.slane %v1094, 4
      %v1097 = vshll.u32 %v988, 16
      %v1099 = vrot.slane %v1097, 5
      %v1100 = vsel %vm384, %v1095, %v1099
      %s1101 = scalar_lea.vmem %s3, 16
      %v1102 = vld [vmem:[%s1101] sm:$0xf]
      %v1103 = vunpack.c.l.b16 %v1002
      %v1104 = vunpack.c.l.b16 %v1016
      %v1105 = vunpack.c.l.b16 %v1030
      %v1106 = vunpack.c.l.b16 %v1044
      %v1107 = vunpack.c.l.b16 %v1058
      %v1108 = vunpack.c.l.b16 %v1072
      %v1109 = vunpack.c.l.b16 %v1086
      %v1110 = vunpack.c.l.b16 %v1100
      %v1111 = vpack.c.b16 %v1104, %v1103
      %v1112 = vpack.c.b16 %v1106, %v1105
      %v1113 = vpack.c.b16 %v1108, %v1107
      %v1114 = vpack.c.b16 %v1110, %v1109
      %v1116 = vsel %vm511, %v1111, 0
      %v1119 = vsel %vm511, %v1112, 0
      %v1122 = vsel %vm511, %v1113, 0
      %v1125 = vsel %vm511, %v1114, 0
      %v1128 = vsel %vm524, %v1102, 0
      %1130 = vmatprep.subr.bf16.mxu0 0
      %1131 = vmatpush1.bf16.msra.mxu0 %v1128
      %1132 = vmatprep.subr.bf16.mxu0 0
      %1133 = vmatpush1.bf16.msra.mxu0 0
      %1134 = vmatprep.subr.bf16.mxu0 0
      %1135 = vmatpush1.bf16.msra.mxu0 0
      %1136 = vmatprep.subr.bf16.mxu0 0
      %1137 = vmatpush1.bf16.msra.mxu0 0
      %1138 = vmatprep.subr.bf16.mxu0 0
      %1139 = vmatpush1.bf16.msra.mxu0 0
      %1140 = vmatprep.subr.bf16.mxu0 0
      %1141 = vmatpush1.bf16.msra.mxu0 0
      %1142 = vmatprep.subr.bf16.mxu0 0
      %1143 = vmatpush1.bf16.msra.mxu0 0
      %1144 = vmatprep.subr.bf16.mxu0 0
      %1145 = vmatpush1.bf16.msra.mxu0 0
      %1146 = vmatprep.subr.bf16.mxu0 0
      %1147 = vmatpush1.bf16.msra.mxu0 0
      %1148 = vmatprep.subr.bf16.mxu0 0
      %1149 = vmatpush1.bf16.msra.mxu0 0
      %1150 = vmatprep.subr.bf16.mxu0 0
      %1151 = vmatpush1.bf16.msra.mxu0 0
      %1152 = vmatprep.subr.bf16.mxu0 0
      %1153 = vmatpush1.bf16.msra.mxu0 0
      %1154 = vmatprep.subr.bf16.mxu0 0
      %1155 = vmatpush1.bf16.msra.mxu0 0
      %1156 = vmatprep.subr.bf16.mxu0 0
      %1157 = vmatpush1.bf16.msra.mxu0 0
      %1158 = vmatprep.subr.bf16.mxu0 0
      %1159 = vmatpush1.bf16.msra.mxu0 0
      %1160 = vmatprep.subr.bf16.mxu0 0
      %1161 = vmatpush1.bf16.msra.mxu0 0
      %1162 = vmatprep.mubr.bf16.mxu0 0
      %1163 = vmatmul.mubr.bf16.gmra.mrb[0].mxu0 %v1116
      %v1164 = vpop.f32.mrb[0].mxu0
      %v1165 = vadd.f32 0.0, %v1164
      %v1166 = vpop.f32.mrb[0].mxu0
      %v1167 = vpop.f32.mrb[0].mxu0
      %v1168 = vadd.f32 0.0, %v1167
      %v1169 = vpop.f32.mrb[0].mxu0
      %1170 = vmatprep.mubr.bf16.mxu0 0
      %1171 = vmatmul.mubr.bf16.gmra.mrb[0].mxu0 %v1119
      %v1172 = vpop.f32.mrb[0].mxu0
      %v1173 = vadd.f32 0.0, %v1172
      %v1174 = vpop.f32.mrb[0].mxu0
      %v1175 = vpop.f32.mrb[0].mxu0
      %v1176 = vadd.f32 0.0, %v1175
      %v1177 = vpop.f32.mrb[0].mxu0
      %1178 = vmatprep.mubr.bf16.mxu0 0
      %1179 = vmatmul.mubr.bf16.gmra.mrb[0].mxu0 %v1122
      %v1180 = vpop.f32.mrb[0].mxu0
      %v1181 = vadd.f32 0.0, %v1180
      %v1182 = vpop.f32.mrb[0].mxu0
      %v1183 = vpop.f32.mrb[0].mxu0
      %v1184 = vadd.f32 0.0, %v1183
      %v1185 = vpop.f32.mrb[0].mxu0
      %1186 = vmatprep.mubr.bf16.mxu0 0
      %1187 = vmatmul.mubr.bf16.gmra.mrb[0].mxu0 %v1125
      %v1188 = vpop.f32.mrb[0].mxu0
      %v1189 = vadd.f32 0.0, %v1188
      %v1190 = vpop.f32.mrb[0].mxu0
      %v1191 = vpop.f32.mrb[0].mxu0
      %v1192 = vadd.f32 0.0, %v1191
      %v1193 = vpop.f32.mrb[0].mxu0
      %1194 = vdwg.mxu0
      %v1195 = vadd.f32 %v965, %v1165
      %v1196 = vadd.f32 %v966, %v1168
      %v1197 = vadd.f32 %v967, %v1173
      %v1198 = vadd.f32 %v968, %v1176
      %v1199 = vadd.f32 %v969, %v1181
      %v1200 = vadd.f32 %v970, %v1184
      %v1201 = vadd.f32 %v971, %v1189
      %v1202 = vadd.f32 %v972, %v1192
      %v1203 = vld [vmem:[%s854] sm:$0xe]
      %v1204 = vld [vmem:[%s854 + $0x8] sm:$0xe]
      %v1205 = vld [vmem:[%s854 + $0x10] sm:$0xe]
      %v1206 = vld [vmem:[%s854 + $0x18] sm:$0xe]
      %v1207 = vld [vmem:[%s854 + $0x20] sm:$0xe]
      %v1208 = vld [vmem:[%s854 + $0x28] sm:$0xe]
      %v1209 = vld [vmem:[%s854 + $0x30] sm:$0xe]
      %v1210 = vld [vmem:[%s854 + $0x38] sm:$0xe]
      %v1227 = vrot.slane %v1203, 5
      %v1228 = vrot.slane %v1227, 4
      %v1229 = vrot.slane %v974, 5
      %v1230 = vsel %vm719, %v1228, %v1229
      %v1231 = vrot.slane %v1204, 5
      %v1232 = vrot.slane %v1231, 4
      %v1233 = vrot.slane %v976, 5
      %v1234 = vsel %vm719, %v1232, %v1233
      %v1235 = vrot.slane %v1205, 5
      %v1236 = vrot.slane %v1235, 4
      %v1237 = vrot.slane %v978, 5
      %v1238 = vsel %vm719, %v1236, %v1237
      %v1239 = vrot.slane %v1206, 5
      %v1240 = vrot.slane %v1239, 4
      %v1241 = vrot.slane %v980, 5
      %v1242 = vsel %vm719, %v1240, %v1241
      %v1243 = vrot.slane %v1207, 5
      %v1244 = vrot.slane %v1243, 4
      %v1245 = vrot.slane %v982, 5
      %v1246 = vsel %vm719, %v1244, %v1245
      %v1247 = vrot.slane %v1208, 5
      %v1248 = vrot.slane %v1247, 4
      %v1249 = vrot.slane %v984, 5
      %v1250 = vsel %vm719, %v1248, %v1249
      %v1251 = vrot.slane %v1209, 5
      %v1252 = vrot.slane %v1251, 4
      %v1253 = vrot.slane %v986, 5
      %v1254 = vsel %vm719, %v1252, %v1253
      %v1255 = vrot.slane %v1210, 5
      %v1256 = vrot.slane %v1255, 4
      %v1257 = vrot.slane %v988, 5
      %v1258 = vsel %vm719, %v1256, %v1257
      %s1259 = scalar_lea.vmem %s3, 20
      %v1260 = vld [vmem:[%s1259] sm:$0xf]
      %v1261 = vunpack.c.l.b16 %v1230
      %v1262 = vunpack.c.l.b16 %v1234
      %v1263 = vunpack.c.l.b16 %v1238
      %v1264 = vunpack.c.l.b16 %v1242
      %v1265 = vunpack.c.l.b16 %v1246
      %v1266 = vunpack.c.l.b16 %v1250
      %v1267 = vunpack.c.l.b16 %v1254
      %v1268 = vunpack.c.l.b16 %v1258
      %v1269 = vpack.c.b16 %v1262, %v1261
      %v1270 = vpack.c.b16 %v1264, %v1263
      %v1271 = vpack.c.b16 %v1266, %v1265
      %v1272 = vpack.c.b16 %v1268, %v1267
      %v1274 = vsel %vm511, %v1269, 0
      %v1277 = vsel %vm511, %v1270, 0
      %v1280 = vsel %vm511, %v1271, 0
      %v1283 = vsel %vm511, %v1272, 0
      %v1286 = vsel %vm524, %v1260, 0
      %1288 = vmatprep.subr.bf16.mxu0 0
      %1289 = vmatpush1.bf16.msra.mxu0 %v1286
      %1290 = vmatprep.subr.bf16.mxu0 0
      %1291 = vmatpush1.bf16.msra.mxu0 0
      %1292 = vmatprep.subr.bf16.mxu0 0
      %1293 = vmatpush1.bf16.msra.mxu0 0
      %1294 = vmatprep.subr.bf16.mxu0 0
      %1295 = vmatpush1.bf16.msra.mxu0 0
      %1296 = vmatprep.subr.bf16.mxu0 0
      %1297 = vmatpush1.bf16.msra.mxu0 0
      %1298 = vmatprep.subr.bf16.mxu0 0
      %1299 = vmatpush1.bf16.msra.mxu0 0
      %1300 = vmatprep.subr.bf16.mxu0 0
      %1301 = vmatpush1.bf16.msra.mxu0 0
      %1302 = vmatprep.subr.bf16.mxu0 0
      %1303 = vmatpush1.bf16.msra.mxu0 0
      %1304 = vmatprep.subr.bf16.mxu0 0
      %1305 = vmatpush1.bf16.msra.mxu0 0
      %1306 = vmatprep.subr.bf16.mxu0 0
      %1307 = vmatpush1.bf16.msra.mxu0 0
      %1308 = vmatprep.subr.bf16.mxu0 0
      %1309 = vmatpush1.bf16.msra.mxu0 0
      %1310 = vmatprep.subr.bf16.mxu0 0
      %1311 = vmatpush1.bf16.msra.mxu0 0
      %1312 = vmatprep.subr.bf16.mxu0 0
      %1313 = vmatpush1.bf16.msra.mxu0 0
      %1314 = vmatprep.subr.bf16.mxu0 0
      %1315 = vmatpush1.bf16.msra.mxu0 0
      %1316 = vmatprep.subr.bf16.mxu0 0
      %1317 = vmatpush1.bf16.msra.mxu0 0
      %1318 = vmatprep.subr.bf16.mxu0 0
      %1319 = vmatpush1.bf16.msra.mxu0 0
      %1320 = vmatprep.mubr.bf16.mxu0 0
      %1321 = vmatmul.mubr.bf16.gmra.mrb[0].mxu0 %v1274
      %v1322 = vpop.f32.mrb[0].mxu0
      %v1323 = vadd.f32 0.0, %v1322
      %v1324 = vpop.f32.mrb[0].mxu0
      %v1325 = vpop.f32.mrb[0].mxu0
      %v1326 = vadd.f32 0.0, %v1325
      %v1327 = vpop.f32.mrb[0].mxu0
      %1328 = vmatprep.mubr.bf16.mxu0 0
      %1329 = vmatmul.mubr.bf16.gmra.mrb[0].mxu0 %v1277
      %v1330 = vpop.f32.mrb[0].mxu0
      %v1331 = vadd.f32 0.0, %v1330
      %v1332 = vpop.f32.mrb[0].mxu0
      %v1333 = vpop.f32.mrb[0].mxu0
      %v1334 = vadd.f32 0.0, %v1333
      %v1335 = vpop.f32.mrb[0].mxu0
      %1336 = vmatprep.mubr.bf16.mxu0 0
      %1337 = vmatmul.mubr.bf16.gmra.mrb[0].mxu0 %v1280
      %v1338 = vpop.f32.mrb[0].mxu0
      %v1339 = vadd.f32 0.0, %v1338
      %v1340 = vpop.f32.mrb[0].mxu0
      %v1341 = vpop.f32.mrb[0].mxu0
      %v1342 = vadd.f32 0.0, %v1341
      %v1343 = vpop.f32.mrb[0].mxu0
      %1344 = vmatprep.mubr.bf16.mxu0 0
      %1345 = vmatmul.mubr.bf16.gmra.mrb[0].mxu0 %v1283
      %v1346 = vpop.f32.mrb[0].mxu0
      %v1347 = vadd.f32 0.0, %v1346
      %v1348 = vpop.f32.mrb[0].mxu0
      %v1349 = vpop.f32.mrb[0].mxu0
      %v1350 = vadd.f32 0.0, %v1349
      %v1351 = vpop.f32.mrb[0].mxu0
      %1352 = vdwg.mxu0
      %v1353 = vadd.f32 %v1195, %v1323
      %v1354 = vadd.f32 %v1196, %v1326
      %v1355 = vadd.f32 %v1197, %v1331
      %v1356 = vadd.f32 %v1198, %v1334
      %v1357 = vadd.f32 %v1199, %v1339
      %v1358 = vadd.f32 %v1200, %v1342
      %v1359 = vadd.f32 %v1201, %v1347
      %v1360 = vadd.f32 %v1202, %v1350
      %s1361 = scalar_lea.vmem %s324, 16
      %v1362 = vld [vmem:[%s1361] sm:$0xf]
      %v1363 = vld [vmem:[%s1361 + $0x8] sm:$0xf]
      %v1364 = vld [vmem:[%s1361 + $0x10] sm:$0xf]
      %v1365 = vld [vmem:[%s1361 + $0x18] sm:$0xf]
      %v1366 = vld [vmem:[%s1361 + $0x20] sm:$0xf]
      %v1367 = vld [vmem:[%s1361 + $0x28] sm:$0xf]
      %v1368 = vld [vmem:[%s1361 + $0x30] sm:$0xf]
      %v1369 = vld [vmem:[%s1361 + $0x38] sm:$0xf]
      %s1370 = scalar_lea.vmem %s3, 24
      %v1371 = vld [vmem:[%s1370] sm:$0xf]
      %v1380 = vunpack.c.l.b16 %v1362
      %v1381 = vunpack.c.l.b16 %v1363
      %v1382 = vunpack.c.l.b16 %v1364
      %v1383 = vunpack.c.l.b16 %v1365
      %v1384 = vunpack.c.l.b16 %v1366
      %v1385 = vunpack.c.l.b16 %v1367
      %v1386 = vunpack.c.l.b16 %v1368
      %v1387 = vunpack.c.l.b16 %v1369
      %v1388 = vpack.c.b16 %v1381, %v1380
      %v1389 = vpack.c.b16 %v1383, %v1382
      %v1390 = vpack.c.b16 %v1385, %v1384
      %v1391 = vpack.c.b16 %v1387, %v1386
      %v1393 = vsel %vm511, %v1388, 0
      %v1396 = vsel %vm511, %v1389, 0
      %v1399 = vsel %vm511, %v1390, 0
      %v1402 = vsel %vm511, %v1391, 0
      %v1405 = vsel %vm524, %v1371, 0
      %1407 = vmatprep.subr.bf16.mxu0 0
      %1408 = vmatpush1.bf16.msra.mxu0 %v1405
      %1409 = vmatprep.subr.bf16.mxu0 0
      %1410 = vmatpush1.bf16.msra.mxu0 0
      %1411 = vmatprep.subr.bf16.mxu0 0
      %1412 = vmatpush1.bf16.msra.mxu0 0
      %1413 = vmatprep.subr.bf16.mxu0 0
      %1414 = vmatpush1.bf16.msra.mxu0 0
      %1415 = vmatprep.subr.bf16.mxu0 0
      %1416 = vmatpush1.bf16.msra.mxu0 0
      %1417 = vmatprep.subr.bf16.mxu0 0
      %1418 = vmatpush1.bf16.msra.mxu0 0
      %1419 = vmatprep.subr.bf16.mxu0 0
      %1420 = vmatpush1.bf16.msra.mxu0 0
      %1421 = vmatprep.subr.bf16.mxu0 0
      %1422 = vmatpush1.bf16.msra.mxu0 0
      %1423 = vmatprep.subr.bf16.mxu0 0
      %1424 = vmatpush1.bf16.msra.mxu0 0
      %1425 = vmatprep.subr.bf16.mxu0 0
      %1426 = vmatpush1.bf16.msra.mxu0 0
      %1427 = vmatprep.subr.bf16.mxu0 0
      %1428 = vmatpush1.bf16.msra.mxu0 0
      %1429 = vmatprep.subr.bf16.mxu0 0
      %1430 = vmatpush1.bf16.msra.mxu0 0
      %1431 = vmatprep.subr.bf16.mxu0 0
      %1432 = vmatpush1.bf16.msra.mxu0 0
      %1433 = vmatprep.subr.bf16.mxu0 0
      %1434 = vmatpush1.bf16.msra.mxu0 0
      %1435 = vmatprep.subr.bf16.mxu0 0
      %1436 = vmatpush1.bf16.msra.mxu0 0
      %1437 = vmatprep.subr.bf16.mxu0 0
      %1438 = vmatpush1.bf16.msra.mxu0 0
      %1439 = vmatprep.mubr.bf16.mxu0 0
      %1440 = vmatmul.mubr.bf16.gmra.mrb[0].mxu0 %v1393
      %v1441 = vpop.f32.mrb[0].mxu0
      %v1442 = vadd.f32 0.0, %v1441
      %v1443 = vpop.f32.mrb[0].mxu0
      %v1444 = vpop.f32.mrb[0].mxu0
      %v1445 = vadd.f32 0.0, %v1444
      %v1446 = vpop.f32.mrb[0].mxu0
      %1447 = vmatprep.mubr.bf16.mxu0 0
      %1448 = vmatmul.mubr.bf16.gmra.mrb[0].mxu0 %v1396
      %v1449 = vpop.f32.mrb[0].mxu0
      %v1450 = vadd.f32 0.0, %v1449
      %v1451 = vpop.f32.mrb[0].mxu0
      %v1452 = vpop.f32.mrb[0].mxu0
      %v1453 = vadd.f32 0.0, %v1452
      %v1454 = vpop.f32.mrb[0].mxu0
      %1455 = vmatprep.mubr.bf16.mxu0 0
      %1456 = vmatmul.mubr.bf16.gmra.mrb[0].mxu0 %v1399
      %v1457 = vpop.f32.mrb[0].mxu0
      %v1458 = vadd.f32 0.0, %v1457
      %v1459 = vpop.f32.mrb[0].mxu0
      %v1460 = vpop.f32.mrb[0].mxu0
      %v1461 = vadd.f32 0.0, %v1460
      %v1462 = vpop.f32.mrb[0].mxu0
      %1463 = vmatprep.mubr.bf16.mxu0 0
      %1464 = vmatmul.mubr.bf16.gmra.mrb[0].mxu0 %v1402
      %v1465 = vpop.f32.mrb[0].mxu0
      %v1466 = vadd.f32 0.0, %v1465
      %v1467 = vpop.f32.mrb[0].mxu0
      %v1468 = vpop.f32.mrb[0].mxu0
      %v1469 = vadd.f32 0.0, %v1468
      %v1470 = vpop.f32.mrb[0].mxu0
      %1471 = vdwg.mxu0
      %v1472 = vadd.f32 %v1353, %v1442
      %v1473 = vadd.f32 %v1354, %v1445
      %v1474 = vadd.f32 %v1355, %v1450
      %v1475 = vadd.f32 %v1356, %v1453
      %v1476 = vadd.f32 %v1357, %v1458
      %v1477 = vadd.f32 %v1358, %v1461
      %v1478 = vadd.f32 %v1359, %v1466
      %v1479 = vadd.f32 %v1360, %v1469
      %v1480 = vld [vmem:[%s1361] sm:$0xf]
      %v1481 = vld [vmem:[%s1361 + $0x4] sm:$0x1]
      %v1482 = vld [vmem:[%s1361 + $0x8] sm:$0xf]
      %v1483 = vld [vmem:[%s1361 + $0xc] sm:$0x1]
      %v1484 = vld [vmem:[%s1361 + $0x10] sm:$0xf]
      %v1485 = vld [vmem:[%s1361 + $0x14] sm:$0x1]
      %v1486 = vld [vmem:[%s1361 + $0x18] sm:$0xf]
      %v1487 = vld [vmem:[%s1361 + $0x1c] sm:$0x1]
      %v1488 = vld [vmem:[%s1361 + $0x20] sm:$0xf]
      %v1489 = vld [vmem:[%s1361 + $0x24] sm:$0x1]
      %v1490 = vld [vmem:[%s1361 + $0x28] sm:$0xf]
      %v1491 = vld [vmem:[%s1361 + $0x2c] sm:$0x1]
      %v1492 = vld [vmem:[%s1361 + $0x30] sm:$0xf]
      %v1493 = vld [vmem:[%s1361 + $0x34] sm:$0x1]
      %v1494 = vld [vmem:[%s1361 + $0x38] sm:$0xf]
      %v1495 = vld [vmem:[%s1361 + $0x3c] sm:$0x1]
      %v1497 = vshrl.u32 %v1480, 16
      %v1499 = vrot.slane %v1497, 4
      %v1500 = vshll.u32 %v1480, 16
      %v1502 = vrot.slane %v1500, 5
      %v1503 = vor.u32 %v1499, %v1502
      %v1504 = vrot.slane %v1503, 4
      %v1506 = vshll.u32 %v1481, 16
      %v1508 = vrot.slane %v1506, 5
      %v1509 = vsel %vm384, %v1504, %v1508
      %v1511 = vshrl.u32 %v1482, 16
      %v1513 = vrot.slane %v1511, 4
      %v1514 = vshll.u32 %v1482, 16
      %v1516 = vrot.slane %v1514, 5
      %v1517 = vor.u32 %v1513, %v1516
      %v1518 = vrot.slane %v1517, 4
      %v1520 = vshll.u32 %v1483, 16
      %v1522 = vrot.slane %v1520, 5
      %v1523 = vsel %vm384, %v1518, %v1522
      %v1525 = vshrl.u32 %v1484, 16
      %v1527 = vrot.slane %v1525, 4
      %v1528 = vshll.u32 %v1484, 16
      %v1530 = vrot.slane %v1528, 5
      %v1531 = vor.u32 %v1527, %v1530
      %v1532 = vrot.slane %v1531, 4
      %v1534 = vshll.u32 %v1485, 16
      %v1536 = vrot.slane %v1534, 5
      %v1537 = vsel %vm384, %v1532, %v1536
      %v1539 = vshrl.u32 %v1486, 16
      %v1541 = vrot.slane %v1539, 4
      %v1542 = vshll.u32 %v1486, 16
      %v1544 = vrot.slane %v1542, 5
      %v1545 = vor.u32 %v1541, %v1544
      %v1546 = vrot.slane %v1545, 4
      %v1548 = vshll.u32 %v1487, 16
      %v1550 = vrot.slane %v1548, 5
      %v1551 = vsel %vm384, %v1546, %v1550
      %v1553 = vshrl.u32 %v1488, 16
      %v1555 = vrot.slane %v1553, 4
      %v1556 = vshll.u32 %v1488, 16
      %v1558 = vrot.slane %v1556, 5
      %v1559 = vor.u32 %v1555, %v1558
      %v1560 = vrot.slane %v1559, 4
      %v1562 = vshll.u32 %v1489, 16
      %v1564 = vrot.slane %v1562, 5
      %v1565 = vsel %vm384, %v1560, %v1564
      %v1567 = vshrl.u32 %v1490, 16
      %v1569 = vrot.slane %v1567, 4
      %v1570 = vshll.u32 %v1490, 16
      %v1572 = vrot.slane %v1570, 5
      %v1573 = vor.u32 %v1569, %v1572
      %v1574 = vrot.slane %v1573, 4
      %v1576 = vshll.u32 %v1491, 16
      %v1578 = vrot.slane %v1576, 5
      %v1579 = vsel %vm384, %v1574, %v1578
      %v1581 = vshrl.u32 %v1492, 16
      %v1583 = vrot.slane %v1581, 4
      %v1584 = vshll.u32 %v1492, 16
      %v1586 = vrot.slane %v1584, 5
      %v1587 = vor.u32 %v1583, %v1586
      %v1588 = vrot.slane %v1587, 4
      %v1590 = vshll.u32 %v1493, 16
      %v1592 = vrot.slane %v1590, 5
      %v1593 = vsel %vm384, %v1588, %v1592
      %v1595 = vshrl.u32 %v1494, 16
      %v1597 = vrot.slane %v1595, 4
      %v1598 = vshll.u32 %v1494, 16
      %v1600 = vrot.slane %v1598, 5
      %v1601 = vor.u32 %v1597, %v1600
      %v1602 = vrot.slane %v1601, 4
      %v1604 = vshll.u32 %v1495, 16
      %v1606 = vrot.slane %v1604, 5
      %v1607 = vsel %vm384, %v1602, %v1606
      %s1608 = scalar_lea.vmem %s3, 28
      %v1609 = vld [vmem:[%s1608] sm:$0xf]
      %v1610 = vunpack.c.l.b16 %v1509
      %v1611 = vunpack.c.l.b16 %v1523
      %v1612 = vunpack.c.l.b16 %v1537
      %v1613 = vunpack.c.l.b16 %v1551
      %v1614 = vunpack.c.l.b16 %v1565
      %v1615 = vunpack.c.l.b16 %v1579
      %v1616 = vunpack.c.l.b16 %v1593
      %v1617 = vunpack.c.l.b16 %v1607
      %v1618 = vpack.c.b16 %v1611, %v1610
      %v1619 = vpack.c.b16 %v1613, %v1612
      %v1620 = vpack.c.b16 %v1615, %v1614
      %v1621 = vpack.c.b16 %v1617, %v1616
      %v1623 = vsel %vm511, %v1618, 0
      %v1626 = vsel %vm511, %v1619, 0
      %v1629 = vsel %vm511, %v1620, 0
      %v1632 = vsel %vm511, %v1621, 0
      %v1635 = vsel %vm524, %v1609, 0
      %1637 = vmatprep.subr.bf16.mxu0 0
      %1638 = vmatpush1.bf16.msra.mxu0 %v1635
      %1639 = vmatprep.subr.bf16.mxu0 0
      %1640 = vmatpush1.bf16.msra.mxu0 0
      %1641 = vmatprep.subr.bf16.mxu0 0
      %1642 = vmatpush1.bf16.msra.mxu0 0
      %1643 = vmatprep.subr.bf16.mxu0 0
      %1644 = vmatpush1.bf16.msra.mxu0 0
      %1645 = vmatprep.subr.bf16.mxu0 0
      %1646 = vmatpush1.bf16.msra.mxu0 0
      %1647 = vmatprep.subr.bf16.mxu0 0
      %1648 = vmatpush1.bf16.msra.mxu0 0
      %1649 = vmatprep.subr.bf16.mxu0 0
      %1650 = vmatpush1.bf16.msra.mxu0 0
      %1651 = vmatprep.subr.bf16.mxu0 0
      %1652 = vmatpush1.bf16.msra.mxu0 0
      %1653 = vmatprep.subr.bf16.mxu0 0
      %1654 = vmatpush1.bf16.msra.mxu0 0
      %1655 = vmatprep.subr.bf16.mxu0 0
      %1656 = vmatpush1.bf16.msra.mxu0 0
      %1657 = vmatprep.subr.bf16.mxu0 0
      %1658 = vmatpush1.bf16.msra.mxu0 0
      %1659 = vmatprep.subr.bf16.mxu0 0
      %1660 = vmatpush1.bf16.msra.mxu0 0
      %1661 = vmatprep.subr.bf16.mxu0 0
      %1662 = vmatpush1.bf16.msra.mxu0 0
      %1663 = vmatprep.subr.bf16.mxu0 0
      %1664 = vmatpush1.bf16.msra.mxu0 0
      %1665 = vmatprep.subr.bf16.mxu0 0
      %1666 = vmatpush1.bf16.msra.mxu0 0
      %1667 = vmatprep.subr.bf16.mxu0 0
      %1668 = vmatpush1.bf16.msra.mxu0 0
      %1669 = vmatprep.mubr.bf16.mxu0 0
      %1670 = vmatmul.mubr.bf16.gmra.mrb[0].mxu0 %v1623
      %v1671 = vpop.f32.mrb[0].mxu0
      %v1672 = vadd.f32 0.0, %v1671
      %v1673 = vpop.f32.mrb[0].mxu0
      %v1674 = vpop.f32.mrb[0].mxu0
      %v1675 = vadd.f32 0.0, %v1674
      %v1676 = vpop.f32.mrb[0].mxu0
      %1677 = vmatprep.mubr.bf16.mxu0 0
      %1678 = vmatmul.mubr.bf16.gmra.mrb[0].mxu0 %v1626
      %v1679 = vpop.f32.mrb[0].mxu0
      %v1680 = vadd.f32 0.0, %v1679
      %v1681 = vpop.f32.mrb[0].mxu0
      %v1682 = vpop.f32.mrb[0].mxu0
      %v1683 = vadd.f32 0.0, %v1682
      %v1684 = vpop.f32.mrb[0].mxu0
      %1685 = vmatprep.mubr.bf16.mxu0 0
      %1686 = vmatmul.mubr.bf16.gmra.mrb[0].mxu0 %v1629
      %v1687 = vpop.f32.mrb[0].mxu0
      %v1688 = vadd.f32 0.0, %v1687
      %v1689 = vpop.f32.mrb[0].mxu0
      %v1690 = vpop.f32.mrb[0].mxu0
      %v1691 = vadd.f32 0.0, %v1690
      %v1692 = vpop.f32.mrb[0].mxu0
      %1693 = vmatprep.mubr.bf16.mxu0 0
      %1694 = vmatmul.mubr.bf16.gmra.mrb[0].mxu0 %v1632
      %v1695 = vpop.f32.mrb[0].mxu0
      %v1696 = vadd.f32 0.0, %v1695
      %v1697 = vpop.f32.mrb[0].mxu0
      %v1698 = vpop.f32.mrb[0].mxu0
      %v1699 = vadd.f32 0.0, %v1698
      %v1700 = vpop.f32.mrb[0].mxu0
      %1701 = vdwg.mxu0
      %v1702 = vadd.f32 %v1472, %v1672
      %v1703 = vadd.f32 %v1473, %v1675
      %v1704 = vadd.f32 %v1474, %v1680
      %v1705 = vadd.f32 %v1475, %v1683
      %v1706 = vadd.f32 %v1476, %v1688
      %v1707 = vadd.f32 %v1477, %v1691
      %v1708 = vadd.f32 %v1478, %v1696
      %v1709 = vadd.f32 %v1479, %v1699
      %v1710 = vld [vmem:[%s1361] sm:$0xe]
      %v1711 = vld [vmem:[%s1361 + $0x8] sm:$0xe]
      %v1712 = vld [vmem:[%s1361 + $0x10] sm:$0xe]
      %v1713 = vld [vmem:[%s1361 + $0x18] sm:$0xe]
      %v1714 = vld [vmem:[%s1361 + $0x20] sm:$0xe]
      %v1715 = vld [vmem:[%s1361 + $0x28] sm:$0xe]
      %v1716 = vld [vmem:[%s1361 + $0x30] sm:$0xe]
      %v1717 = vld [vmem:[%s1361 + $0x38] sm:$0xe]
      %v1734 = vrot.slane %v1710, 5
      %v1735 = vrot.slane %v1734, 4
      %v1736 = vrot.slane %v1481, 5
      %v1737 = vsel %vm719, %v1735, %v1736
      %v1738 = vrot.slane %v1711, 5
      %v1739 = vrot.slane %v1738, 4
      %v1740 = vrot.slane %v1483, 5
      %v1741 = vsel %vm719, %v1739, %v1740
      %v1742 = vrot.slane %v1712, 5
      %v1743 = vrot.slane %v1742, 4
      %v1744 = vrot.slane %v1485, 5
      %v1745 = vsel %vm719, %v1743, %v1744
      %v1746 = vrot.slane %v1713, 5
      %v1747 = vrot.slane %v1746, 4
      %v1748 = vrot.slane %v1487, 5
      %v1749 = vsel %vm719, %v1747, %v1748
      %v1750 = vrot.slane %v1714, 5
      %v1751 = vrot.slane %v1750, 4
      %v1752 = vrot.slane %v1489, 5
      %v1753 = vsel %vm719, %v1751, %v1752
      %v1754 = vrot.slane %v1715, 5
      %v1755 = vrot.slane %v1754, 4
      %v1756 = vrot.slane %v1491, 5
      %v1757 = vsel %vm719, %v1755, %v1756
      %v1758 = vrot.slane %v1716, 5
      %v1759 = vrot.slane %v1758, 4
      %v1760 = vrot.slane %v1493, 5
      %v1761 = vsel %vm719, %v1759, %v1760
      %v1762 = vrot.slane %v1717, 5
      %v1763 = vrot.slane %v1762, 4
      %v1764 = vrot.slane %v1495, 5
      %v1765 = vsel %vm719, %v1763, %v1764
      %s1766 = scalar_lea.vmem %s3, 32
      %v1767 = vld [vmem:[%s1766] sm:$0xf]
      %v1768 = vunpack.c.l.b16 %v1737
      %v1769 = vunpack.c.l.b16 %v1741
      %v1770 = vunpack.c.l.b16 %v1745
      %v1771 = vunpack.c.l.b16 %v1749
      %v1772 = vunpack.c.l.b16 %v1753
      %v1773 = vunpack.c.l.b16 %v1757
      %v1774 = vunpack.c.l.b16 %v1761
      %v1775 = vunpack.c.l.b16 %v1765
      %v1776 = vpack.c.b16 %v1769, %v1768
      %v1777 = vpack.c.b16 %v1771, %v1770
      %v1778 = vpack.c.b16 %v1773, %v1772
      %v1779 = vpack.c.b16 %v1775, %v1774
      %v1781 = vsel %vm511, %v1776, 0
      %v1784 = vsel %vm511, %v1777, 0
      %v1787 = vsel %vm511, %v1778, 0
      %v1790 = vsel %vm511, %v1779, 0
      %v1793 = vsel %vm524, %v1767, 0
      %1795 = vmatprep.subr.bf16.mxu0 0
      %1796 = vmatpush1.bf16.msra.mxu0 %v1793
      %1797 = vmatprep.subr.bf16.mxu0 0
      %1798 = vmatpush1.bf16.msra.mxu0 0
      %1799 = vmatprep.subr.bf16.mxu0 0
      %1800 = vmatpush1.bf16.msra.mxu0 0
      %1801 = vmatprep.subr.bf16.mxu0 0
      %1802 = vmatpush1.bf16.msra.mxu0 0
      %1803 = vmatprep.subr.bf16.mxu0 0
      %1804 = vmatpush1.bf16.msra.mxu0 0
      %1805 = vmatprep.subr.bf16.mxu0 0
      %1806 = vmatpush1.bf16.msra.mxu0 0
      %1807 = vmatprep.subr.bf16.mxu0 0
      %1808 = vmatpush1.bf16.msra.mxu0 0
      %1809 = vmatprep.subr.bf16.mxu0 0
      %1810 = vmatpush1.bf16.msra.mxu0 0
      %1811 = vmatprep.subr.bf16.mxu0 0
      %1812 = vmatpush1.bf16.msra.mxu0 0
      %1813 = vmatprep.subr.bf16.mxu0 0
      %1814 = vmatpush1.bf16.msra.mxu0 0
      %1815 = vmatprep.subr.bf16.mxu0 0
      %1816 = vmatpush1.bf16.msra.mxu0 0
      %1817 = vmatprep.subr.bf16.mxu0 0
      %1818 = vmatpush1.bf16.msra.mxu0 0
      %1819 = vmatprep.subr.bf16.mxu0 0
      %1820 = vmatpush1.bf16.msra.mxu0 0
      %1821 = vmatprep.subr.bf16.mxu0 0
      %1822 = vmatpush1.bf16.msra.mxu0 0
      %1823 = vmatprep.subr.bf16.mxu0 0
      %1824 = vmatpush1.bf16.msra.mxu0 0
      %1825 = vmatprep.subr.bf16.mxu0 0
      %1826 = vmatpush1.bf16.msra.mxu0 0
      %1827 = vmatprep.mubr.bf16.mxu0 0
      %1828 = vmatmul.mubr.bf16.gmra.mrb[0].mxu0 %v1781
      %v1829 = vpop.f32.mrb[0].mxu0
      %v1830 = vadd.f32 0.0, %v1829
      %v1831 = vpop.f32.mrb[0].mxu0
      %v1832 = vpop.f32.mrb[0].mxu0
      %v1833 = vadd.f32 0.0, %v1832
      %v1834 = vpop.f32.mrb[0].mxu0
      %1835 = vmatprep.mubr.bf16.mxu0 0
      %1836 = vmatmul.mubr.bf16.gmra.mrb[0].mxu0 %v1784
      %v1837 = vpop.f32.mrb[0].mxu0
      %v1838 = vadd.f32 0.0, %v1837
      %v1839 = vpop.f32.mrb[0].mxu0
      %v1840 = vpop.f32.mrb[0].mxu0
      %v1841 = vadd.f32 0.0, %v1840
      %v1842 = vpop.f32.mrb[0].mxu0
      %1843 = vmatprep.mubr.bf16.mxu0 0
      %1844 = vmatmul.mubr.bf16.gmra.mrb[0].mxu0 %v1787
      %v1845 = vpop.f32.mrb[0].mxu0
      %v1846 = vadd.f32 0.0, %v1845
      %v1847 = vpop.f32.mrb[0].mxu0
      %v1848 = vpop.f32.mrb[0].mxu0
      %v1849 = vadd.f32 0.0, %v1848
      %v1850 = vpop.f32.mrb[0].mxu0
      %1851 = vmatprep.mubr.bf16.mxu0 0
      %1852 = vmatmul.mubr.bf16.gmra.mrb[0].mxu0 %v1790
      %v1853 = vpop.f32.mrb[0].mxu0
      %v1854 = vadd.f32 0.0, %v1853
      %v1855 = vpop.f32.mrb[0].mxu0
      %v1856 = vpop.f32.mrb[0].mxu0
      %v1857 = vadd.f32 0.0, %v1856
      %v1858 = vpop.f32.mrb[0].mxu0
      %1859 = vdwg.mxu0
      %v1860 = vadd.f32 %v1702, %v1830
      %v1861 = vadd.f32 %v1703, %v1833
      %v1862 = vadd.f32 %v1704, %v1838
      %v1863 = vadd.f32 %v1705, %v1841
      %v1864 = vadd.f32 %v1706, %v1846
      %v1865 = vadd.f32 %v1707, %v1849
      %v1866 = vadd.f32 %v1708, %v1854
      %v1867 = vadd.f32 %v1709, %v1857
      %v1868 = vld [vmem:[%s334] sm:$0xf]
      %v1869 = vld [vmem:[%s334 + $0x8] sm:$0xf]
      %v1870 = vld [vmem:[%s334 + $0x10] sm:$0xf]
      %v1871 = vld [vmem:[%s334 + $0x18] sm:$0xf]
      %v1872 = vld [vmem:[%s334 + $0x20] sm:$0xf]
      %v1873 = vld [vmem:[%s334 + $0x28] sm:$0xf]
      %v1874 = vld [vmem:[%s334 + $0x30] sm:$0xf]
      %v1875 = vld [vmem:[%s334 + $0x38] sm:$0xf]
      %s1876 = scalar_lea.vmem %s3, 36
      %v1877 = vld [vmem:[%s1876] sm:$0xf]
      %v1886 = vunpack.c.l.b16 %v1868
      %v1887 = vunpack.c.l.b16 %v1869
      %v1888 = vunpack.c.l.b16 %v1870
      %v1889 = vunpack.c.l.b16 %v1871
      %v1890 = vunpack.c.l.b16 %v1872
      %v1891 = vunpack.c.l.b16 %v1873
      %v1892 = vunpack.c.l.b16 %v1874
      %v1893 = vunpack.c.l.b16 %v1875
      %v1894 = vpack.c.b16 %v1887, %v1886
      %v1895 = vpack.c.b16 %v1889, %v1888
      %v1896 = vpack.c.b16 %v1891, %v1890
      %v1897 = vpack.c.b16 %v1893, %v1892
      %v1899 = vsel %vm511, %v1894, 0
      %v1902 = vsel %vm511, %v1895, 0
      %v1905 = vsel %vm511, %v1896, 0
      %v1908 = vsel %vm511, %v1897, 0
      %v1911 = vsel %vm524, %v1877, 0
      %1913 = vmatprep.subr.bf16.mxu0 0
      %1914 = vmatpush1.bf16.msra.mxu0 %v1911
      %1915 = vmatprep.subr.bf16.mxu0 0
      %1916 = vmatpush1.bf16.msra.mxu0 0
      %1917 = vmatprep.subr.bf16.mxu0 0
      %1918 = vmatpush1.bf16.msra.mxu0 0
      %1919 = vmatprep.subr.bf16.mxu0 0
      %1920 = vmatpush1.bf16.msra.mxu0 0
      %1921 = vmatprep.subr.bf16.mxu0 0
      %1922 = vmatpush1.bf16.msra.mxu0 0
      %1923 = vmatprep.subr.bf16.mxu0 0
      %1924 = vmatpush1.bf16.msra.mxu0 0
      %1925 = vmatprep.subr.bf16.mxu0 0
      %1926 = vmatpush1.bf16.msra.mxu0 0
      %1927 = vmatprep.subr.bf16.mxu0 0
      %1928 = vmatpush1.bf16.msra.mxu0 0
      %1929 = vmatprep.subr.bf16.mxu0 0
      %1930 = vmatpush1.bf16.msra.mxu0 0
      %1931 = vmatprep.subr.bf16.mxu0 0
      %1932 = vmatpush1.bf16.msra.mxu0 0
      %1933 = vmatprep.subr.bf16.mxu0 0
      %1934 = vmatpush1.bf16.msra.mxu0 0
      %1935 = vmatprep.subr.bf16.mxu0 0
      %1936 = vmatpush1.bf16.msra.mxu0 0
      %1937 = vmatprep.subr.bf16.mxu0 0
      %1938 = vmatpush1.bf16.msra.mxu0 0
      %1939 = vmatprep.subr.bf16.mxu0 0
      %1940 = vmatpush1.bf16.msra.mxu0 0
      %1941 = vmatprep.subr.bf16.mxu0 0
      %1942 = vmatpush1.bf16.msra.mxu0 0
      %1943 = vmatprep.subr.bf16.mxu0 0
      %1944 = vmatpush1.bf16.msra.mxu0 0
      %1945 = vmatprep.mubr.bf16.mxu0 0
      %1946 = vmatmul.mubr.bf16.gmra.mrb[0].mxu0 %v1899
      %v1947 = vpop.f32.mrb[0].mxu0
      %v1948 = vadd.f32 0.0, %v1947
      %v1949 = vpop.f32.mrb[0].mxu0
      %v1950 = vpop.f32.mrb[0].mxu0
      %v1951 = vadd.f32 0.0, %v1950
      %v1952 = vpop.f32.mrb[0].mxu0
      %1953 = vmatprep.mubr.bf16.mxu0 0
      %1954 = vmatmul.mubr.bf16.gmra.mrb[0].mxu0 %v1902
      %v1955 = vpop.f32.mrb[0].mxu0
      %v1956 = vadd.f32 0.0, %v1955
      %v1957 = vpop.f32.mrb[0].mxu0
      %v1958 = vpop.f32.mrb[0].mxu0
      %v1959 = vadd.f32 0.0, %v1958
      %v1960 = vpop.f32.mrb[0].mxu0
      %1961 = vmatprep.mubr.bf16.mxu0 0
      %1962 = vmatmul.mubr.bf16.gmra.mrb[0].mxu0 %v1905
      %v1963 = vpop.f32.mrb[0].mxu0
      %v1964 = vadd.f32 0.0, %v1963
      %v1965 = vpop.f32.mrb[0].mxu0
      %v1966 = vpop.f32.mrb[0].mxu0
      %v1967 = vadd.f32 0.0, %v1966
      %v1968 = vpop.f32.mrb[0].mxu0
      %1969 = vmatprep.mubr.bf16.mxu0 0
      %1970 = vmatmul.mubr.bf16.gmra.mrb[0].mxu0 %v1908
      %v1971 = vpop.f32.mrb[0].mxu0
      %v1972 = vadd.f32 0.0, %v1971
      %v1973 = vpop.f32.mrb[0].mxu0
      %v1974 = vpop.f32.mrb[0].mxu0
      %v1975 = vadd.f32 0.0, %v1974
      %v1976 = vpop.f32.mrb[0].mxu0
      %1977 = vdwg.mxu0
      %v1978 = vadd.f32 %v1860, %v1948
      %v1979 = vadd.f32 %v1861, %v1951
      %v1980 = vadd.f32 %v1862, %v1956
      %v1981 = vadd.f32 %v1863, %v1959
      %v1982 = vadd.f32 %v1864, %v1964
      %v1983 = vadd.f32 %v1865, %v1967
      %v1984 = vadd.f32 %v1866, %v1972
      %v1985 = vadd.f32 %v1867, %v1975
      %v1986 = vld [vmem:[%s334] sm:$0xf]
      %v1987 = vld [vmem:[%s334 + $0x4] sm:$0x1]
      %v1988 = vld [vmem:[%s334 + $0x8] sm:$0xf]
      %v1989 = vld [vmem:[%s334 + $0xc] sm:$0x1]
      %v1990 = vld [vmem:[%s334 + $0x10] sm:$0xf]
      %v1991 = vld [vmem:[%s334 + $0x14] sm:$0x1]
      %v1992 = vld [vmem:[%s334 + $0x18] sm:$0xf]
      %v1993 = vld [vmem:[%s334 + $0x1c] sm:$0x1]
      %v1994 = vld [vmem:[%s334 + $0x20] sm:$0xf]
      %v1995 = vld [vmem:[%s334 + $0x24] sm:$0x1]
      %v1996 = vld [vmem:[%s334 + $0x28] sm:$0xf]
      %v1997 = vld [vmem:[%s334 + $0x2c] sm:$0x1]
      %v1998 = vld [vmem:[%s334 + $0x30] sm:$0xf]
      %v1999 = vld [vmem:[%s334 + $0x34] sm:$0x1]
      %v2000 = vld [vmem:[%s334 + $0x38] sm:$0xf]
      %v2001 = vld [vmem:[%s334 + $0x3c] sm:$0x1]
      %v2003 = vshrl.u32 %v1986, 16
      %v2005 = vrot.slane %v2003, 4
      %v2006 = vshll.u32 %v1986, 16
      %v2008 = vrot.slane %v2006, 5
      %v2009 = vor.u32 %v2005, %v2008
      %v2010 = vrot.slane %v2009, 4
      %v2012 = vshll.u32 %v1987, 16
      %v2014 = vrot.slane %v2012, 5
      %v2015 = vsel %vm384, %v2010, %v2014
      %v2017 = vshrl.u32 %v1988, 16
      %v2019 = vrot.slane %v2017, 4
      %v2020 = vshll.u32 %v1988, 16
      %v2022 = vrot.slane %v2020, 5
      %v2023 = vor.u32 %v2019, %v2022
      %v2024 = vrot.slane %v2023, 4
      %v2026 = vshll.u32 %v1989, 16
      %v2028 = vrot.slane %v2026, 5
      %v2029 = vsel %vm384, %v2024, %v2028
      %v2031 = vshrl.u32 %v1990, 16
      %v2033 = vrot.slane %v2031, 4
      %v2034 = vshll.u32 %v1990, 16
      %v2036 = vrot.slane %v2034, 5
      %v2037 = vor.u32 %v2033, %v2036
      %v2038 = vrot.slane %v2037, 4
      %v2040 = vshll.u32 %v1991, 16
      %v2042 = vrot.slane %v2040, 5
      %v2043 = vsel %vm384, %v2038, %v2042
      %v2045 = vshrl.u32 %v1992, 16
      %v2047 = vrot.slane %v2045, 4
      %v2048 = vshll.u32 %v1992, 16
      %v2050 = vrot.slane %v2048, 5
      %v2051 = vor.u32 %v2047, %v2050
      %v2052 = vrot.slane %v2051, 4
      %v2054 = vshll.u32 %v1993, 16
      %v2056 = vrot.slane %v2054, 5
      %v2057 = vsel %vm384, %v2052, %v2056
      %v2059 = vshrl.u32 %v1994, 16
      %v2061 = vrot.slane %v2059, 4
      %v2062 = vshll.u32 %v1994, 16
      %v2064 = vrot.slane %v2062, 5
      %v2065 = vor.u32 %v2061, %v2064
      %v2066 = vrot.slane %v2065, 4
      %v2068 = vshll.u32 %v1995, 16
      %v2070 = vrot.slane %v2068, 5
      %v2071 = vsel %vm384, %v2066, %v2070
      %v2073 = vshrl.u32 %v1996, 16
      %v2075 = vrot.slane %v2073, 4
      %v2076 = vshll.u32 %v1996, 16
      %v2078 = vrot.slane %v2076, 5
      %v2079 = vor.u32 %v2075, %v2078
      %v2080 = vrot.slane %v2079, 4
      %v2082 = vshll.u32 %v1997, 16
      %v2084 = vrot.slane %v2082, 5
      %v2085 = vsel %vm384, %v2080, %v2084
      %v2087 = vshrl.u32 %v1998, 16
      %v2089 = vrot.slane %v2087, 4
      %v2090 = vshll.u32 %v1998, 16
      %v2092 = vrot.slane %v2090, 5
      %v2093 = vor.u32 %v2089, %v2092
      %v2094 = vrot.slane %v2093, 4
      %v2096 = vshll.u32 %v1999, 16
      %v2098 = vrot.slane %v2096, 5
      %v2099 = vsel %vm384, %v2094, %v2098
      %v2101 = vshrl.u32 %v2000, 16
      %v2103 = vrot.slane %v2101, 4
      %v2104 = vshll.u32 %v2000, 16
      %v2106 = vrot.slane %v2104, 5
      %v2107 = vor.u32 %v2103, %v2106
      %v2108 = vrot.slane %v2107, 4
      %v2110 = vshll.u32 %v2001, 16
      %v2112 = vrot.slane %v2110, 5
      %v2113 = vsel %vm384, %v2108, %v2112
      %s2114 = scalar_lea.vmem %s3, 40
      %v2115 = vld [vmem:[%s2114] sm:$0xf]
      %v2116 = vunpack.c.l.b16 %v2015
      %v2117 = vunpack.c.l.b16 %v2029
      %v2118 = vunpack.c.l.b16 %v2043
      %v2119 = vunpack.c.l.b16 %v2057
      %v2120 = vunpack.c.l.b16 %v2071
      %v2121 = vunpack.c.l.b16 %v2085
      %v2122 = vunpack.c.l.b16 %v2099
      %v2123 = vunpack.c.l.b16 %v2113
      %v2124 = vpack.c.b16 %v2117, %v2116
      %v2125 = vpack.c.b16 %v2119, %v2118
      %v2126 = vpack.c.b16 %v2121, %v2120
      %v2127 = vpack.c.b16 %v2123, %v2122
      %v2129 = vsel %vm511, %v2124, 0
      %v2132 = vsel %vm511, %v2125, 0
      %v2135 = vsel %vm511, %v2126, 0
      %v2138 = vsel %vm511, %v2127, 0
      %v2141 = vsel %vm524, %v2115, 0
      %2143 = vmatprep.subr.bf16.mxu0 0
      %2144 = vmatpush1.bf16.msra.mxu0 %v2141
      %2145 = vmatprep.subr.bf16.mxu0 0
      %2146 = vmatpush1.bf16.msra.mxu0 0
      %2147 = vmatprep.subr.bf16.mxu0 0
      %2148 = vmatpush1.bf16.msra.mxu0 0
      %2149 = vmatprep.subr.bf16.mxu0 0
      %2150 = vmatpush1.bf16.msra.mxu0 0
      %2151 = vmatprep.subr.bf16.mxu0 0
      %2152 = vmatpush1.bf16.msra.mxu0 0
      %2153 = vmatprep.subr.bf16.mxu0 0
      %2154 = vmatpush1.bf16.msra.mxu0 0
      %2155 = vmatprep.subr.bf16.mxu0 0
      %2156 = vmatpush1.bf16.msra.mxu0 0
      %2157 = vmatprep.subr.bf16.mxu0 0
      %2158 = vmatpush1.bf16.msra.mxu0 0
      %2159 = vmatprep.subr.bf16.mxu0 0
      %2160 = vmatpush1.bf16.msra.mxu0 0
      %2161 = vmatprep.subr.bf16.mxu0 0
      %2162 = vmatpush1.bf16.msra.mxu0 0
      %2163 = vmatprep.subr.bf16.mxu0 0
      %2164 = vmatpush1.bf16.msra.mxu0 0
      %2165 = vmatprep.subr.bf16.mxu0 0
      %2166 = vmatpush1.bf16.msra.mxu0 0
      %2167 = vmatprep.subr.bf16.mxu0 0
      %2168 = vmatpush1.bf16.msra.mxu0 0
      %2169 = vmatprep.subr.bf16.mxu0 0
      %2170 = vmatpush1.bf16.msra.mxu0 0
      %2171 = vmatprep.subr.bf16.mxu0 0
      %2172 = vmatpush1.bf16.msra.mxu0 0
      %2173 = vmatprep.subr.bf16.mxu0 0
      %2174 = vmatpush1.bf16.msra.mxu0 0
      %2175 = vmatprep.mubr.bf16.mxu0 0
      %2176 = vmatmul.mubr.bf16.gmra.mrb[0].mxu0 %v2129
      %v2177 = vpop.f32.mrb[0].mxu0
      %v2178 = vadd.f32 0.0, %v2177
      %v2179 = vpop.f32.mrb[0].mxu0
      %v2180 = vpop.f32.mrb[0].mxu0
      %v2181 = vadd.f32 0.0, %v2180
      %v2182 = vpop.f32.mrb[0].mxu0
      %2183 = vmatprep.mubr.bf16.mxu0 0
      %2184 = vmatmul.mubr.bf16.gmra.mrb[0].mxu0 %v2132
      %v2185 = vpop.f32.mrb[0].mxu0
      %v2186 = vadd.f32 0.0, %v2185
      %v2187 = vpop.f32.mrb[0].mxu0
      %v2188 = vpop.f32.mrb[0].mxu0
      %v2189 = vadd.f32 0.0, %v2188
      %v2190 = vpop.f32.mrb[0].mxu0
      %2191 = vmatprep.mubr.bf16.mxu0 0
      %2192 = vmatmul.mubr.bf16.gmra.mrb[0].mxu0 %v2135
      %v2193 = vpop.f32.mrb[0].mxu0
      %v2194 = vadd.f32 0.0, %v2193
      %v2195 = vpop.f32.mrb[0].mxu0
      %v2196 = vpop.f32.mrb[0].mxu0
      %v2197 = vadd.f32 0.0, %v2196
      %v2198 = vpop.f32.mrb[0].mxu0
      %2199 = vmatprep.mubr.bf16.mxu0 0
      %2200 = vmatmul.mubr.bf16.gmra.mrb[0].mxu0 %v2138
      %v2201 = vpop.f32.mrb[0].mxu0
      %v2202 = vadd.f32 0.0, %v2201
      %v2203 = vpop.f32.mrb[0].mxu0
      %v2204 = vpop.f32.mrb[0].mxu0
      %v2205 = vadd.f32 0.0, %v2204
      %v2206 = vpop.f32.mrb[0].mxu0
      %2207 = vdwg.mxu0
      %v2208 = vadd.f32 %v1978, %v2178
      %v2209 = vadd.f32 %v1979, %v2181
      %v2210 = vadd.f32 %v1980, %v2186
      %v2211 = vadd.f32 %v1981, %v2189
      %v2212 = vadd.f32 %v1982, %v2194
      %v2213 = vadd.f32 %v1983, %v2197
      %v2214 = vadd.f32 %v1984, %v2202
      %v2215 = vadd.f32 %v1985, %v2205
      %v2216 = vld [vmem:[%s334] sm:$0xe]
      %v2217 = vld [vmem:[%s334 + $0x8] sm:$0xe]
      %v2218 = vld [vmem:[%s334 + $0x10] sm:$0xe]
      %v2219 = vld [vmem:[%s334 + $0x18] sm:$0xe]
      %v2220 = vld [vmem:[%s334 + $0x20] sm:$0xe]
      %v2221 = vld [vmem:[%s334 + $0x28] sm:$0xe]
      %v2222 = vld [vmem:[%s334 + $0x30] sm:$0xe]
      %v2223 = vld [vmem:[%s334 + $0x38] sm:$0xe]
      %v2240 = vrot.slane %v2216, 5
      %v2241 = vrot.slane %v2240, 4
      %v2242 = vrot.slane %v1987, 5
      %v2243 = vsel %vm719, %v2241, %v2242
      %v2244 = vrot.slane %v2217, 5
      %v2245 = vrot.slane %v2244, 4
      %v2246 = vrot.slane %v1989, 5
      %v2247 = vsel %vm719, %v2245, %v2246
      %v2248 = vrot.slane %v2218, 5
      %v2249 = vrot.slane %v2248, 4
      %v2250 = vrot.slane %v1991, 5
      %v2251 = vsel %vm719, %v2249, %v2250
      %v2252 = vrot.slane %v2219, 5
      %v2253 = vrot.slane %v2252, 4
      %v2254 = vrot.slane %v1993, 5
      %v2255 = vsel %vm719, %v2253, %v2254
      %v2256 = vrot.slane %v2220, 5
      %v2257 = vrot.slane %v2256, 4
      %v2258 = vrot.slane %v1995, 5
      %v2259 = vsel %vm719, %v2257, %v2258
      %v2260 = vrot.slane %v2221, 5
      %v2261 = vrot.slane %v2260, 4
      %v2262 = vrot.slane %v1997, 5
      %v2263 = vsel %vm719, %v2261, %v2262
      %v2264 = vrot.slane %v2222, 5
      %v2265 = vrot.slane %v2264, 4
      %v2266 = vrot.slane %v1999, 5
      %v2267 = vsel %vm719, %v2265, %v2266
      %v2268 = vrot.slane %v2223, 5
      %v2269 = vrot.slane %v2268, 4
      %v2270 = vrot.slane %v2001, 5
      %v2271 = vsel %vm719, %v2269, %v2270
      %s2272 = scalar_lea.vmem %s3, 44
      %v2273 = vld [vmem:[%s2272] sm:$0xf]
      %v2274 = vunpack.c.l.b16 %v2243
      %v2275 = vunpack.c.l.b16 %v2247
      %v2276 = vunpack.c.l.b16 %v2251
      %v2277 = vunpack.c.l.b16 %v2255
      %v2278 = vunpack.c.l.b16 %v2259
      %v2279 = vunpack.c.l.b16 %v2263
      %v2280 = vunpack.c.l.b16 %v2267
      %v2281 = vunpack.c.l.b16 %v2271
      %v2282 = vpack.c.b16 %v2275, %v2274
      %v2283 = vpack.c.b16 %v2277, %v2276
      %v2284 = vpack.c.b16 %v2279, %v2278
      %v2285 = vpack.c.b16 %v2281, %v2280
      %v2287 = vsel %vm511, %v2282, 0
      %v2290 = vsel %vm511, %v2283, 0
      %v2293 = vsel %vm511, %v2284, 0
      %v2296 = vsel %vm511, %v2285, 0
      %v2299 = vsel %vm524, %v2273, 0
      %2301 = vmatprep.subr.bf16.mxu0 0
      %2302 = vmatpush1.bf16.msra.mxu0 %v2299
      %2303 = vmatprep.subr.bf16.mxu0 0
      %2304 = vmatpush1.bf16.msra.mxu0 0
      %2305 = vmatprep.subr.bf16.mxu0 0
      %2306 = vmatpush1.bf16.msra.mxu0 0
      %2307 = vmatprep.subr.bf16.mxu0 0
      %2308 = vmatpush1.bf16.msra.mxu0 0
      %2309 = vmatprep.subr.bf16.mxu0 0
      %2310 = vmatpush1.bf16.msra.mxu0 0
      %2311 = vmatprep.subr.bf16.mxu0 0
      %2312 = vmatpush1.bf16.msra.mxu0 0
      %2313 = vmatprep.subr.bf16.mxu0 0
      %2314 = vmatpush1.bf16.msra.mxu0 0
      %2315 = vmatprep.subr.bf16.mxu0 0
      %2316 = vmatpush1.bf16.msra.mxu0 0
      %2317 = vmatprep.subr.bf16.mxu0 0
      %2318 = vmatpush1.bf16.msra.mxu0 0
      %2319 = vmatprep.subr.bf16.mxu0 0
      %2320 = vmatpush1.bf16.msra.mxu0 0
      %2321 = vmatprep.subr.bf16.mxu0 0
      %2322 = vmatpush1.bf16.msra.mxu0 0
      %2323 = vmatprep.subr.bf16.mxu0 0
      %2324 = vmatpush1.bf16.msra.mxu0 0
      %2325 = vmatprep.subr.bf16.mxu0 0
      %2326 = vmatpush1.bf16.msra.mxu0 0
      %2327 = vmatprep.subr.bf16.mxu0 0
      %2328 = vmatpush1.bf16.msra.mxu0 0
      %2329 = vmatprep.subr.bf16.mxu0 0
      %2330 = vmatpush1.bf16.msra.mxu0 0
      %2331 = vmatprep.subr.bf16.mxu0 0
      %2332 = vmatpush1.bf16.msra.mxu0 0
      %2333 = vmatprep.mubr.bf16.mxu0 0
      %2334 = vmatmul.mubr.bf16.gmra.mrb[0].mxu0 %v2287
      %v2335 = vpop.f32.mrb[0].mxu0
      %v2336 = vadd.f32 0.0, %v2335
      %v2337 = vpop.f32.mrb[0].mxu0
      %v2338 = vpop.f32.mrb[0].mxu0
      %v2339 = vadd.f32 0.0, %v2338
      %v2340 = vpop.f32.mrb[0].mxu0
      %2341 = vmatprep.mubr.bf16.mxu0 0
      %2342 = vmatmul.mubr.bf16.gmra.mrb[0].mxu0 %v2290
      %v2343 = vpop.f32.mrb[0].mxu0
      %v2344 = vadd.f32 0.0, %v2343
      %v2345 = vpop.f32.mrb[0].mxu0
      %v2346 = vpop.f32.mrb[0].mxu0
      %v2347 = vadd.f32 0.0, %v2346
      %v2348 = vpop.f32.mrb[0].mxu0
      %2349 = vmatprep.mubr.bf16.mxu0 0
      %2350 = vmatmul.mubr.bf16.gmra.mrb[0].mxu0 %v2293
      %v2351 = vpop.f32.mrb[0].mxu0
      %v2352 = vadd.f32 0.0, %v2351
      %v2353 = vpop.f32.mrb[0].mxu0
      %v2354 = vpop.f32.mrb[0].mxu0
      %v2355 = vadd.f32 0.0, %v2354
      %v2356 = vpop.f32.mrb[0].mxu0
      %2357 = vmatprep.mubr.bf16.mxu0 0
      %2358 = vmatmul.mubr.bf16.gmra.mrb[0].mxu0 %v2296
      %v2359 = vpop.f32.mrb[0].mxu0
      %v2360 = vadd.f32 0.0, %v2359
      %v2361 = vpop.f32.mrb[0].mxu0
      %v2362 = vpop.f32.mrb[0].mxu0
      %v2363 = vadd.f32 0.0, %v2362
      %v2364 = vpop.f32.mrb[0].mxu0
      %2365 = vdwg.mxu0
      %v2366 = vadd.f32 %v2208, %v2336
      %v2367 = vadd.f32 %v2209, %v2339
      %v2368 = vadd.f32 %v2210, %v2344
      %v2369 = vadd.f32 %v2211, %v2347
      %v2370 = vadd.f32 %v2212, %v2352
      %v2371 = vadd.f32 %v2213, %v2355
      %v2372 = vadd.f32 %v2214, %v2360
      %v2373 = vadd.f32 %v2215, %v2363
      %s2374 = scalar_lea.vmem %s334, 8
      %v2375 = vld [vmem:[%s2374] sm:$0xf]
      %v2376 = vld [vmem:[%s2374 + $0x8] sm:$0xf]
      %v2377 = vld [vmem:[%s2374 + $0x10] sm:$0xf]
      %v2378 = vld [vmem:[%s2374 + $0x18] sm:$0xf]
      %v2379 = vld [vmem:[%s2374 + $0x20] sm:$0xf]
      %v2380 = vld [vmem:[%s2374 + $0x28] sm:$0xf]
      %v2381 = vld [vmem:[%s2374 + $0x30] sm:$0xf]
      %v2382 = vld [vmem:[%s2374 + $0x38] sm:$0xf]
      %s2383 = scalar_lea.vmem %s3, 48
      %v2384 = vld [vmem:[%s2383] sm:$0xf]
      %v2393 = vunpack.c.l.b16 %v2375
      %v2394 = vunpack.c.l.b16 %v2376
      %v2395 = vunpack.c.l.b16 %v2377
      %v2396 = vunpack.c.l.b16 %v2378
      %v2397 = vunpack.c.l.b16 %v2379
      %v2398 = vunpack.c.l.b16 %v2380
      %v2399 = vunpack.c.l.b16 %v2381
      %v2400 = vunpack.c.l.b16 %v2382
      %v2401 = vpack.c.b16 %v2394, %v2393
      %v2402 = vpack.c.b16 %v2396, %v2395
      %v2403 = vpack.c.b16 %v2398, %v2397
      %v2404 = vpack.c.b16 %v2400, %v2399
      %v2406 = vsel %vm511, %v2401, 0
      %v2409 = vsel %vm511, %v2402, 0
      %v2412 = vsel %vm511, %v2403, 0
      %v2415 = vsel %vm511, %v2404, 0
      %v2418 = vsel %vm524, %v2384, 0
      %2420 = vmatprep.subr.bf16.mxu0 0
      %2421 = vmatpush1.bf16.msra.mxu0 %v2418
      %2422 = vmatprep.subr.bf16.mxu0 0
      %2423 = vmatpush1.bf16.msra.mxu0 0
      %2424 = vmatprep.subr.bf16.mxu0 0
      %2425 = vmatpush1.bf16.msra.mxu0 0
      %2426 = vmatprep.subr.bf16.mxu0 0
      %2427 = vmatpush1.bf16.msra.mxu0 0
      %2428 = vmatprep.subr.bf16.mxu0 0
      %2429 = vmatpush1.bf16.msra.mxu0 0
      %2430 = vmatprep.subr.bf16.mxu0 0
      %2431 = vmatpush1.bf16.msra.mxu0 0
      %2432 = vmatprep.subr.bf16.mxu0 0
      %2433 = vmatpush1.bf16.msra.mxu0 0
      %2434 = vmatprep.subr.bf16.mxu0 0
      %2435 = vmatpush1.bf16.msra.mxu0 0
      %2436 = vmatprep.subr.bf16.mxu0 0
      %2437 = vmatpush1.bf16.msra.mxu0 0
      %2438 = vmatprep.subr.bf16.mxu0 0
      %2439 = vmatpush1.bf16.msra.mxu0 0
      %2440 = vmatprep.subr.bf16.mxu0 0
      %2441 = vmatpush1.bf16.msra.mxu0 0
      %2442 = vmatprep.subr.bf16.mxu0 0
      %2443 = vmatpush1.bf16.msra.mxu0 0
      %2444 = vmatprep.subr.bf16.mxu0 0
      %2445 = vmatpush1.bf16.msra.mxu0 0
      %2446 = vmatprep.subr.bf16.mxu0 0
      %2447 = vmatpush1.bf16.msra.mxu0 0
      %2448 = vmatprep.subr.bf16.mxu0 0
      %2449 = vmatpush1.bf16.msra.mxu0 0
      %2450 = vmatprep.subr.bf16.mxu0 0
      %2451 = vmatpush1.bf16.msra.mxu0 0
      %2452 = vmatprep.mubr.bf16.mxu0 0
      %2453 = vmatmul.mubr.bf16.gmra.mrb[0].mxu0 %v2406
      %v2454 = vpop.f32.mrb[0].mxu0
      %v2455 = vadd.f32 0.0, %v2454
      %v2456 = vpop.f32.mrb[0].mxu0
      %v2457 = vpop.f32.mrb[0].mxu0
      %v2458 = vadd.f32 0.0, %v2457
      %v2459 = vpop.f32.mrb[0].mxu0
      %2460 = vmatprep.mubr.bf16.mxu0 0
      %2461 = vmatmul.mubr.bf16.gmra.mrb[0].mxu0 %v2409
      %v2462 = vpop.f32.mrb[0].mxu0
      %v2463 = vadd.f32 0.0, %v2462
      %v2464 = vpop.f32.mrb[0].mxu0
      %v2465 = vpop.f32.mrb[0].mxu0
      %v2466 = vadd.f32 0.0, %v2465
      %v2467 = vpop.f32.mrb[0].mxu0
      %2468 = vmatprep.mubr.bf16.mxu0 0
      %2469 = vmatmul.mubr.bf16.gmra.mrb[0].mxu0 %v2412
      %v2470 = vpop.f32.mrb[0].mxu0
      %v2471 = vadd.f32 0.0, %v2470
      %v2472 = vpop.f32.mrb[0].mxu0
      %v2473 = vpop.f32.mrb[0].mxu0
      %v2474 = vadd.f32 0.0, %v2473
      %v2475 = vpop.f32.mrb[0].mxu0
      %2476 = vmatprep.mubr.bf16.mxu0 0
      %2477 = vmatmul.mubr.bf16.gmra.mrb[0].mxu0 %v2415
      %v2478 = vpop.f32.mrb[0].mxu0
      %v2479 = vadd.f32 0.0, %v2478
      %v2480 = vpop.f32.mrb[0].mxu0
      %v2481 = vpop.f32.mrb[0].mxu0
      %v2482 = vadd.f32 0.0, %v2481
      %v2483 = vpop.f32.mrb[0].mxu0
      %2484 = vdwg.mxu0
      %v2485 = vadd.f32 %v2366, %v2455
      %v2486 = vadd.f32 %v2367, %v2458
      %v2487 = vadd.f32 %v2368, %v2463
      %v2488 = vadd.f32 %v2369, %v2466
      %v2489 = vadd.f32 %v2370, %v2471
      %v2490 = vadd.f32 %v2371, %v2474
      %v2491 = vadd.f32 %v2372, %v2479
      %v2492 = vadd.f32 %v2373, %v2482
      %v2493 = vld [vmem:[%s2374] sm:$0xf]
      %v2494 = vld [vmem:[%s2374 + $0x4] sm:$0x1]
      %v2495 = vld [vmem:[%s2374 + $0x8] sm:$0xf]
      %v2496 = vld [vmem:[%s2374 + $0xc] sm:$0x1]
      %v2497 = vld [vmem:[%s2374 + $0x10] sm:$0xf]
      %v2498 = vld [vmem:[%s2374 + $0x14] sm:$0x1]
      %v2499 = vld [vmem:[%s2374 + $0x18] sm:$0xf]
      %v2500 = vld [vmem:[%s2374 + $0x1c] sm:$0x1]
      %v2501 = vld [vmem:[%s2374 + $0x20] sm:$0xf]
      %v2502 = vld [vmem:[%s2374 + $0x24] sm:$0x1]
      %v2503 = vld [vmem:[%s2374 + $0x28] sm:$0xf]
      %v2504 = vld [vmem:[%s2374 + $0x2c] sm:$0x1]
      %v2505 = vld [vmem:[%s2374 + $0x30] sm:$0xf]
      %v2506 = vld [vmem:[%s2374 + $0x34] sm:$0x1]
      %v2507 = vld [vmem:[%s2374 + $0x38] sm:$0xf]
      %v2508 = vld [vmem:[%s2374 + $0x3c] sm:$0x1]
      %v2510 = vshrl.u32 %v2493, 16
      %v2512 = vrot.slane %v2510, 4
      %v2513 = vshll.u32 %v2493, 16
      %v2515 = vrot.slane %v2513, 5
      %v2516 = vor.u32 %v2512, %v2515
      %v2517 = vrot.slane %v2516, 4
      %v2519 = vshll.u32 %v2494, 16
      %v2521 = vrot.slane %v2519, 5
      %v2522 = vsel %vm384, %v2517, %v2521
      %v2524 = vshrl.u32 %v2495, 16
      %v2526 = vrot.slane %v2524, 4
      %v2527 = vshll.u32 %v2495, 16
      %v2529 = vrot.slane %v2527, 5
      %v2530 = vor.u32 %v2526, %v2529
      %v2531 = vrot.slane %v2530, 4
      %v2533 = vshll.u32 %v2496, 16
      %v2535 = vrot.slane %v2533, 5
      %v2536 = vsel %vm384, %v2531, %v2535
      %v2538 = vshrl.u32 %v2497, 16
      %v2540 = vrot.slane %v2538, 4
      %v2541 = vshll.u32 %v2497, 16
      %v2543 = vrot.slane %v2541, 5
      %v2544 = vor.u32 %v2540, %v2543
      %v2545 = vrot.slane %v2544, 4
      %v2547 = vshll.u32 %v2498, 16
      %v2549 = vrot.slane %v2547, 5
      %v2550 = vsel %vm384, %v2545, %v2549
      %v2552 = vshrl.u32 %v2499, 16
      %v2554 = vrot.slane %v2552, 4
      %v2555 = vshll.u32 %v2499, 16
      %v2557 = vrot.slane %v2555, 5
      %v2558 = vor.u32 %v2554, %v2557
      %v2559 = vrot.slane %v2558, 4
      %v2561 = vshll.u32 %v2500, 16
      %v2563 = vrot.slane %v2561, 5
      %v2564 = vsel %vm384, %v2559, %v2563
      %v2566 = vshrl.u32 %v2501, 16
      %v2568 = vrot.slane %v2566, 4
      %v2569 = vshll.u32 %v2501, 16
      %v2571 = vrot.slane %v2569, 5
      %v2572 = vor.u32 %v2568, %v2571
      %v2573 = vrot.slane %v2572, 4
      %v2575 = vshll.u32 %v2502, 16
      %v2577 = vrot.slane %v2575, 5
      %v2578 = vsel %vm384, %v2573, %v2577
      %v2580 = vshrl.u32 %v2503, 16
      %v2582 = vrot.slane %v2580, 4
      %v2583 = vshll.u32 %v2503, 16
      %v2585 = vrot.slane %v2583, 5
      %v2586 = vor.u32 %v2582, %v2585
      %v2587 = vrot.slane %v2586, 4
      %v2589 = vshll.u32 %v2504, 16
      %v2591 = vrot.slane %v2589, 5
      %v2592 = vsel %vm384, %v2587, %v2591
      %v2594 = vshrl.u32 %v2505, 16
      %v2596 = vrot.slane %v2594, 4
      %v2597 = vshll.u32 %v2505, 16
      %v2599 = vrot.slane %v2597, 5
      %v2600 = vor.u32 %v2596, %v2599
      %v2601 = vrot.slane %v2600, 4
      %v2603 = vshll.u32 %v2506, 16
      %v2605 = vrot.slane %v2603, 5
      %v2606 = vsel %vm384, %v2601, %v2605
      %v2608 = vshrl.u32 %v2507, 16
      %v2610 = vrot.slane %v2608, 4
      %v2611 = vshll.u32 %v2507, 16
      %v2613 = vrot.slane %v2611, 5
      %v2614 = vor.u32 %v2610, %v2613
      %v2615 = vrot.slane %v2614, 4
      %v2617 = vshll.u32 %v2508, 16
      %v2619 = vrot.slane %v2617, 5
      %v2620 = vsel %vm384, %v2615, %v2619
      %s2621 = scalar_lea.vmem %s3, 52
      %v2622 = vld [vmem:[%s2621] sm:$0xf]
      %v2623 = vunpack.c.l.b16 %v2522
      %v2624 = vunpack.c.l.b16 %v2536
      %v2625 = vunpack.c.l.b16 %v2550
      %v2626 = vunpack.c.l.b16 %v2564
      %v2627 = vunpack.c.l.b16 %v2578
      %v2628 = vunpack.c.l.b16 %v2592
      %v2629 = vunpack.c.l.b16 %v2606
      %v2630 = vunpack.c.l.b16 %v2620
      %v2631 = vpack.c.b16 %v2624, %v2623
      %v2632 = vpack.c.b16 %v2626, %v2625
      %v2633 = vpack.c.b16 %v2628, %v2627
      %v2634 = vpack.c.b16 %v2630, %v2629
      %v2636 = vsel %vm511, %v2631, 0
      %v2639 = vsel %vm511, %v2632, 0
      %v2642 = vsel %vm511, %v2633, 0
      %v2645 = vsel %vm511, %v2634, 0
      %v2648 = vsel %vm524, %v2622, 0
      %2650 = vmatprep.subr.bf16.mxu0 0
      %2651 = vmatpush1.bf16.msra.mxu0 %v2648
      %2652 = vmatprep.subr.bf16.mxu0 0
      %2653 = vmatpush1.bf16.msra.mxu0 0
      %2654 = vmatprep.subr.bf16.mxu0 0
      %2655 = vmatpush1.bf16.msra.mxu0 0
      %2656 = vmatprep.subr.bf16.mxu0 0
      %2657 = vmatpush1.bf16.msra.mxu0 0
      %2658 = vmatprep.subr.bf16.mxu0 0
      %2659 = vmatpush1.bf16.msra.mxu0 0
      %2660 = vmatprep.subr.bf16.mxu0 0
      %2661 = vmatpush1.bf16.msra.mxu0 0
      %2662 = vmatprep.subr.bf16.mxu0 0
      %2663 = vmatpush1.bf16.msra.mxu0 0
      %2664 = vmatprep.subr.bf16.mxu0 0
      %2665 = vmatpush1.bf16.msra.mxu0 0
      %2666 = vmatprep.subr.bf16.mxu0 0
      %2667 = vmatpush1.bf16.msra.mxu0 0
      %2668 = vmatprep.subr.bf16.mxu0 0
      %2669 = vmatpush1.bf16.msra.mxu0 0
      %2670 = vmatprep.subr.bf16.mxu0 0
      %2671 = vmatpush1.bf16.msra.mxu0 0
      %2672 = vmatprep.subr.bf16.mxu0 0
      %2673 = vmatpush1.bf16.msra.mxu0 0
      %2674 = vmatprep.subr.bf16.mxu0 0
      %2675 = vmatpush1.bf16.msra.mxu0 0
      %2676 = vmatprep.subr.bf16.mxu0 0
      %2677 = vmatpush1.bf16.msra.mxu0 0
      %2678 = vmatprep.subr.bf16.mxu0 0
      %2679 = vmatpush1.bf16.msra.mxu0 0
      %2680 = vmatprep.subr.bf16.mxu0 0
      %2681 = vmatpush1.bf16.msra.mxu0 0
      %2682 = vmatprep.mubr.bf16.mxu0 0
      %2683 = vmatmul.mubr.bf16.gmra.mrb[0].mxu0 %v2636
      %v2684 = vpop.f32.mrb[0].mxu0
      %v2685 = vadd.f32 0.0, %v2684
      %v2686 = vpop.f32.mrb[0].mxu0
      %v2687 = vpop.f32.mrb[0].mxu0
      %v2688 = vadd.f32 0.0, %v2687
      %v2689 = vpop.f32.mrb[0].mxu0
      %2690 = vmatprep.mubr.bf16.mxu0 0
      %2691 = vmatmul.mubr.bf16.gmra.mrb[0].mxu0 %v2639
      %v2692 = vpop.f32.mrb[0].mxu0
      %v2693 = vadd.f32 0.0, %v2692
      %v2694 = vpop.f32.mrb[0].mxu0
      %v2695 = vpop.f32.mrb[0].mxu0
      %v2696 = vadd.f32 0.0, %v2695
      %v2697 = vpop.f32.mrb[0].mxu0
      %2698 = vmatprep.mubr.bf16.mxu0 0
      %2699 = vmatmul.mubr.bf16.gmra.mrb[0].mxu0 %v2642
      %v2700 = vpop.f32.mrb[0].mxu0
      %v2701 = vadd.f32 0.0, %v2700
      %v2702 = vpop.f32.mrb[0].mxu0
      %v2703 = vpop.f32.mrb[0].mxu0
      %v2704 = vadd.f32 0.0, %v2703
      %v2705 = vpop.f32.mrb[0].mxu0
      %2706 = vmatprep.mubr.bf16.mxu0 0
      %2707 = vmatmul.mubr.bf16.gmra.mrb[0].mxu0 %v2645
      %v2708 = vpop.f32.mrb[0].mxu0
      %v2709 = vadd.f32 0.0, %v2708
      %v2710 = vpop.f32.mrb[0].mxu0
      %v2711 = vpop.f32.mrb[0].mxu0
      %v2712 = vadd.f32 0.0, %v2711
      %v2713 = vpop.f32.mrb[0].mxu0
      %2714 = vdwg.mxu0
      %v2715 = vadd.f32 %v2485, %v2685
      %v2716 = vadd.f32 %v2486, %v2688
      %v2717 = vadd.f32 %v2487, %v2693
      %v2718 = vadd.f32 %v2488, %v2696
      %v2719 = vadd.f32 %v2489, %v2701
      %v2720 = vadd.f32 %v2490, %v2704
      %v2721 = vadd.f32 %v2491, %v2709
      %v2722 = vadd.f32 %v2492, %v2712
      %v2723 = vld [vmem:[%s2374] sm:$0xe]
      %v2724 = vld [vmem:[%s2374 + $0x8] sm:$0xe]
      %v2725 = vld [vmem:[%s2374 + $0x10] sm:$0xe]
      %v2726 = vld [vmem:[%s2374 + $0x18] sm:$0xe]
      %v2727 = vld [vmem:[%s2374 + $0x20] sm:$0xe]
      %v2728 = vld [vmem:[%s2374 + $0x28] sm:$0xe]
      %v2729 = vld [vmem:[%s2374 + $0x30] sm:$0xe]
      %v2730 = vld [vmem:[%s2374 + $0x38] sm:$0xe]
      %v2747 = vrot.slane %v2723, 5
      %v2748 = vrot.slane %v2747, 4
      %v2749 = vrot.slane %v2494, 5
      %v2750 = vsel %vm719, %v2748, %v2749
      %v2751 = vrot.slane %v2724, 5
      %v2752 = vrot.slane %v2751, 4
      %v2753 = vrot.slane %v2496, 5
      %v2754 = vsel %vm719, %v2752, %v2753
      %v2755 = vrot.slane %v2725, 5
      %v2756 = vrot.slane %v2755, 4
      %v2757 = vrot.slane %v2498, 5
      %v2758 = vsel %vm719, %v2756, %v2757
      %v2759 = vrot.slane %v2726, 5
      %v2760 = vrot.slane %v2759, 4
      %v2761 = vrot.slane %v2500, 5
      %v2762 = vsel %vm719, %v2760, %v2761
      %v2763 = vrot.slane %v2727, 5
      %v2764 = vrot.slane %v2763, 4
      %v2765 = vrot.slane %v2502, 5
      %v2766 = vsel %vm719, %v2764, %v2765
      %v2767 = vrot.slane %v2728, 5
      %v2768 = vrot.slane %v2767, 4
      %v2769 = vrot.slane %v2504, 5
      %v2770 = vsel %vm719, %v2768, %v2769
      %v2771 = vrot.slane %v2729, 5
      %v2772 = vrot.slane %v2771, 4
      %v2773 = vrot.slane %v2506, 5
      %v2774 = vsel %vm719, %v2772, %v2773
      %v2775 = vrot.slane %v2730, 5
      %v2776 = vrot.slane %v2775, 4
      %v2777 = vrot.slane %v2508, 5
      %v2778 = vsel %vm719, %v2776, %v2777
      %s2779 = scalar_lea.vmem %s3, 56
      %v2780 = vld [vmem:[%s2779] sm:$0xf]
      %v2781 = vunpack.c.l.b16 %v2750
      %v2782 = vunpack.c.l.b16 %v2754
      %v2783 = vunpack.c.l.b16 %v2758
      %v2784 = vunpack.c.l.b16 %v2762
      %v2785 = vunpack.c.l.b16 %v2766
      %v2786 = vunpack.c.l.b16 %v2770
      %v2787 = vunpack.c.l.b16 %v2774
      %v2788 = vunpack.c.l.b16 %v2778
      %v2789 = vpack.c.b16 %v2782, %v2781
      %v2790 = vpack.c.b16 %v2784, %v2783
      %v2791 = vpack.c.b16 %v2786, %v2785
      %v2792 = vpack.c.b16 %v2788, %v2787
      %v2794 = vsel %vm511, %v2789, 0
      %v2797 = vsel %vm511, %v2790, 0
      %v2800 = vsel %vm511, %v2791, 0
      %v2803 = vsel %vm511, %v2792, 0
      %v2806 = vsel %vm524, %v2780, 0
      %2808 = vmatprep.subr.bf16.mxu0 0
      %2809 = vmatpush1.bf16.msra.mxu0 %v2806
      %2810 = vmatprep.subr.bf16.mxu0 0
      %2811 = vmatpush1.bf16.msra.mxu0 0
      %2812 = vmatprep.subr.bf16.mxu0 0
      %2813 = vmatpush1.bf16.msra.mxu0 0
      %2814 = vmatprep.subr.bf16.mxu0 0
      %2815 = vmatpush1.bf16.msra.mxu0 0
      %2816 = vmatprep.subr.bf16.mxu0 0
      %2817 = vmatpush1.bf16.msra.mxu0 0
      %2818 = vmatprep.subr.bf16.mxu0 0
      %2819 = vmatpush1.bf16.msra.mxu0 0
      %2820 = vmatprep.subr.bf16.mxu0 0
      %2821 = vmatpush1.bf16.msra.mxu0 0
      %2822 = vmatprep.subr.bf16.mxu0 0
      %2823 = vmatpush1.bf16.msra.mxu0 0
      %2824 = vmatprep.subr.bf16.mxu0 0
      %2825 = vmatpush1.bf16.msra.mxu0 0
      %2826 = vmatprep.subr.bf16.mxu0 0
      %2827 = vmatpush1.bf16.msra.mxu0 0
      %2828 = vmatprep.subr.bf16.mxu0 0
      %2829 = vmatpush1.bf16.msra.mxu0 0
      %2830 = vmatprep.subr.bf16.mxu0 0
      %2831 = vmatpush1.bf16.msra.mxu0 0
      %2832 = vmatprep.subr.bf16.mxu0 0
      %2833 = vmatpush1.bf16.msra.mxu0 0
      %2834 = vmatprep.subr.bf16.mxu0 0
      %2835 = vmatpush1.bf16.msra.mxu0 0
      %2836 = vmatprep.subr.bf16.mxu0 0
      %2837 = vmatpush1.bf16.msra.mxu0 0
      %2838 = vmatprep.subr.bf16.mxu0 0
      %2839 = vmatpush1.bf16.msra.mxu0 0
      %2840 = vmatprep.mubr.bf16.mxu0 0
      %2841 = vmatmul.mubr.bf16.gmra.mrb[0].mxu0 %v2794
      %v2842 = vpop.f32.mrb[0].mxu0
      %v2843 = vadd.f32 0.0, %v2842
      %v2844 = vpop.f32.mrb[0].mxu0
      %v2845 = vpop.f32.mrb[0].mxu0
      %v2846 = vadd.f32 0.0, %v2845
      %v2847 = vpop.f32.mrb[0].mxu0
      %2848 = vmatprep.mubr.bf16.mxu0 0
      %2849 = vmatmul.mubr.bf16.gmra.mrb[0].mxu0 %v2797
      %v2850 = vpop.f32.mrb[0].mxu0
      %v2851 = vadd.f32 0.0, %v2850
      %v2852 = vpop.f32.mrb[0].mxu0
      %v2853 = vpop.f32.mrb[0].mxu0
      %v2854 = vadd.f32 0.0, %v2853
      %v2855 = vpop.f32.mrb[0].mxu0
      %2856 = vmatprep.mubr.bf16.mxu0 0
      %2857 = vmatmul.mubr.bf16.gmra.mrb[0].mxu0 %v2800
      %v2858 = vpop.f32.mrb[0].mxu0
      %v2859 = vadd.f32 0.0, %v2858
      %v2860 = vpop.f32.mrb[0].mxu0
      %v2861 = vpop.f32.mrb[0].mxu0
      %v2862 = vadd.f32 0.0, %v2861
      %v2863 = vpop.f32.mrb[0].mxu0
      %2864 = vmatprep.mubr.bf16.mxu0 0
      %2865 = vmatmul.mubr.bf16.gmra.mrb[0].mxu0 %v2803
      %v2866 = vpop.f32.mrb[0].mxu0
      %v2867 = vadd.f32 0.0, %v2866
      %v2868 = vpop.f32.mrb[0].mxu0
      %v2869 = vpop.f32.mrb[0].mxu0
      %v2870 = vadd.f32 0.0, %v2869
      %v2871 = vpop.f32.mrb[0].mxu0
      %2872 = vdwg.mxu0
      %v2873 = vadd.f32 %v2715, %v2843
      %v2874 = vadd.f32 %v2716, %v2846
      %v2875 = vadd.f32 %v2717, %v2851
      %v2876 = vadd.f32 %v2718, %v2854
      %v2877 = vadd.f32 %v2719, %v2859
      %v2878 = vadd.f32 %v2720, %v2862
      %v2879 = vadd.f32 %v2721, %v2867
      %v2880 = vadd.f32 %v2722, %v2870
      %s2881 = scalar_lea.vmem %s334, 16
      %v2882 = vld [vmem:[%s2881] sm:$0xf]
      %v2883 = vld [vmem:[%s2881 + $0x8] sm:$0xf]
      %v2884 = vld [vmem:[%s2881 + $0x10] sm:$0xf]
      %v2885 = vld [vmem:[%s2881 + $0x18] sm:$0xf]
      %v2886 = vld [vmem:[%s2881 + $0x20] sm:$0xf]
      %v2887 = vld [vmem:[%s2881 + $0x28] sm:$0xf]
      %v2888 = vld [vmem:[%s2881 + $0x30] sm:$0xf]
      %v2889 = vld [vmem:[%s2881 + $0x38] sm:$0xf]
      %s2890 = scalar_lea.vmem %s3, 60
      %v2891 = vld [vmem:[%s2890] sm:$0xf]
      %v2900 = vunpack.c.l.b16 %v2882
      %v2901 = vunpack.c.l.b16 %v2883
      %v2902 = vunpack.c.l.b16 %v2884
      %v2903 = vunpack.c.l.b16 %v2885
      %v2904 = vunpack.c.l.b16 %v2886
      %v2905 = vunpack.c.l.b16 %v2887
      %v2906 = vunpack.c.l.b16 %v2888
      %v2907 = vunpack.c.l.b16 %v2889
      %v2908 = vpack.c.b16 %v2901, %v2900
      %v2909 = vpack.c.b16 %v2903, %v2902
      %v2910 = vpack.c.b16 %v2905, %v2904
      %v2911 = vpack.c.b16 %v2907, %v2906
      %v2913 = vsel %vm511, %v2908, 0
      %v2916 = vsel %vm511, %v2909, 0
      %v2919 = vsel %vm511, %v2910, 0
      %v2922 = vsel %vm511, %v2911, 0
      %v2925 = vsel %vm524, %v2891, 0
      %2927 = vmatprep.subr.bf16.mxu0 0
      %2928 = vmatpush1.bf16.msra.mxu0 %v2925
      %2929 = vmatprep.subr.bf16.mxu0 0
      %2930 = vmatpush1.bf16.msra.mxu0 0
      %2931 = vmatprep.subr.bf16.mxu0 0
      %2932 = vmatpush1.bf16.msra.mxu0 0
      %2933 = vmatprep.subr.bf16.mxu0 0
      %2934 = vmatpush1.bf16.msra.mxu0 0
      %2935 = vmatprep.subr.bf16.mxu0 0
      %2936 = vmatpush1.bf16.msra.mxu0 0
      %2937 = vmatprep.subr.bf16.mxu0 0
      %2938 = vmatpush1.bf16.msra.mxu0 0
      %2939 = vmatprep.subr.bf16.mxu0 0
      %2940 = vmatpush1.bf16.msra.mxu0 0
      %2941 = vmatprep.subr.bf16.mxu0 0
      %2942 = vmatpush1.bf16.msra.mxu0 0
      %2943 = vmatprep.subr.bf16.mxu0 0
      %2944 = vmatpush1.bf16.msra.mxu0 0
      %2945 = vmatprep.subr.bf16.mxu0 0
      %2946 = vmatpush1.bf16.msra.mxu0 0
      %2947 = vmatprep.subr.bf16.mxu0 0
      %2948 = vmatpush1.bf16.msra.mxu0 0
      %2949 = vmatprep.subr.bf16.mxu0 0
      %2950 = vmatpush1.bf16.msra.mxu0 0
      %2951 = vmatprep.subr.bf16.mxu0 0
      %2952 = vmatpush1.bf16.msra.mxu0 0
      %2953 = vmatprep.subr.bf16.mxu0 0
      %2954 = vmatpush1.bf16.msra.mxu0 0
      %2955 = vmatprep.subr.bf16.mxu0 0
      %2956 = vmatpush1.bf16.msra.mxu0 0
      %2957 = vmatprep.subr.bf16.mxu0 0
      %2958 = vmatpush1.bf16.msra.mxu0 0
      %2959 = vmatprep.mubr.bf16.mxu0 0
      %2960 = vmatmul.mubr.bf16.gmra.mrb[0].mxu0 %v2913
      %v2961 = vpop.f32.mrb[0].mxu0
      %v2962 = vadd.f32 0.0, %v2961
      %v2963 = vpop.f32.mrb[0].mxu0
      %v2964 = vpop.f32.mrb[0].mxu0
      %v2965 = vadd.f32 0.0, %v2964
      %v2966 = vpop.f32.mrb[0].mxu0
      %2967 = vmatprep.mubr.bf16.mxu0 0
      %2968 = vmatmul.mubr.bf16.gmra.mrb[0].mxu0 %v2916
      %v2969 = vpop.f32.mrb[0].mxu0
      %v2970 = vadd.f32 0.0, %v2969
      %v2971 = vpop.f32.mrb[0].mxu0
      %v2972 = vpop.f32.mrb[0].mxu0
      %v2973 = vadd.f32 0.0, %v2972
      %v2974 = vpop.f32.mrb[0].mxu0
      %2975 = vmatprep.mubr.bf16.mxu0 0
      %2976 = vmatmul.mubr.bf16.gmra.mrb[0].mxu0 %v2919
      %v2977 = vpop.f32.mrb[0].mxu0
      %v2978 = vadd.f32 0.0, %v2977
      %v2979 = vpop.f32.mrb[0].mxu0
      %v2980 = vpop.f32.mrb[0].mxu0
      %v2981 = vadd.f32 0.0, %v2980
      %v2982 = vpop.f32.mrb[0].mxu0
      %2983 = vmatprep.mubr.bf16.mxu0 0
      %2984 = vmatmul.mubr.bf16.gmra.mrb[0].mxu0 %v2922
      %v2985 = vpop.f32.mrb[0].mxu0
      %v2986 = vadd.f32 0.0, %v2985
      %v2987 = vpop.f32.mrb[0].mxu0
      %v2988 = vpop.f32.mrb[0].mxu0
      %v2989 = vadd.f32 0.0, %v2988
      %v2990 = vpop.f32.mrb[0].mxu0
      %2991 = vdwg.mxu0
      %v2992 = vadd.f32 %v2873, %v2962
      %v2993 = vadd.f32 %v2874, %v2965
      %v2994 = vadd.f32 %v2875, %v2970
      %v2995 = vadd.f32 %v2876, %v2973
      %v2996 = vadd.f32 %v2877, %v2978
      %v2997 = vadd.f32 %v2878, %v2981
      %v2998 = vadd.f32 %v2879, %v2986
      %v2999 = vadd.f32 %v2880, %v2989
      %v3000 = vld [vmem:[%s2881] sm:$0xf]
      %v3001 = vld [vmem:[%s2881 + $0x4] sm:$0x1]
      %v3002 = vld [vmem:[%s2881 + $0x8] sm:$0xf]
      %v3003 = vld [vmem:[%s2881 + $0xc] sm:$0x1]
      %v3004 = vld [vmem:[%s2881 + $0x10] sm:$0xf]
      %v3005 = vld [vmem:[%s2881 + $0x14] sm:$0x1]
      %v3006 = vld [vmem:[%s2881 + $0x18] sm:$0xf]
      %v3007 = vld [vmem:[%s2881 + $0x1c] sm:$0x1]
      %v3008 = vld [vmem:[%s2881 + $0x20] sm:$0xf]
      %v3009 = vld [vmem:[%s2881 + $0x24] sm:$0x1]
      %v3010 = vld [vmem:[%s2881 + $0x28] sm:$0xf]
      %v3011 = vld [vmem:[%s2881 + $0x2c] sm:$0x1]
      %v3012 = vld [vmem:[%s2881 + $0x30] sm:$0xf]
      %v3013 = vld [vmem:[%s2881 + $0x34] sm:$0x1]
      %v3014 = vld [vmem:[%s2881 + $0x38] sm:$0xf]
      %v3015 = vld [vmem:[%s2881 + $0x3c] sm:$0x1]
      %v3017 = vshrl.u32 %v3000, 16
      %v3019 = vrot.slane %v3017, 4
      %v3020 = vshll.u32 %v3000, 16
      %v3022 = vrot.slane %v3020, 5
      %v3023 = vor.u32 %v3019, %v3022
      %v3024 = vrot.slane %v3023, 4
      %v3026 = vshll.u32 %v3001, 16
      %v3028 = vrot.slane %v3026, 5
      %v3029 = vsel %vm384, %v3024, %v3028
      %v3031 = vshrl.u32 %v3002, 16
      %v3033 = vrot.slane %v3031, 4
      %v3034 = vshll.u32 %v3002, 16
      %v3036 = vrot.slane %v3034, 5
      %v3037 = vor.u32 %v3033, %v3036
      %v3038 = vrot.slane %v3037, 4
      %v3040 = vshll.u32 %v3003, 16
      %v3042 = vrot.slane %v3040, 5
      %v3043 = vsel %vm384, %v3038, %v3042
      %v3045 = vshrl.u32 %v3004, 16
      %v3047 = vrot.slane %v3045, 4
      %v3048 = vshll.u32 %v3004, 16
      %v3050 = vrot.slane %v3048, 5
      %v3051 = vor.u32 %v3047, %v3050
      %v3052 = vrot.slane %v3051, 4
      %v3054 = vshll.u32 %v3005, 16
      %v3056 = vrot.slane %v3054, 5
      %v3057 = vsel %vm384, %v3052, %v3056
      %v3059 = vshrl.u32 %v3006, 16
      %v3061 = vrot.slane %v3059, 4
      %v3062 = vshll.u32 %v3006, 16
      %v3064 = vrot.slane %v3062, 5
      %v3065 = vor.u32 %v3061, %v3064
      %v3066 = vrot.slane %v3065, 4
      %v3068 = vshll.u32 %v3007, 16
      %v3070 = vrot.slane %v3068, 5
      %v3071 = vsel %vm384, %v3066, %v3070
      %v3073 = vshrl.u32 %v3008, 16
      %v3075 = vrot.slane %v3073, 4
      %v3076 = vshll.u32 %v3008, 16
      %v3078 = vrot.slane %v3076, 5
      %v3079 = vor.u32 %v3075, %v3078
      %v3080 = vrot.slane %v3079, 4
      %v3082 = vshll.u32 %v3009, 16
      %v3084 = vrot.slane %v3082, 5
      %v3085 = vsel %vm384, %v3080, %v3084
      %v3087 = vshrl.u32 %v3010, 16
      %v3089 = vrot.slane %v3087, 4
      %v3090 = vshll.u32 %v3010, 16
      %v3092 = vrot.slane %v3090, 5
      %v3093 = vor.u32 %v3089, %v3092
      %v3094 = vrot.slane %v3093, 4
      %v3096 = vshll.u32 %v3011, 16
      %v3098 = vrot.slane %v3096, 5
      %v3099 = vsel %vm384, %v3094, %v3098
      %v3101 = vshrl.u32 %v3012, 16
      %v3103 = vrot.slane %v3101, 4
      %v3104 = vshll.u32 %v3012, 16
      %v3106 = vrot.slane %v3104, 5
      %v3107 = vor.u32 %v3103, %v3106
      %v3108 = vrot.slane %v3107, 4
      %v3110 = vshll.u32 %v3013, 16
      %v3112 = vrot.slane %v3110, 5
      %v3113 = vsel %vm384, %v3108, %v3112
      %v3115 = vshrl.u32 %v3014, 16
      %v3117 = vrot.slane %v3115, 4
      %v3118 = vshll.u32 %v3014, 16
      %v3120 = vrot.slane %v3118, 5
      %v3121 = vor.u32 %v3117, %v3120
      %v3122 = vrot.slane %v3121, 4
      %v3124 = vshll.u32 %v3015, 16
      %v3126 = vrot.slane %v3124, 5
      %v3127 = vsel %vm384, %v3122, %v3126
      %s3128 = scalar_lea.vmem %s3, 64
      %v3129 = vld [vmem:[%s3128] sm:$0xf]
      %v3130 = vunpack.c.l.b16 %v3029
      %v3131 = vunpack.c.l.b16 %v3043
      %v3132 = vunpack.c.l.b16 %v3057
      %v3133 = vunpack.c.l.b16 %v3071
      %v3134 = vunpack.c.l.b16 %v3085
      %v3135 = vunpack.c.l.b16 %v3099
      %v3136 = vunpack.c.l.b16 %v3113
      %v3137 = vunpack.c.l.b16 %v3127
      %v3138 = vpack.c.b16 %v3131, %v3130
      %v3139 = vpack.c.b16 %v3133, %v3132
      %v3140 = vpack.c.b16 %v3135, %v3134
      %v3141 = vpack.c.b16 %v3137, %v3136
      %v3143 = vsel %vm511, %v3138, 0
      %v3146 = vsel %vm511, %v3139, 0
      %v3149 = vsel %vm511, %v3140, 0
      %v3152 = vsel %vm511, %v3141, 0
      %v3155 = vsel %vm524, %v3129, 0
      %3157 = vmatprep.subr.bf16.mxu0 0
      %3158 = vmatpush1.bf16.msra.mxu0 %v3155
      %3159 = vmatprep.subr.bf16.mxu0 0
      %3160 = vmatpush1.bf16.msra.mxu0 0
      %3161 = vmatprep.subr.bf16.mxu0 0
      %3162 = vmatpush1.bf16.msra.mxu0 0
      %3163 = vmatprep.subr.bf16.mxu0 0
      %3164 = vmatpush1.bf16.msra.mxu0 0
      %3165 = vmatprep.subr.bf16.mxu0 0
      %3166 = vmatpush1.bf16.msra.mxu0 0
      %3167 = vmatprep.subr.bf16.mxu0 0
      %3168 = vmatpush1.bf16.msra.mxu0 0
      %3169 = vmatprep.subr.bf16.mxu0 0
      %3170 = vmatpush1.bf16.msra.mxu0 0
      %3171 = vmatprep.subr.bf16.mxu0 0
      %3172 = vmatpush1.bf16.msra.mxu0 0
      %3173 = vmatprep.subr.bf16.mxu0 0
      %3174 = vmatpush1.bf16.msra.mxu0 0
      %3175 = vmatprep.subr.bf16.mxu0 0
      %3176 = vmatpush1.bf16.msra.mxu0 0
      %3177 = vmatprep.subr.bf16.mxu0 0
      %3178 = vmatpush1.bf16.msra.mxu0 0
      %3179 = vmatprep.subr.bf16.mxu0 0
      %3180 = vmatpush1.bf16.msra.mxu0 0
      %3181 = vmatprep.subr.bf16.mxu0 0
      %3182 = vmatpush1.bf16.msra.mxu0 0
      %3183 = vmatprep.subr.bf16.mxu0 0
      %3184 = vmatpush1.bf16.msra.mxu0 0
      %3185 = vmatprep.subr.bf16.mxu0 0
      %3186 = vmatpush1.bf16.msra.mxu0 0
      %3187 = vmatprep.subr.bf16.mxu0 0
      %3188 = vmatpush1.bf16.msra.mxu0 0
      %3189 = vmatprep.mubr.bf16.mxu0 0
      %3190 = vmatmul.mubr.bf16.gmra.mrb[0].mxu0 %v3143
      %v3191 = vpop.f32.mrb[0].mxu0
      %v3192 = vadd.f32 0.0, %v3191
      %v3193 = vpop.f32.mrb[0].mxu0
      %v3194 = vpop.f32.mrb[0].mxu0
      %v3195 = vadd.f32 0.0, %v3194
      %v3196 = vpop.f32.mrb[0].mxu0
      %3197 = vmatprep.mubr.bf16.mxu0 0
      %3198 = vmatmul.mubr.bf16.gmra.mrb[0].mxu0 %v3146
      %v3199 = vpop.f32.mrb[0].mxu0
      %v3200 = vadd.f32 0.0, %v3199
      %v3201 = vpop.f32.mrb[0].mxu0
      %v3202 = vpop.f32.mrb[0].mxu0
      %v3203 = vadd.f32 0.0, %v3202
      %v3204 = vpop.f32.mrb[0].mxu0
      %3205 = vmatprep.mubr.bf16.mxu0 0
      %3206 = vmatmul.mubr.bf16.gmra.mrb[0].mxu0 %v3149
      %v3207 = vpop.f32.mrb[0].mxu0
      %v3208 = vadd.f32 0.0, %v3207
      %v3209 = vpop.f32.mrb[0].mxu0
      %v3210 = vpop.f32.mrb[0].mxu0
      %v3211 = vadd.f32 0.0, %v3210
      %v3212 = vpop.f32.mrb[0].mxu0
      %3213 = vmatprep.mubr.bf16.mxu0 0
      %3214 = vmatmul.mubr.bf16.gmra.mrb[0].mxu0 %v3152
      %v3215 = vpop.f32.mrb[0].mxu0
      %v3216 = vadd.f32 0.0, %v3215
      %v3217 = vpop.f32.mrb[0].mxu0
      %v3218 = vpop.f32.mrb[0].mxu0
      %v3219 = vadd.f32 0.0, %v3218
      %v3220 = vpop.f32.mrb[0].mxu0
      %3221 = vdwg.mxu0
      %v3222 = vadd.f32 %v2992, %v3192
      %v3223 = vadd.f32 %v2993, %v3195
      %v3224 = vadd.f32 %v2994, %v3200
      %v3225 = vadd.f32 %v2995, %v3203
      %v3226 = vadd.f32 %v2996, %v3208
      %v3227 = vadd.f32 %v2997, %v3211
      %v3228 = vadd.f32 %v2998, %v3216
      %v3229 = vadd.f32 %v2999, %v3219
      %v3230 = vld [vmem:[%s2881] sm:$0xe]
      %v3231 = vld [vmem:[%s2881 + $0x8] sm:$0xe]
      %v3232 = vld [vmem:[%s2881 + $0x10] sm:$0xe]
      %v3233 = vld [vmem:[%s2881 + $0x18] sm:$0xe]
      %v3234 = vld [vmem:[%s2881 + $0x20] sm:$0xe]
      %v3235 = vld [vmem:[%s2881 + $0x28] sm:$0xe]
      %v3236 = vld [vmem:[%s2881 + $0x30] sm:$0xe]
      %v3237 = vld [vmem:[%s2881 + $0x38] sm:$0xe]
      %v3254 = vrot.slane %v3230, 5
      %v3255 = vrot.slane %v3254, 4
      %v3256 = vrot.slane %v3001, 5
      %v3257 = vsel %vm719, %v3255, %v3256
      %v3258 = vrot.slane %v3231, 5
      %v3259 = vrot.slane %v3258, 4
      %v3260 = vrot.slane %v3003, 5
      %v3261 = vsel %vm719, %v3259, %v3260
      %v3262 = vrot.slane %v3232, 5
      %v3263 = vrot.slane %v3262, 4
      %v3264 = vrot.slane %v3005, 5
      %v3265 = vsel %vm719, %v3263, %v3264
      %v3266 = vrot.slane %v3233, 5
      %v3267 = vrot.slane %v3266, 4
      %v3268 = vrot.slane %v3007, 5
      %v3269 = vsel %vm719, %v3267, %v3268
      %v3270 = vrot.slane %v3234, 5
      %v3271 = vrot.slane %v3270, 4
      %v3272 = vrot.slane %v3009, 5
      %v3273 = vsel %vm719, %v3271, %v3272
      %v3274 = vrot.slane %v3235, 5
      %v3275 = vrot.slane %v3274, 4
      %v3276 = vrot.slane %v3011, 5
      %v3277 = vsel %vm719, %v3275, %v3276
      %v3278 = vrot.slane %v3236, 5
      %v3279 = vrot.slane %v3278, 4
      %v3280 = vrot.slane %v3013, 5
      %v3281 = vsel %vm719, %v3279, %v3280
      %v3282 = vrot.slane %v3237, 5
      %v3283 = vrot.slane %v3282, 4
      %v3284 = vrot.slane %v3015, 5
      %v3285 = vsel %vm719, %v3283, %v3284
      %s3286 = scalar_lea.vmem %s3, 68
      %v3287 = vld [vmem:[%s3286] sm:$0xf]
      %v3288 = vunpack.c.l.b16 %v3257
      %v3289 = vunpack.c.l.b16 %v3261
      %v3290 = vunpack.c.l.b16 %v3265
      %v3291 = vunpack.c.l.b16 %v3269
      %v3292 = vunpack.c.l.b16 %v3273
      %v3293 = vunpack.c.l.b16 %v3277
      %v3294 = vunpack.c.l.b16 %v3281
      %v3295 = vunpack.c.l.b16 %v3285
      %v3296 = vpack.c.b16 %v3289, %v3288
      %v3297 = vpack.c.b16 %v3291, %v3290
      %v3298 = vpack.c.b16 %v3293, %v3292
      %v3299 = vpack.c.b16 %v3295, %v3294
      %v3301 = vsel %vm511, %v3296, 0
      %v3304 = vsel %vm511, %v3297, 0
      %v3307 = vsel %vm511, %v3298, 0
      %v3310 = vsel %vm511, %v3299, 0
      %v3313 = vsel %vm524, %v3287, 0
      %3315 = vmatprep.subr.bf16.mxu0 0
      %3316 = vmatpush1.bf16.msra.mxu0 %v3313
      %3317 = vmatprep.subr.bf16.mxu0 0
      %3318 = vmatpush1.bf16.msra.mxu0 0
      %3319 = vmatprep.subr.bf16.mxu0 0
      %3320 = vmatpush1.bf16.msra.mxu0 0
      %3321 = vmatprep.subr.bf16.mxu0 0
      %3322 = vmatpush1.bf16.msra.mxu0 0
      %3323 = vmatprep.subr.bf16.mxu0 0
      %3324 = vmatpush1.bf16.msra.mxu0 0
      %3325 = vmatprep.subr.bf16.mxu0 0
      %3326 = vmatpush1.bf16.msra.mxu0 0
      %3327 = vmatprep.subr.bf16.mxu0 0
      %3328 = vmatpush1.bf16.msra.mxu0 0
      %3329 = vmatprep.subr.bf16.mxu0 0
      %3330 = vmatpush1.bf16.msra.mxu0 0
      %3331 = vmatprep.subr.bf16.mxu0 0
      %3332 = vmatpush1.bf16.msra.mxu0 0
      %3333 = vmatprep.subr.bf16.mxu0 0
      %3334 = vmatpush1.bf16.msra.mxu0 0
      %3335 = vmatprep.subr.bf16.mxu0 0
      %3336 = vmatpush1.bf16.msra.mxu0 0
      %3337 = vmatprep.subr.bf16.mxu0 0
      %3338 = vmatpush1.bf16.msra.mxu0 0
      %3339 = vmatprep.subr.bf16.mxu0 0
      %3340 = vmatpush1.bf16.msra.mxu0 0
      %3341 = vmatprep.subr.bf16.mxu0 0
      %3342 = vmatpush1.bf16.msra.mxu0 0
      %3343 = vmatprep.subr.bf16.mxu0 0
      %3344 = vmatpush1.bf16.msra.mxu0 0
      %3345 = vmatprep.subr.bf16.mxu0 0
      %3346 = vmatpush1.bf16.msra.mxu0 0
      %3347 = vmatprep.mubr.bf16.mxu0 0
      %3348 = vmatmul.mubr.bf16.gmra.mrb[0].mxu0 %v3301
      %v3349 = vpop.f32.mrb[0].mxu0
      %v3350 = vadd.f32 0.0, %v3349
      %v3351 = vpop.f32.mrb[0].mxu0
      %v3352 = vpop.f32.mrb[0].mxu0
      %v3353 = vadd.f32 0.0, %v3352
      %v3354 = vpop.f32.mrb[0].mxu0
      %3355 = vmatprep.mubr.bf16.mxu0 0
      %3356 = vmatmul.mubr.bf16.gmra.mrb[0].mxu0 %v3304
      %v3357 = vpop.f32.mrb[0].mxu0
      %v3358 = vadd.f32 0.0, %v3357
      %v3359 = vpop.f32.mrb[0].mxu0
      %v3360 = vpop.f32.mrb[0].mxu0
      %v3361 = vadd.f32 0.0, %v3360
      %v3362 = vpop.f32.mrb[0].mxu0
      %3363 = vmatprep.mubr.bf16.mxu0 0
      %3364 = vmatmul.mubr.bf16.gmra.mrb[0].mxu0 %v3307
      %v3365 = vpop.f32.mrb[0].mxu0
      %v3366 = vadd.f32 0.0, %v3365
      %v3367 = vpop.f32.mrb[0].mxu0
      %v3368 = vpop.f32.mrb[0].mxu0
      %v3369 = vadd.f32 0.0, %v3368
      %v3370 = vpop.f32.mrb[0].mxu0
      %3371 = vmatprep.mubr.bf16.mxu0 0
      %3372 = vmatmul.mubr.bf16.gmra.mrb[0].mxu0 %v3310
      %v3373 = vpop.f32.mrb[0].mxu0
      %v3374 = vadd.f32 0.0, %v3373
      %v3375 = vpop.f32.mrb[0].mxu0
      %v3376 = vpop.f32.mrb[0].mxu0
      %v3377 = vadd.f32 0.0, %v3376
      %v3378 = vpop.f32.mrb[0].mxu0
      %3379 = vdwg.mxu0
      %v3380 = vadd.f32 %v3222, %v3350
      %v3381 = vadd.f32 %v3223, %v3353
      %v3382 = vadd.f32 %v3224, %v3358
      %v3383 = vadd.f32 %v3225, %v3361
      %v3384 = vadd.f32 %v3226, %v3366
      %v3385 = vadd.f32 %v3227, %v3369
      %v3386 = vadd.f32 %v3228, %v3374
      %v3387 = vadd.f32 %v3229, %v3377
      %v3388 = vld [vmem:[%s345] sm:$0xf]
      %v3389 = vld [vmem:[%s345 + $0x8] sm:$0xf]
      %v3390 = vld [vmem:[%s345 + $0x10] sm:$0xf]
      %v3391 = vld [vmem:[%s345 + $0x18] sm:$0xf]
      %v3392 = vld [vmem:[%s345 + $0x20] sm:$0xf]
      %v3393 = vld [vmem:[%s345 + $0x28] sm:$0xf]
      %v3394 = vld [vmem:[%s345 + $0x30] sm:$0xf]
      %v3395 = vld [vmem:[%s345 + $0x38] sm:$0xf]
      %s3396 = scalar_lea.vmem %s3, 72
      %v3397 = vld [vmem:[%s3396] sm:$0xf]
      %v3406 = vunpack.c.l.b16 %v3388
      %v3407 = vunpack.c.l.b16 %v3389
      %v3408 = vunpack.c.l.b16 %v3390
      %v3409 = vunpack.c.l.b16 %v3391
      %v3410 = vunpack.c.l.b16 %v3392
      %v3411 = vunpack.c.l.b16 %v3393
      %v3412 = vunpack.c.l.b16 %v3394
      %v3413 = vunpack.c.l.b16 %v3395
      %v3414 = vpack.c.b16 %v3407, %v3406
      %v3415 = vpack.c.b16 %v3409, %v3408
      %v3416 = vpack.c.b16 %v3411, %v3410
      %v3417 = vpack.c.b16 %v3413, %v3412
      %v3419 = vsel %vm511, %v3414, 0
      %v3422 = vsel %vm511, %v3415, 0
      %v3425 = vsel %vm511, %v3416, 0
      %v3428 = vsel %vm511, %v3417, 0
      %v3431 = vsel %vm524, %v3397, 0
      %3433 = vmatprep.subr.bf16.mxu0 0
      %3434 = vmatpush1.bf16.msra.mxu0 %v3431
      %3435 = vmatprep.subr.bf16.mxu0 0
      %3436 = vmatpush1.bf16.msra.mxu0 0
      %3437 = vmatprep.subr.bf16.mxu0 0
      %3438 = vmatpush1.bf16.msra.mxu0 0
      %3439 = vmatprep.subr.bf16.mxu0 0
      %3440 = vmatpush1.bf16.msra.mxu0 0
      %3441 = vmatprep.subr.bf16.mxu0 0
      %3442 = vmatpush1.bf16.msra.mxu0 0
      %3443 = vmatprep.subr.bf16.mxu0 0
      %3444 = vmatpush1.bf16.msra.mxu0 0
      %3445 = vmatprep.subr.bf16.mxu0 0
      %3446 = vmatpush1.bf16.msra.mxu0 0
      %3447 = vmatprep.subr.bf16.mxu0 0
      %3448 = vmatpush1.bf16.msra.mxu0 0
      %3449 = vmatprep.subr.bf16.mxu0 0
      %3450 = vmatpush1.bf16.msra.mxu0 0
      %3451 = vmatprep.subr.bf16.mxu0 0
      %3452 = vmatpush1.bf16.msra.mxu0 0
      %3453 = vmatprep.subr.bf16.mxu0 0
      %3454 = vmatpush1.bf16.msra.mxu0 0
      %3455 = vmatprep.subr.bf16.mxu0 0
      %3456 = vmatpush1.bf16.msra.mxu0 0
      %3457 = vmatprep.subr.bf16.mxu0 0
      %3458 = vmatpush1.bf16.msra.mxu0 0
      %3459 = vmatprep.subr.bf16.mxu0 0
      %3460 = vmatpush1.bf16.msra.mxu0 0
      %3461 = vmatprep.subr.bf16.mxu0 0
      %3462 = vmatpush1.bf16.msra.mxu0 0
      %3463 = vmatprep.subr.bf16.mxu0 0
      %3464 = vmatpush1.bf16.msra.mxu0 0
      %3465 = vmatprep.mubr.bf16.mxu0 0
      %3466 = vmatmul.mubr.bf16.gmra.mrb[0].mxu0 %v3419
      %v3467 = vpop.f32.mrb[0].mxu0
      %v3468 = vadd.f32 0.0, %v3467
      %v3469 = vpop.f32.mrb[0].mxu0
      %v3470 = vpop.f32.mrb[0].mxu0
      %v3471 = vadd.f32 0.0, %v3470
      %v3472 = vpop.f32.mrb[0].mxu0
      %3473 = vmatprep.mubr.bf16.mxu0 0
      %3474 = vmatmul.mubr.bf16.gmra.mrb[0].mxu0 %v3422
      %v3475 = vpop.f32.mrb[0].mxu0
      %v3476 = vadd.f32 0.0, %v3475
      %v3477 = vpop.f32.mrb[0].mxu0
      %v3478 = vpop.f32.mrb[0].mxu0
      %v3479 = vadd.f32 0.0, %v3478
      %v3480 = vpop.f32.mrb[0].mxu0
      %3481 = vmatprep.mubr.bf16.mxu0 0
      %3482 = vmatmul.mubr.bf16.gmra.mrb[0].mxu0 %v3425
      %v3483 = vpop.f32.mrb[0].mxu0
      %v3484 = vadd.f32 0.0, %v3483
      %v3485 = vpop.f32.mrb[0].mxu0
      %v3486 = vpop.f32.mrb[0].mxu0
      %v3487 = vadd.f32 0.0, %v3486
      %v3488 = vpop.f32.mrb[0].mxu0
      %3489 = vmatprep.mubr.bf16.mxu0 0
      %3490 = vmatmul.mubr.bf16.gmra.mrb[0].mxu0 %v3428
      %v3491 = vpop.f32.mrb[0].mxu0
      %v3492 = vadd.f32 0.0, %v3491
      %v3493 = vpop.f32.mrb[0].mxu0
      %v3494 = vpop.f32.mrb[0].mxu0
      %v3495 = vadd.f32 0.0, %v3494
      %v3496 = vpop.f32.mrb[0].mxu0
      %3497 = vdwg.mxu0
      %v3498 = vadd.f32 %v3380, %v3468
      %v3499 = vadd.f32 %v3381, %v3471
      %v3500 = vadd.f32 %v3382, %v3476
      %v3501 = vadd.f32 %v3383, %v3479
      %v3502 = vadd.f32 %v3384, %v3484
      %v3503 = vadd.f32 %v3385, %v3487
      %v3504 = vadd.f32 %v3386, %v3492
      %v3505 = vadd.f32 %v3387, %v3495
      %v3506 = vld [vmem:[%s345] sm:$0xf]
      %v3507 = vld [vmem:[%s345 + $0x4] sm:$0x1]
      %v3508 = vld [vmem:[%s345 + $0x8] sm:$0xf]
      %v3509 = vld [vmem:[%s345 + $0xc] sm:$0x1]
      %v3510 = vld [vmem:[%s345 + $0x10] sm:$0xf]
      %v3511 = vld [vmem:[%s345 + $0x14] sm:$0x1]
      %v3512 = vld [vmem:[%s345 + $0x18] sm:$0xf]
      %v3513 = vld [vmem:[%s345 + $0x1c] sm:$0x1]
      %v3514 = vld [vmem:[%s345 + $0x20] sm:$0xf]
      %v3515 = vld [vmem:[%s345 + $0x24] sm:$0x1]
      %v3516 = vld [vmem:[%s345 + $0x28] sm:$0xf]
      %v3517 = vld [vmem:[%s345 + $0x2c] sm:$0x1]
      %v3518 = vld [vmem:[%s345 + $0x30] sm:$0xf]
      %v3519 = vld [vmem:[%s345 + $0x34] sm:$0x1]
      %v3520 = vld [vmem:[%s345 + $0x38] sm:$0xf]
      %v3521 = vld [vmem:[%s345 + $0x3c] sm:$0x1]
      %v3523 = vshrl.u32 %v3506, 16
      %v3525 = vrot.slane %v3523, 4
      %v3526 = vshll.u32 %v3506, 16
      %v3528 = vrot.slane %v3526, 5
      %v3529 = vor.u32 %v3525, %v3528
      %v3530 = vrot.slane %v3529, 4
      %v3532 = vshll.u32 %v3507, 16
      %v3534 = vrot.slane %v3532, 5
      %v3535 = vsel %vm384, %v3530, %v3534
      %v3537 = vshrl.u32 %v3508, 16
      %v3539 = vrot.slane %v3537, 4
      %v3540 = vshll.u32 %v3508, 16
      %v3542 = vrot.slane %v3540, 5
      %v3543 = vor.u32 %v3539, %v3542
      %v3544 = vrot.slane %v3543, 4
      %v3546 = vshll.u32 %v3509, 16
      %v3548 = vrot.slane %v3546, 5
      %v3549 = vsel %vm384, %v3544, %v3548
      %v3551 = vshrl.u32 %v3510, 16
      %v3553 = vrot.slane %v3551, 4
      %v3554 = vshll.u32 %v3510, 16
      %v3556 = vrot.slane %v3554, 5
      %v3557 = vor.u32 %v3553, %v3556
      %v3558 = vrot.slane %v3557, 4
      %v3560 = vshll.u32 %v3511, 16
      %v3562 = vrot.slane %v3560, 5
      %v3563 = vsel %vm384, %v3558, %v3562
      %v3565 = vshrl.u32 %v3512, 16
      %v3567 = vrot.slane %v3565, 4
      %v3568 = vshll.u32 %v3512, 16
      %v3570 = vrot.slane %v3568, 5
      %v3571 = vor.u32 %v3567, %v3570
      %v3572 = vrot.slane %v3571, 4
      %v3574 = vshll.u32 %v3513, 16
      %v3576 = vrot.slane %v3574, 5
      %v3577 = vsel %vm384, %v3572, %v3576
      %v3579 = vshrl.u32 %v3514, 16
      %v3581 = vrot.slane %v3579, 4
      %v3582 = vshll.u32 %v3514, 16
      %v3584 = vrot.slane %v3582, 5
      %v3585 = vor.u32 %v3581, %v3584
      %v3586 = vrot.slane %v3585, 4
      %v3588 = vshll.u32 %v3515, 16
      %v3590 = vrot.slane %v3588, 5
      %v3591 = vsel %vm384, %v3586, %v3590
      %v3593 = vshrl.u32 %v3516, 16
      %v3595 = vrot.slane %v3593, 4
      %v3596 = vshll.u32 %v3516, 16
      %v3598 = vrot.slane %v3596, 5
      %v3599 = vor.u32 %v3595, %v3598
      %v3600 = vrot.slane %v3599, 4
      %v3602 = vshll.u32 %v3517, 16
      %v3604 = vrot.slane %v3602, 5
      %v3605 = vsel %vm384, %v3600, %v3604
      %v3607 = vshrl.u32 %v3518, 16
      %v3609 = vrot.slane %v3607, 4
      %v3610 = vshll.u32 %v3518, 16
      %v3612 = vrot.slane %v3610, 5
      %v3613 = vor.u32 %v3609, %v3612
      %v3614 = vrot.slane %v3613, 4
      %v3616 = vshll.u32 %v3519, 16
      %v3618 = vrot.slane %v3616, 5
      %v3619 = vsel %vm384, %v3614, %v3618
      %v3621 = vshrl.u32 %v3520, 16
      %v3623 = vrot.slane %v3621, 4
      %v3624 = vshll.u32 %v3520, 16
      %v3626 = vrot.slane %v3624, 5
      %v3627 = vor.u32 %v3623, %v3626
      %v3628 = vrot.slane %v3627, 4
      %v3630 = vshll.u32 %v3521, 16
      %v3632 = vrot.slane %v3630, 5
      %v3633 = vsel %vm384, %v3628, %v3632
      %s3634 = scalar_lea.vmem %s3, 76
      %v3635 = vld [vmem:[%s3634] sm:$0xf]
      %v3636 = vunpack.c.l.b16 %v3535
      %v3637 = vunpack.c.l.b16 %v3549
      %v3638 = vunpack.c.l.b16 %v3563
      %v3639 = vunpack.c.l.b16 %v3577
      %v3640 = vunpack.c.l.b16 %v3591
      %v3641 = vunpack.c.l.b16 %v3605
      %v3642 = vunpack.c.l.b16 %v3619
      %v3643 = vunpack.c.l.b16 %v3633
      %v3644 = vpack.c.b16 %v3637, %v3636
      %v3645 = vpack.c.b16 %v3639, %v3638
      %v3646 = vpack.c.b16 %v3641, %v3640
      %v3647 = vpack.c.b16 %v3643, %v3642
      %v3649 = vsel %vm511, %v3644, 0
      %v3652 = vsel %vm511, %v3645, 0
      %v3655 = vsel %vm511, %v3646, 0
      %v3658 = vsel %vm511, %v3647, 0
      %v3661 = vsel %vm524, %v3635, 0
      %3663 = vmatprep.subr.bf16.mxu0 0
      %3664 = vmatpush1.bf16.msra.mxu0 %v3661
      %3665 = vmatprep.subr.bf16.mxu0 0
      %3666 = vmatpush1.bf16.msra.mxu0 0
      %3667 = vmatprep.subr.bf16.mxu0 0
      %3668 = vmatpush1.bf16.msra.mxu0 0
      %3669 = vmatprep.subr.bf16.mxu0 0
      %3670 = vmatpush1.bf16.msra.mxu0 0
      %3671 = vmatprep.subr.bf16.mxu0 0
      %3672 = vmatpush1.bf16.msra.mxu0 0
      %3673 = vmatprep.subr.bf16.mxu0 0
      %3674 = vmatpush1.bf16.msra.mxu0 0
      %3675 = vmatprep.subr.bf16.mxu0 0
      %3676 = vmatpush1.bf16.msra.mxu0 0
      %3677 = vmatprep.subr.bf16.mxu0 0
      %3678 = vmatpush1.bf16.msra.mxu0 0
      %3679 = vmatprep.subr.bf16.mxu0 0
      %3680 = vmatpush1.bf16.msra.mxu0 0
      %3681 = vmatprep.subr.bf16.mxu0 0
      %3682 = vmatpush1.bf16.msra.mxu0 0
      %3683 = vmatprep.subr.bf16.mxu0 0
      %3684 = vmatpush1.bf16.msra.mxu0 0
      %3685 = vmatprep.subr.bf16.mxu0 0
      %3686 = vmatpush1.bf16.msra.mxu0 0
      %3687 = vmatprep.subr.bf16.mxu0 0
      %3688 = vmatpush1.bf16.msra.mxu0 0
      %3689 = vmatprep.subr.bf16.mxu0 0
      %3690 = vmatpush1.bf16.msra.mxu0 0
      %3691 = vmatprep.subr.bf16.mxu0 0
      %3692 = vmatpush1.bf16.msra.mxu0 0
      %3693 = vmatprep.subr.bf16.mxu0 0
      %3694 = vmatpush1.bf16.msra.mxu0 0
      %3695 = vmatprep.mubr.bf16.mxu0 0
      %3696 = vmatmul.mubr.bf16.gmra.mrb[0].mxu0 %v3649
      %v3697 = vpop.f32.mrb[0].mxu0
      %v3698 = vadd.f32 0.0, %v3697
      %v3699 = vpop.f32.mrb[0].mxu0
      %v3700 = vpop.f32.mrb[0].mxu0
      %v3701 = vadd.f32 0.0, %v3700
      %v3702 = vpop.f32.mrb[0].mxu0
      %3703 = vmatprep.mubr.bf16.mxu0 0
      %3704 = vmatmul.mubr.bf16.gmra.mrb[0].mxu0 %v3652
      %v3705 = vpop.f32.mrb[0].mxu0
      %v3706 = vadd.f32 0.0, %v3705
      %v3707 = vpop.f32.mrb[0].mxu0
      %v3708 = vpop.f32.mrb[0].mxu0
      %v3709 = vadd.f32 0.0, %v3708
      %v3710 = vpop.f32.mrb[0].mxu0
      %3711 = vmatprep.mubr.bf16.mxu0 0
      %3712 = vmatmul.mubr.bf16.gmra.mrb[0].mxu0 %v3655
      %v3713 = vpop.f32.mrb[0].mxu0
      %v3714 = vadd.f32 0.0, %v3713
      %v3715 = vpop.f32.mrb[0].mxu0
      %v3716 = vpop.f32.mrb[0].mxu0
      %v3717 = vadd.f32 0.0, %v3716
      %v3718 = vpop.f32.mrb[0].mxu0
      %3719 = vmatprep.mubr.bf16.mxu0 0
      %3720 = vmatmul.mubr.bf16.gmra.mrb[0].mxu0 %v3658
      %v3721 = vpop.f32.mrb[0].mxu0
      %v3722 = vadd.f32 0.0, %v3721
      %v3723 = vpop.f32.mrb[0].mxu0
      %v3724 = vpop.f32.mrb[0].mxu0
      %v3725 = vadd.f32 0.0, %v3724
      %v3726 = vpop.f32.mrb[0].mxu0
      %3727 = vdwg.mxu0
      %v3728 = vadd.f32 %v3498, %v3698
      %v3729 = vadd.f32 %v3499, %v3701
      %v3730 = vadd.f32 %v3500, %v3706
      %v3731 = vadd.f32 %v3501, %v3709
      %v3732 = vadd.f32 %v3502, %v3714
      %v3733 = vadd.f32 %v3503, %v3717
      %v3734 = vadd.f32 %v3504, %v3722
      %v3735 = vadd.f32 %v3505, %v3725
      %v3736 = vld [vmem:[%s345] sm:$0xe]
      %v3737 = vld [vmem:[%s345 + $0x8] sm:$0xe]
      %v3738 = vld [vmem:[%s345 + $0x10] sm:$0xe]
      %v3739 = vld [vmem:[%s345 + $0x18] sm:$0xe]
      %v3740 = vld [vmem:[%s345 + $0x20] sm:$0xe]
      %v3741 = vld [vmem:[%s345 + $0x28] sm:$0xe]
      %v3742 = vld [vmem:[%s345 + $0x30] sm:$0xe]
      %v3743 = vld [vmem:[%s345 + $0x38] sm:$0xe]
      %v3760 = vrot.slane %v3736, 5
      %v3761 = vrot.slane %v3760, 4
      %v3762 = vrot.slane %v3507, 5
      %v3763 = vsel %vm719, %v3761, %v3762
      %v3764 = vrot.slane %v3737, 5
      %v3765 = vrot.slane %v3764, 4
      %v3766 = vrot.slane %v3509, 5
      %v3767 = vsel %vm719, %v3765, %v3766
      %v3768 = vrot.slane %v3738, 5
      %v3769 = vrot.slane %v3768, 4
      %v3770 = vrot.slane %v3511, 5
      %v3771 = vsel %vm719, %v3769, %v3770
      %v3772 = vrot.slane %v3739, 5
      %v3773 = vrot.slane %v3772, 4
      %v3774 = vrot.slane %v3513, 5
      %v3775 = vsel %vm719, %v3773, %v3774
      %v3776 = vrot.slane %v3740, 5
      %v3777 = vrot.slane %v3776, 4
      %v3778 = vrot.slane %v3515, 5
      %v3779 = vsel %vm719, %v3777, %v3778
      %v3780 = vrot.slane %v3741, 5
      %v3781 = vrot.slane %v3780, 4
      %v3782 = vrot.slane %v3517, 5
      %v3783 = vsel %vm719, %v3781, %v3782
      %v3784 = vrot.slane %v3742, 5
      %v3785 = vrot.slane %v3784, 4
      %v3786 = vrot.slane %v3519, 5
      %v3787 = vsel %vm719, %v3785, %v3786
      %v3788 = vrot.slane %v3743, 5
      %v3789 = vrot.slane %v3788, 4
      %v3790 = vrot.slane %v3521, 5
      %v3791 = vsel %vm719, %v3789, %v3790
      %s3792 = scalar_lea.vmem %s3, 80
      %v3793 = vld [vmem:[%s3792] sm:$0xf]
      %v3794 = vunpack.c.l.b16 %v3763
      %v3795 = vunpack.c.l.b16 %v3767
      %v3796 = vunpack.c.l.b16 %v3771
      %v3797 = vunpack.c.l.b16 %v3775
      %v3798 = vunpack.c.l.b16 %v3779
      %v3799 = vunpack.c.l.b16 %v3783
      %v3800 = vunpack.c.l.b16 %v3787
      %v3801 = vunpack.c.l.b16 %v3791
      %v3802 = vpack.c.b16 %v3795, %v3794
      %v3803 = vpack.c.b16 %v3797, %v3796
      %v3804 = vpack.c.b16 %v3799, %v3798
      %v3805 = vpack.c.b16 %v3801, %v3800
      %v3807 = vsel %vm511, %v3802, 0
      %v3810 = vsel %vm511, %v3803, 0
      %v3813 = vsel %vm511, %v3804, 0
      %v3816 = vsel %vm511, %v3805, 0
      %v3819 = vsel %vm524, %v3793, 0
      %3821 = vmatprep.subr.bf16.mxu0 0
      %3822 = vmatpush1.bf16.msra.mxu0 %v3819
      %3823 = vmatprep.subr.bf16.mxu0 0
      %3824 = vmatpush1.bf16.msra.mxu0 0
      %3825 = vmatprep.subr.bf16.mxu0 0
      %3826 = vmatpush1.bf16.msra.mxu0 0
      %3827 = vmatprep.subr.bf16.mxu0 0
      %3828 = vmatpush1.bf16.msra.mxu0 0
      %3829 = vmatprep.subr.bf16.mxu0 0
      %3830 = vmatpush1.bf16.msra.mxu0 0
      %3831 = vmatprep.subr.bf16.mxu0 0
      %3832 = vmatpush1.bf16.msra.mxu0 0
      %3833 = vmatprep.subr.bf16.mxu0 0
      %3834 = vmatpush1.bf16.msra.mxu0 0
      %3835 = vmatprep.subr.bf16.mxu0 0
      %3836 = vmatpush1.bf16.msra.mxu0 0
      %3837 = vmatprep.subr.bf16.mxu0 0
      %3838 = vmatpush1.bf16.msra.mxu0 0
      %3839 = vmatprep.subr.bf16.mxu0 0
      %3840 = vmatpush1.bf16.msra.mxu0 0
      %3841 = vmatprep.subr.bf16.mxu0 0
      %3842 = vmatpush1.bf16.msra.mxu0 0
      %3843 = vmatprep.subr.bf16.mxu0 0
      %3844 = vmatpush1.bf16.msra.mxu0 0
      %3845 = vmatprep.subr.bf16.mxu0 0
      %3846 = vmatpush1.bf16.msra.mxu0 0
      %3847 = vmatprep.subr.bf16.mxu0 0
      %3848 = vmatpush1.bf16.msra.mxu0 0
      %3849 = vmatprep.subr.bf16.mxu0 0
      %3850 = vmatpush1.bf16.msra.mxu0 0
      %3851 = vmatprep.subr.bf16.mxu0 0
      %3852 = vmatpush1.bf16.msra.mxu0 0
      %3853 = vmatprep.mubr.bf16.mxu0 0
      %3854 = vmatmul.mubr.bf16.gmra.mrb[0].mxu0 %v3807
      %v3855 = vpop.f32.mrb[0].mxu0
      %v3856 = vadd.f32 0.0, %v3855
      %v3857 = vpop.f32.mrb[0].mxu0
      %v3858 = vpop.f32.mrb[0].mxu0
      %v3859 = vadd.f32 0.0, %v3858
      %v3860 = vpop.f32.mrb[0].mxu0
      %3861 = vmatprep.mubr.bf16.mxu0 0
      %3862 = vmatmul.mubr.bf16.gmra.mrb[0].mxu0 %v3810
      %v3863 = vpop.f32.mrb[0].mxu0
      %v3864 = vadd.f32 0.0, %v3863
      %v3865 = vpop.f32.mrb[0].mxu0
      %v3866 = vpop.f32.mrb[0].mxu0
      %v3867 = vadd.f32 0.0, %v3866
      %v3868 = vpop.f32.mrb[0].mxu0
      %3869 = vmatprep.mubr.bf16.mxu0 0
      %3870 = vmatmul.mubr.bf16.gmra.mrb[0].mxu0 %v3813
      %v3871 = vpop.f32.mrb[0].mxu0
      %v3872 = vadd.f32 0.0, %v3871
      %v3873 = vpop.f32.mrb[0].mxu0
      %v3874 = vpop.f32.mrb[0].mxu0
      %v3875 = vadd.f32 0.0, %v3874
      %v3876 = vpop.f32.mrb[0].mxu0
      %3877 = vmatprep.mubr.bf16.mxu0 0
      %3878 = vmatmul.mubr.bf16.gmra.mrb[0].mxu0 %v3816
      %v3879 = vpop.f32.mrb[0].mxu0
      %v3880 = vadd.f32 0.0, %v3879
      %v3881 = vpop.f32.mrb[0].mxu0
      %v3882 = vpop.f32.mrb[0].mxu0
      %v3883 = vadd.f32 0.0, %v3882
      %v3884 = vpop.f32.mrb[0].mxu0
      %3885 = vdwg.mxu0
      %v3886 = vadd.f32 %v3728, %v3856
      %v3887 = vadd.f32 %v3729, %v3859
      %v3888 = vadd.f32 %v3730, %v3864
      %v3889 = vadd.f32 %v3731, %v3867
      %v3890 = vadd.f32 %v3732, %v3872
      %v3891 = vadd.f32 %v3733, %v3875
      %v3892 = vadd.f32 %v3734, %v3880
      %v3893 = vadd.f32 %v3735, %v3883
      %s3894 = scalar_lea.vmem %s345, 8
      %v3895 = vld [vmem:[%s3894] sm:$0xf]
      %v3896 = vld [vmem:[%s3894 + $0x8] sm:$0xf]
      %v3897 = vld [vmem:[%s3894 + $0x10] sm:$0xf]
      %v3898 = vld [vmem:[%s3894 + $0x18] sm:$0xf]
      %v3899 = vld [vmem:[%s3894 + $0x20] sm:$0xf]
      %v3900 = vld [vmem:[%s3894 + $0x28] sm:$0xf]
      %v3901 = vld [vmem:[%s3894 + $0x30] sm:$0xf]
      %v3902 = vld [vmem:[%s3894 + $0x38] sm:$0xf]
      %s3903 = scalar_lea.vmem %s3, 84
      %v3904 = vld [vmem:[%s3903] sm:$0xf]
      %v3913 = vunpack.c.l.b16 %v3895
      %v3914 = vunpack.c.l.b16 %v3896
      %v3915 = vunpack.c.l.b16 %v3897
      %v3916 = vunpack.c.l.b16 %v3898
      %v3917 = vunpack.c.l.b16 %v3899
      %v3918 = vunpack.c.l.b16 %v3900
      %v3919 = vunpack.c.l.b16 %v3901
      %v3920 = vunpack.c.l.b16 %v3902
      %v3921 = vpack.c.b16 %v3914, %v3913
      %v3922 = vpack.c.b16 %v3916, %v3915
      %v3923 = vpack.c.b16 %v3918, %v3917
      %v3924 = vpack.c.b16 %v3920, %v3919
      %v3926 = vsel %vm511, %v3921, 0
      %v3929 = vsel %vm511, %v3922, 0
      %v3932 = vsel %vm511, %v3923, 0
      %v3935 = vsel %vm511, %v3924, 0
      %v3938 = vsel %vm524, %v3904, 0
      %3940 = vmatprep.subr.bf16.mxu0 0
      %3941 = vmatpush1.bf16.msra.mxu0 %v3938
      %3942 = vmatprep.subr.bf16.mxu0 0
      %3943 = vmatpush1.bf16.msra.mxu0 0
      %3944 = vmatprep.subr.bf16.mxu0 0
      %3945 = vmatpush1.bf16.msra.mxu0 0
      %3946 = vmatprep.subr.bf16.mxu0 0
      %3947 = vmatpush1.bf16.msra.mxu0 0
      %3948 = vmatprep.subr.bf16.mxu0 0
      %3949 = vmatpush1.bf16.msra.mxu0 0
      %3950 = vmatprep.subr.bf16.mxu0 0
      %3951 = vmatpush1.bf16.msra.mxu0 0
      %3952 = vmatprep.subr.bf16.mxu0 0
      %3953 = vmatpush1.bf16.msra.mxu0 0
      %3954 = vmatprep.subr.bf16.mxu0 0
      %3955 = vmatpush1.bf16.msra.mxu0 0
      %3956 = vmatprep.subr.bf16.mxu0 0
      %3957 = vmatpush1.bf16.msra.mxu0 0
      %3958 = vmatprep.subr.bf16.mxu0 0
      %3959 = vmatpush1.bf16.msra.mxu0 0
      %3960 = vmatprep.subr.bf16.mxu0 0
      %3961 = vmatpush1.bf16.msra.mxu0 0
      %3962 = vmatprep.subr.bf16.mxu0 0
      %3963 = vmatpush1.bf16.msra.mxu0 0
      %3964 = vmatprep.subr.bf16.mxu0 0
      %3965 = vmatpush1.bf16.msra.mxu0 0
      %3966 = vmatprep.subr.bf16.mxu0 0
      %3967 = vmatpush1.bf16.msra.mxu0 0
      %3968 = vmatprep.subr.bf16.mxu0 0
      %3969 = vmatpush1.bf16.msra.mxu0 0
      %3970 = vmatprep.subr.bf16.mxu0 0
      %3971 = vmatpush1.bf16.msra.mxu0 0
      %3972 = vmatprep.mubr.bf16.mxu0 0
      %3973 = vmatmul.mubr.bf16.gmra.mrb[0].mxu0 %v3926
      %v3974 = vpop.f32.mrb[0].mxu0
      %v3975 = vadd.f32 0.0, %v3974
      %v3976 = vpop.f32.mrb[0].mxu0
      %v3977 = vpop.f32.mrb[0].mxu0
      %v3978 = vadd.f32 0.0, %v3977
      %v3979 = vpop.f32.mrb[0].mxu0
      %3980 = vmatprep.mubr.bf16.mxu0 0
      %3981 = vmatmul.mubr.bf16.gmra.mrb[0].mxu0 %v3929
      %v3982 = vpop.f32.mrb[0].mxu0
      %v3983 = vadd.f32 0.0, %v3982
      %v3984 = vpop.f32.mrb[0].mxu0
      %v3985 = vpop.f32.mrb[0].mxu0
      %v3986 = vadd.f32 0.0, %v3985
      %v3987 = vpop.f32.mrb[0].mxu0
      %3988 = vmatprep.mubr.bf16.mxu0 0
      %3989 = vmatmul.mubr.bf16.gmra.mrb[0].mxu0 %v3932
      %v3990 = vpop.f32.mrb[0].mxu0
      %v3991 = vadd.f32 0.0, %v3990
      %v3992 = vpop.f32.mrb[0].mxu0
      %v3993 = vpop.f32.mrb[0].mxu0
      %v3994 = vadd.f32 0.0, %v3993
      %v3995 = vpop.f32.mrb[0].mxu0
      %3996 = vmatprep.mubr.bf16.mxu0 0
      %3997 = vmatmul.mubr.bf16.gmra.mrb[0].mxu0 %v3935
      %v3998 = vpop.f32.mrb[0].mxu0
      %v3999 = vadd.f32 0.0, %v3998
      %v4000 = vpop.f32.mrb[0].mxu0
      %v4001 = vpop.f32.mrb[0].mxu0
      %v4002 = vadd.f32 0.0, %v4001
      %v4003 = vpop.f32.mrb[0].mxu0
      %4004 = vdwg.mxu0
      %v4005 = vadd.f32 %v3886, %v3975
      %v4006 = vadd.f32 %v3887, %v3978
      %v4007 = vadd.f32 %v3888, %v3983
      %v4008 = vadd.f32 %v3889, %v3986
      %v4009 = vadd.f32 %v3890, %v3991
      %v4010 = vadd.f32 %v3891, %v3994
      %v4011 = vadd.f32 %v3892, %v3999
      %v4012 = vadd.f32 %v3893, %v4002
      %v4013 = vld [vmem:[%s3894] sm:$0xf]
      %v4014 = vld [vmem:[%s3894 + $0x4] sm:$0x1]
      %v4015 = vld [vmem:[%s3894 + $0x8] sm:$0xf]
      %v4016 = vld [vmem:[%s3894 + $0xc] sm:$0x1]
      %v4017 = vld [vmem:[%s3894 + $0x10] sm:$0xf]
      %v4018 = vld [vmem:[%s3894 + $0x14] sm:$0x1]
      %v4019 = vld [vmem:[%s3894 + $0x18] sm:$0xf]
      %v4020 = vld [vmem:[%s3894 + $0x1c] sm:$0x1]
      %v4021 = vld [vmem:[%s3894 + $0x20] sm:$0xf]
      %v4022 = vld [vmem:[%s3894 + $0x24] sm:$0x1]
      %v4023 = vld [vmem:[%s3894 + $0x28] sm:$0xf]
      %v4024 = vld [vmem:[%s3894 + $0x2c] sm:$0x1]
      %v4025 = vld [vmem:[%s3894 + $0x30] sm:$0xf]
      %v4026 = vld [vmem:[%s3894 + $0x34] sm:$0x1]
      %v4027 = vld [vmem:[%s3894 + $0x38] sm:$0xf]
      %v4028 = vld [vmem:[%s3894 + $0x3c] sm:$0x1]
      %v4030 = vshrl.u32 %v4013, 16
      %v4032 = vrot.slane %v4030, 4
      %v4033 = vshll.u32 %v4013, 16
      %v4035 = vrot.slane %v4033, 5
      %v4036 = vor.u32 %v4032, %v4035
      %v4037 = vrot.slane %v4036, 4
      %v4039 = vshll.u32 %v4014, 16
      %v4041 = vrot.slane %v4039, 5
      %v4042 = vsel %vm384, %v4037, %v4041
      %v4044 = vshrl.u32 %v4015, 16
      %v4046 = vrot.slane %v4044, 4
      %v4047 = vshll.u32 %v4015, 16
      %v4049 = vrot.slane %v4047, 5
      %v4050 = vor.u32 %v4046, %v4049
      %v4051 = vrot.slane %v4050, 4
      %v4053 = vshll.u32 %v4016, 16
      %v4055 = vrot.slane %v4053, 5
      %v4056 = vsel %vm384, %v4051, %v4055
      %v4058 = vshrl.u32 %v4017, 16
      %v4060 = vrot.slane %v4058, 4
      %v4061 = vshll.u32 %v4017, 16
      %v4063 = vrot.slane %v4061, 5
      %v4064 = vor.u32 %v4060, %v4063
      %v4065 = vrot.slane %v4064, 4
      %v4067 = vshll.u32 %v4018, 16
      %v4069 = vrot.slane %v4067, 5
      %v4070 = vsel %vm384, %v4065, %v4069
      %v4072 = vshrl.u32 %v4019, 16
      %v4074 = vrot.slane %v4072, 4
      %v4075 = vshll.u32 %v4019, 16
      %v4077 = vrot.slane %v4075, 5
      %v4078 = vor.u32 %v4074, %v4077
      %v4079 = vrot.slane %v4078, 4
      %v4081 = vshll.u32 %v4020, 16
      %v4083 = vrot.slane %v4081, 5
      %v4084 = vsel %vm384, %v4079, %v4083
      %v4086 = vshrl.u32 %v4021, 16
      %v4088 = vrot.slane %v4086, 4
      %v4089 = vshll.u32 %v4021, 16
      %v4091 = vrot.slane %v4089, 5
      %v4092 = vor.u32 %v4088, %v4091
      %v4093 = vrot.slane %v4092, 4
      %v4095 = vshll.u32 %v4022, 16
      %v4097 = vrot.slane %v4095, 5
      %v4098 = vsel %vm384, %v4093, %v4097
      %v4100 = vshrl.u32 %v4023, 16
      %v4102 = vrot.slane %v4100, 4
      %v4103 = vshll.u32 %v4023, 16
      %v4105 = vrot.slane %v4103, 5
      %v4106 = vor.u32 %v4102, %v4105
      %v4107 = vrot.slane %v4106, 4
      %v4109 = vshll.u32 %v4024, 16
      %v4111 = vrot.slane %v4109, 5
      %v4112 = vsel %vm384, %v4107, %v4111
      %v4114 = vshrl.u32 %v4025, 16
      %v4116 = vrot.slane %v4114, 4
      %v4117 = vshll.u32 %v4025, 16
      %v4119 = vrot.slane %v4117, 5
      %v4120 = vor.u32 %v4116, %v4119
      %v4121 = vrot.slane %v4120, 4
      %v4123 = vshll.u32 %v4026, 16
      %v4125 = vrot.slane %v4123, 5
      %v4126 = vsel %vm384, %v4121, %v4125
      %v4128 = vshrl.u32 %v4027, 16
      %v4130 = vrot.slane %v4128, 4
      %v4131 = vshll.u32 %v4027, 16
      %v4133 = vrot.slane %v4131, 5
      %v4134 = vor.u32 %v4130, %v4133
      %v4135 = vrot.slane %v4134, 4
      %v4137 = vshll.u32 %v4028, 16
      %v4139 = vrot.slane %v4137, 5
      %v4140 = vsel %vm384, %v4135, %v4139
      %s4141 = scalar_lea.vmem %s3, 88
      %v4142 = vld [vmem:[%s4141] sm:$0xf]
      %v4143 = vunpack.c.l.b16 %v4042
      %v4144 = vunpack.c.l.b16 %v4056
      %v4145 = vunpack.c.l.b16 %v4070
      %v4146 = vunpack.c.l.b16 %v4084
      %v4147 = vunpack.c.l.b16 %v4098
      %v4148 = vunpack.c.l.b16 %v4112
      %v4149 = vunpack.c.l.b16 %v4126
      %v4150 = vunpack.c.l.b16 %v4140
      %v4151 = vpack.c.b16 %v4144, %v4143
      %v4152 = vpack.c.b16 %v4146, %v4145
      %v4153 = vpack.c.b16 %v4148, %v4147
      %v4154 = vpack.c.b16 %v4150, %v4149
      %v4156 = vsel %vm511, %v4151, 0
      %v4159 = vsel %vm511, %v4152, 0
      %v4162 = vsel %vm511, %v4153, 0
      %v4165 = vsel %vm511, %v4154, 0
      %v4168 = vsel %vm524, %v4142, 0
      %4170 = vmatprep.subr.bf16.mxu0 0
      %4171 = vmatpush1.bf16.msra.mxu0 %v4168
      %4172 = vmatprep.subr.bf16.mxu0 0
      %4173 = vmatpush1.bf16.msra.mxu0 0
      %4174 = vmatprep.subr.bf16.mxu0 0
      %4175 = vmatpush1.bf16.msra.mxu0 0
      %4176 = vmatprep.subr.bf16.mxu0 0
      %4177 = vmatpush1.bf16.msra.mxu0 0
      %4178 = vmatprep.subr.bf16.mxu0 0
      %4179 = vmatpush1.bf16.msra.mxu0 0
      %4180 = vmatprep.subr.bf16.mxu0 0
      %4181 = vmatpush1.bf16.msra.mxu0 0
      %4182 = vmatprep.subr.bf16.mxu0 0
      %4183 = vmatpush1.bf16.msra.mxu0 0
      %4184 = vmatprep.subr.bf16.mxu0 0
      %4185 = vmatpush1.bf16.msra.mxu0 0
      %4186 = vmatprep.subr.bf16.mxu0 0
      %4187 = vmatpush1.bf16.msra.mxu0 0
      %4188 = vmatprep.subr.bf16.mxu0 0
      %4189 = vmatpush1.bf16.msra.mxu0 0
      %4190 = vmatprep.subr.bf16.mxu0 0
      %4191 = vmatpush1.bf16.msra.mxu0 0
      %4192 = vmatprep.subr.bf16.mxu0 0
      %4193 = vmatpush1.bf16.msra.mxu0 0
      %4194 = vmatprep.subr.bf16.mxu0 0
      %4195 = vmatpush1.bf16.msra.mxu0 0
      %4196 = vmatprep.subr.bf16.mxu0 0
      %4197 = vmatpush1.bf16.msra.mxu0 0
      %4198 = vmatprep.subr.bf16.mxu0 0
      %4199 = vmatpush1.bf16.msra.mxu0 0
      %4200 = vmatprep.subr.bf16.mxu0 0
      %4201 = vmatpush1.bf16.msra.mxu0 0
      %4202 = vmatprep.mubr.bf16.mxu0 0
      %4203 = vmatmul.mubr.bf16.gmra.mrb[0].mxu0 %v4156
      %v4204 = vpop.f32.mrb[0].mxu0
      %v4205 = vadd.f32 0.0, %v4204
      %v4206 = vpop.f32.mrb[0].mxu0
      %v4207 = vpop.f32.mrb[0].mxu0
      %v4208 = vadd.f32 0.0, %v4207
      %v4209 = vpop.f32.mrb[0].mxu0
      %4210 = vmatprep.mubr.bf16.mxu0 0
      %4211 = vmatmul.mubr.bf16.gmra.mrb[0].mxu0 %v4159
      %v4212 = vpop.f32.mrb[0].mxu0
      %v4213 = vadd.f32 0.0, %v4212
      %v4214 = vpop.f32.mrb[0].mxu0
      %v4215 = vpop.f32.mrb[0].mxu0
      %v4216 = vadd.f32 0.0, %v4215
      %v4217 = vpop.f32.mrb[0].mxu0
      %4218 = vmatprep.mubr.bf16.mxu0 0
      %4219 = vmatmul.mubr.bf16.gmra.mrb[0].mxu0 %v4162
      %v4220 = vpop.f32.mrb[0].mxu0
      %v4221 = vadd.f32 0.0, %v4220
      %v4222 = vpop.f32.mrb[0].mxu0
      %v4223 = vpop.f32.mrb[0].mxu0
      %v4224 = vadd.f32 0.0, %v4223
      %v4225 = vpop.f32.mrb[0].mxu0
      %4226 = vmatprep.mubr.bf16.mxu0 0
      %4227 = vmatmul.mubr.bf16.gmra.mrb[0].mxu0 %v4165
      %v4228 = vpop.f32.mrb[0].mxu0
      %v4229 = vadd.f32 0.0, %v4228
      %v4230 = vpop.f32.mrb[0].mxu0
      %v4231 = vpop.f32.mrb[0].mxu0
      %v4232 = vadd.f32 0.0, %v4231
      %v4233 = vpop.f32.mrb[0].mxu0
      %4234 = vdwg.mxu0
      %v4235 = vadd.f32 %v4005, %v4205
      %v4236 = vadd.f32 %v4006, %v4208
      %v4237 = vadd.f32 %v4007, %v4213
      %v4238 = vadd.f32 %v4008, %v4216
      %v4239 = vadd.f32 %v4009, %v4221
      %v4240 = vadd.f32 %v4010, %v4224
      %v4241 = vadd.f32 %v4011, %v4229
      %v4242 = vadd.f32 %v4012, %v4232
      %v4243 = vld [vmem:[%s3894] sm:$0xe]
      %v4244 = vld [vmem:[%s3894 + $0x8] sm:$0xe]
      %v4245 = vld [vmem:[%s3894 + $0x10] sm:$0xe]
      %v4246 = vld [vmem:[%s3894 + $0x18] sm:$0xe]
      %v4247 = vld [vmem:[%s3894 + $0x20] sm:$0xe]
      %v4248 = vld [vmem:[%s3894 + $0x28] sm:$0xe]
      %v4249 = vld [vmem:[%s3894 + $0x30] sm:$0xe]
      %v4250 = vld [vmem:[%s3894 + $0x38] sm:$0xe]
      %v4267 = vrot.slane %v4243, 5
      %v4268 = vrot.slane %v4267, 4
      %v4269 = vrot.slane %v4014, 5
      %v4270 = vsel %vm719, %v4268, %v4269
      %v4271 = vrot.slane %v4244, 5
      %v4272 = vrot.slane %v4271, 4
      %v4273 = vrot.slane %v4016, 5
      %v4274 = vsel %vm719, %v4272, %v4273
      %v4275 = vrot.slane %v4245, 5
      %v4276 = vrot.slane %v4275, 4
      %v4277 = vrot.slane %v4018, 5
      %v4278 = vsel %vm719, %v4276, %v4277
      %v4279 = vrot.slane %v4246, 5
      %v4280 = vrot.slane %v4279, 4
      %v4281 = vrot.slane %v4020, 5
      %v4282 = vsel %vm719, %v4280, %v4281
      %v4283 = vrot.slane %v4247, 5
      %v4284 = vrot.slane %v4283, 4
      %v4285 = vrot.slane %v4022, 5
      %v4286 = vsel %vm719, %v4284, %v4285
      %v4287 = vrot.slane %v4248, 5
      %v4288 = vrot.slane %v4287, 4
      %v4289 = vrot.slane %v4024, 5
      %v4290 = vsel %vm719, %v4288, %v4289
      %v4291 = vrot.slane %v4249, 5
      %v4292 = vrot.slane %v4291, 4
      %v4293 = vrot.slane %v4026, 5
      %v4294 = vsel %vm719, %v4292, %v4293
      %v4295 = vrot.slane %v4250, 5
      %v4296 = vrot.slane %v4295, 4
      %v4297 = vrot.slane %v4028, 5
      %v4298 = vsel %vm719, %v4296, %v4297
      %s4299 = scalar_lea.vmem %s3, 92
      %v4300 = vld [vmem:[%s4299] sm:$0xf]
      %v4301 = vunpack.c.l.b16 %v4270
      %v4302 = vunpack.c.l.b16 %v4274
      %v4303 = vunpack.c.l.b16 %v4278
      %v4304 = vunpack.c.l.b16 %v4282
      %v4305 = vunpack.c.l.b16 %v4286
      %v4306 = vunpack.c.l.b16 %v4290
      %v4307 = vunpack.c.l.b16 %v4294
      %v4308 = vunpack.c.l.b16 %v4298
      %v4309 = vpack.c.b16 %v4302, %v4301
      %v4310 = vpack.c.b16 %v4304, %v4303
      %v4311 = vpack.c.b16 %v4306, %v4305
      %v4312 = vpack.c.b16 %v4308, %v4307
      %v4314 = vsel %vm511, %v4309, 0
      %v4317 = vsel %vm511, %v4310, 0
      %v4320 = vsel %vm511, %v4311, 0
      %v4323 = vsel %vm511, %v4312, 0
      %v4326 = vsel %vm524, %v4300, 0
      %4328 = vmatprep.subr.bf16.mxu0 0
      %4329 = vmatpush1.bf16.msra.mxu0 %v4326
      %4330 = vmatprep.subr.bf16.mxu0 0
      %4331 = vmatpush1.bf16.msra.mxu0 0
      %4332 = vmatprep.subr.bf16.mxu0 0
      %4333 = vmatpush1.bf16.msra.mxu0 0
      %4334 = vmatprep.subr.bf16.mxu0 0
      %4335 = vmatpush1.bf16.msra.mxu0 0
      %4336 = vmatprep.subr.bf16.mxu0 0
      %4337 = vmatpush1.bf16.msra.mxu0 0
      %4338 = vmatprep.subr.bf16.mxu0 0
      %4339 = vmatpush1.bf16.msra.mxu0 0
      %4340 = vmatprep.subr.bf16.mxu0 0
      %4341 = vmatpush1.bf16.msra.mxu0 0
      %4342 = vmatprep.subr.bf16.mxu0 0
      %4343 = vmatpush1.bf16.msra.mxu0 0
      %4344 = vmatprep.subr.bf16.mxu0 0
      %4345 = vmatpush1.bf16.msra.mxu0 0
      %4346 = vmatprep.subr.bf16.mxu0 0
      %4347 = vmatpush1.bf16.msra.mxu0 0
      %4348 = vmatprep.subr.bf16.mxu0 0
      %4349 = vmatpush1.bf16.msra.mxu0 0
      %4350 = vmatprep.subr.bf16.mxu0 0
      %4351 = vmatpush1.bf16.msra.mxu0 0
      %4352 = vmatprep.subr.bf16.mxu0 0
      %4353 = vmatpush1.bf16.msra.mxu0 0
      %4354 = vmatprep.subr.bf16.mxu0 0
      %4355 = vmatpush1.bf16.msra.mxu0 0
      %4356 = vmatprep.subr.bf16.mxu0 0
      %4357 = vmatpush1.bf16.msra.mxu0 0
      %4358 = vmatprep.subr.bf16.mxu0 0
      %4359 = vmatpush1.bf16.msra.mxu0 0
      %4360 = vmatprep.mubr.bf16.mxu0 0
      %4361 = vmatmul.mubr.bf16.gmra.mrb[0].mxu0 %v4314
      %v4362 = vpop.f32.mrb[0].mxu0
      %v4363 = vadd.f32 0.0, %v4362
      %v4364 = vpop.f32.mrb[0].mxu0
      %v4365 = vpop.f32.mrb[0].mxu0
      %v4366 = vadd.f32 0.0, %v4365
      %v4367 = vpop.f32.mrb[0].mxu0
      %4368 = vmatprep.mubr.bf16.mxu0 0
      %4369 = vmatmul.mubr.bf16.gmra.mrb[0].mxu0 %v4317
      %v4370 = vpop.f32.mrb[0].mxu0
      %v4371 = vadd.f32 0.0, %v4370
      %v4372 = vpop.f32.mrb[0].mxu0
      %v4373 = vpop.f32.mrb[0].mxu0
      %v4374 = vadd.f32 0.0, %v4373
      %v4375 = vpop.f32.mrb[0].mxu0
      %4376 = vmatprep.mubr.bf16.mxu0 0
      %4377 = vmatmul.mubr.bf16.gmra.mrb[0].mxu0 %v4320
      %v4378 = vpop.f32.mrb[0].mxu0
      %v4379 = vadd.f32 0.0, %v4378
      %v4380 = vpop.f32.mrb[0].mxu0
      %v4381 = vpop.f32.mrb[0].mxu0
      %v4382 = vadd.f32 0.0, %v4381
      %v4383 = vpop.f32.mrb[0].mxu0
      %4384 = vmatprep.mubr.bf16.mxu0 0
      %4385 = vmatmul.mubr.bf16.gmra.mrb[0].mxu0 %v4323
      %v4386 = vpop.f32.mrb[0].mxu0
      %v4387 = vadd.f32 0.0, %v4386
      %v4388 = vpop.f32.mrb[0].mxu0
      %v4389 = vpop.f32.mrb[0].mxu0
      %v4390 = vadd.f32 0.0, %v4389
      %v4391 = vpop.f32.mrb[0].mxu0
      %4392 = vdwg.mxu0
      %v4393 = vadd.f32 %v4235, %v4363
      %v4394 = vadd.f32 %v4236, %v4366
      %v4395 = vadd.f32 %v4237, %v4371
      %v4396 = vadd.f32 %v4238, %v4374
      %v4397 = vadd.f32 %v4239, %v4379
      %v4398 = vadd.f32 %v4240, %v4382
      %v4399 = vadd.f32 %v4241, %v4387
      %v4400 = vadd.f32 %v4242, %v4390
      %s4401 = scalar_lea.vmem %s345, 16
      %v4402 = vld [vmem:[%s4401] sm:$0xf]
      %v4403 = vld [vmem:[%s4401 + $0x8] sm:$0xf]
      %v4404 = vld [vmem:[%s4401 + $0x10] sm:$0xf]
      %v4405 = vld [vmem:[%s4401 + $0x18] sm:$0xf]
      %v4406 = vld [vmem:[%s4401 + $0x20] sm:$0xf]
      %v4407 = vld [vmem:[%s4401 + $0x28] sm:$0xf]
      %v4408 = vld [vmem:[%s4401 + $0x30] sm:$0xf]
      %v4409 = vld [vmem:[%s4401 + $0x38] sm:$0xf]
      %s4410 = scalar_lea.vmem %s3, 96
      %v4411 = vld [vmem:[%s4410] sm:$0xf]
      %v4420 = vunpack.c.l.b16 %v4402
      %v4421 = vunpack.c.l.b16 %v4403
      %v4422 = vunpack.c.l.b16 %v4404
      %v4423 = vunpack.c.l.b16 %v4405
      %v4424 = vunpack.c.l.b16 %v4406
      %v4425 = vunpack.c.l.b16 %v4407
      %v4426 = vunpack.c.l.b16 %v4408
      %v4427 = vunpack.c.l.b16 %v4409
      %v4428 = vpack.c.b16 %v4421, %v4420
      %v4429 = vpack.c.b16 %v4423, %v4422
      %v4430 = vpack.c.b16 %v4425, %v4424
      %v4431 = vpack.c.b16 %v4427, %v4426
      %v4433 = vsel %vm511, %v4428, 0
      %v4436 = vsel %vm511, %v4429, 0
      %v4439 = vsel %vm511, %v4430, 0
      %v4442 = vsel %vm511, %v4431, 0
      %v4445 = vsel %vm524, %v4411, 0
      %4447 = vmatprep.subr.bf16.mxu0 0
      %4448 = vmatpush1.bf16.msra.mxu0 %v4445
      %4449 = vmatprep.subr.bf16.mxu0 0
      %4450 = vmatpush1.bf16.msra.mxu0 0
      %4451 = vmatprep.subr.bf16.mxu0 0
      %4452 = vmatpush1.bf16.msra.mxu0 0
      %4453 = vmatprep.subr.bf16.mxu0 0
      %4454 = vmatpush1.bf16.msra.mxu0 0
      %4455 = vmatprep.subr.bf16.mxu0 0
      %4456 = vmatpush1.bf16.msra.mxu0 0
      %4457 = vmatprep.subr.bf16.mxu0 0
      %4458 = vmatpush1.bf16.msra.mxu0 0
      %4459 = vmatprep.subr.bf16.mxu0 0
      %4460 = vmatpush1.bf16.msra.mxu0 0
      %4461 = vmatprep.subr.bf16.mxu0 0
      %4462 = vmatpush1.bf16.msra.mxu0 0
      %4463 = vmatprep.subr.bf16.mxu0 0
      %4464 = vmatpush1.bf16.msra.mxu0 0
      %4465 = vmatprep.subr.bf16.mxu0 0
      %4466 = vmatpush1.bf16.msra.mxu0 0
      %4467 = vmatprep.subr.bf16.mxu0 0
      %4468 = vmatpush1.bf16.msra.mxu0 0
      %4469 = vmatprep.subr.bf16.mxu0 0
      %4470 = vmatpush1.bf16.msra.mxu0 0
      %4471 = vmatprep.subr.bf16.mxu0 0
      %4472 = vmatpush1.bf16.msra.mxu0 0
      %4473 = vmatprep.subr.bf16.mxu0 0
      %4474 = vmatpush1.bf16.msra.mxu0 0
      %4475 = vmatprep.subr.bf16.mxu0 0
      %4476 = vmatpush1.bf16.msra.mxu0 0
      %4477 = vmatprep.subr.bf16.mxu0 0
      %4478 = vmatpush1.bf16.msra.mxu0 0
      %4479 = vmatprep.mubr.bf16.mxu0 0
      %4480 = vmatmul.mubr.bf16.gmra.mrb[0].mxu0 %v4433
      %v4481 = vpop.f32.mrb[0].mxu0
      %v4482 = vadd.f32 0.0, %v4481
      %v4483 = vpop.f32.mrb[0].mxu0
      %v4484 = vpop.f32.mrb[0].mxu0
      %v4485 = vadd.f32 0.0, %v4484
      %v4486 = vpop.f32.mrb[0].mxu0
      %4487 = vmatprep.mubr.bf16.mxu0 0
      %4488 = vmatmul.mubr.bf16.gmra.mrb[0].mxu0 %v4436
      %v4489 = vpop.f32.mrb[0].mxu0
      %v4490 = vadd.f32 0.0, %v4489
      %v4491 = vpop.f32.mrb[0].mxu0
      %v4492 = vpop.f32.mrb[0].mxu0
      %v4493 = vadd.f32 0.0, %v4492
      %v4494 = vpop.f32.mrb[0].mxu0
      %4495 = vmatprep.mubr.bf16.mxu0 0
      %4496 = vmatmul.mubr.bf16.gmra.mrb[0].mxu0 %v4439
      %v4497 = vpop.f32.mrb[0].mxu0
      %v4498 = vadd.f32 0.0, %v4497
      %v4499 = vpop.f32.mrb[0].mxu0
      %v4500 = vpop.f32.mrb[0].mxu0
      %v4501 = vadd.f32 0.0, %v4500
      %v4502 = vpop.f32.mrb[0].mxu0
      %4503 = vmatprep.mubr.bf16.mxu0 0
      %4504 = vmatmul.mubr.bf16.gmra.mrb[0].mxu0 %v4442
      %v4505 = vpop.f32.mrb[0].mxu0
      %v4506 = vadd.f32 0.0, %v4505
      %v4507 = vpop.f32.mrb[0].mxu0
      %v4508 = vpop.f32.mrb[0].mxu0
      %v4509 = vadd.f32 0.0, %v4508
      %v4510 = vpop.f32.mrb[0].mxu0
      %4511 = vdwg.mxu0
      %v4512 = vadd.f32 %v4393, %v4482
      %v4513 = vadd.f32 %v4394, %v4485
      %v4514 = vadd.f32 %v4395, %v4490
      %v4515 = vadd.f32 %v4396, %v4493
      %v4516 = vadd.f32 %v4397, %v4498
      %v4517 = vadd.f32 %v4398, %v4501
      %v4518 = vadd.f32 %v4399, %v4506
      %v4519 = vadd.f32 %v4400, %v4509
      %v4520 = vld [vmem:[%s4401] sm:$0xf]
      %v4521 = vld [vmem:[%s4401 + $0x4] sm:$0x1]
      %v4522 = vld [vmem:[%s4401 + $0x8] sm:$0xf]
      %v4523 = vld [vmem:[%s4401 + $0xc] sm:$0x1]
      %v4524 = vld [vmem:[%s4401 + $0x10] sm:$0xf]
      %v4525 = vld [vmem:[%s4401 + $0x14] sm:$0x1]
      %v4526 = vld [vmem:[%s4401 + $0x18] sm:$0xf]
      %v4527 = vld [vmem:[%s4401 + $0x1c] sm:$0x1]
      %v4528 = vld [vmem:[%s4401 + $0x20] sm:$0xf]
      %v4529 = vld [vmem:[%s4401 + $0x24] sm:$0x1]
      %v4530 = vld [vmem:[%s4401 + $0x28] sm:$0xf]
      %v4531 = vld [vmem:[%s4401 + $0x2c] sm:$0x1]
      %v4532 = vld [vmem:[%s4401 + $0x30] sm:$0xf]
      %v4533 = vld [vmem:[%s4401 + $0x34] sm:$0x1]
      %v4534 = vld [vmem:[%s4401 + $0x38] sm:$0xf]
      %v4535 = vld [vmem:[%s4401 + $0x3c] sm:$0x1]
      %v4537 = vshrl.u32 %v4520, 16
      %v4539 = vrot.slane %v4537, 4
      %v4540 = vshll.u32 %v4520, 16
      %v4542 = vrot.slane %v4540, 5
      %v4543 = vor.u32 %v4539, %v4542
      %v4544 = vrot.slane %v4543, 4
      %v4546 = vshll.u32 %v4521, 16
      %v4548 = vrot.slane %v4546, 5
      %v4549 = vsel %vm384, %v4544, %v4548
      %v4551 = vshrl.u32 %v4522, 16
      %v4553 = vrot.slane %v4551, 4
      %v4554 = vshll.u32 %v4522, 16
      %v4556 = vrot.slane %v4554, 5
      %v4557 = vor.u32 %v4553, %v4556
      %v4558 = vrot.slane %v4557, 4
      %v4560 = vshll.u32 %v4523, 16
      %v4562 = vrot.slane %v4560, 5
      %v4563 = vsel %vm384, %v4558, %v4562
      %v4565 = vshrl.u32 %v4524, 16
      %v4567 = vrot.slane %v4565, 4
      %v4568 = vshll.u32 %v4524, 16
      %v4570 = vrot.slane %v4568, 5
      %v4571 = vor.u32 %v4567, %v4570
      %v4572 = vrot.slane %v4571, 4
      %v4574 = vshll.u32 %v4525, 16
      %v4576 = vrot.slane %v4574, 5
      %v4577 = vsel %vm384, %v4572, %v4576
      %v4579 = vshrl.u32 %v4526, 16
      %v4581 = vrot.slane %v4579, 4
      %v4582 = vshll.u32 %v4526, 16
      %v4584 = vrot.slane %v4582, 5
      %v4585 = vor.u32 %v4581, %v4584
      %v4586 = vrot.slane %v4585, 4
      %v4588 = vshll.u32 %v4527, 16
      %v4590 = vrot.slane %v4588, 5
      %v4591 = vsel %vm384, %v4586, %v4590
      %v4593 = vshrl.u32 %v4528, 16
      %v4595 = vrot.slane %v4593, 4
      %v4596 = vshll.u32 %v4528, 16
      %v4598 = vrot.slane %v4596, 5
      %v4599 = vor.u32 %v4595, %v4598
      %v4600 = vrot.slane %v4599, 4
      %v4602 = vshll.u32 %v4529, 16
      %v4604 = vrot.slane %v4602, 5
      %v4605 = vsel %vm384, %v4600, %v4604
      %v4607 = vshrl.u32 %v4530, 16
      %v4609 = vrot.slane %v4607, 4
      %v4610 = vshll.u32 %v4530, 16
      %v4612 = vrot.slane %v4610, 5
      %v4613 = vor.u32 %v4609, %v4612
      %v4614 = vrot.slane %v4613, 4
      %v4616 = vshll.u32 %v4531, 16
      %v4618 = vrot.slane %v4616, 5
      %v4619 = vsel %vm384, %v4614, %v4618
      %v4621 = vshrl.u32 %v4532, 16
      %v4623 = vrot.slane %v4621, 4
      %v4624 = vshll.u32 %v4532, 16
      %v4626 = vrot.slane %v4624, 5
      %v4627 = vor.u32 %v4623, %v4626
      %v4628 = vrot.slane %v4627, 4
      %v4630 = vshll.u32 %v4533, 16
      %v4632 = vrot.slane %v4630, 5
      %v4633 = vsel %vm384, %v4628, %v4632
      %v4635 = vshrl.u32 %v4534, 16
      %v4637 = vrot.slane %v4635, 4
      %v4638 = vshll.u32 %v4534, 16
      %v4640 = vrot.slane %v4638, 5
      %v4641 = vor.u32 %v4637, %v4640
      %v4642 = vrot.slane %v4641, 4
      %v4644 = vshll.u32 %v4535, 16
      %v4646 = vrot.slane %v4644, 5
      %v4647 = vsel %vm384, %v4642, %v4646
      %s4648 = scalar_lea.vmem %s3, 100
      %v4649 = vld [vmem:[%s4648] sm:$0xf]
      %v4650 = vunpack.c.l.b16 %v4549
      %v4651 = vunpack.c.l.b16 %v4563
      %v4652 = vunpack.c.l.b16 %v4577
      %v4653 = vunpack.c.l.b16 %v4591
      %v4654 = vunpack.c.l.b16 %v4605
      %v4655 = vunpack.c.l.b16 %v4619
      %v4656 = vunpack.c.l.b16 %v4633
      %v4657 = vunpack.c.l.b16 %v4647
      %v4658 = vpack.c.b16 %v4651, %v4650
      %v4659 = vpack.c.b16 %v4653, %v4652
      %v4660 = vpack.c.b16 %v4655, %v4654
      %v4661 = vpack.c.b16 %v4657, %v4656
      %v4663 = vsel %vm511, %v4658, 0
      %v4666 = vsel %vm511, %v4659, 0
      %v4669 = vsel %vm511, %v4660, 0
      %v4672 = vsel %vm511, %v4661, 0
      %v4675 = vsel %vm524, %v4649, 0
      %4677 = vmatprep.subr.bf16.mxu0 0
      %4678 = vmatpush1.bf16.msra.mxu0 %v4675
      %4679 = vmatprep.subr.bf16.mxu0 0
      %4680 = vmatpush1.bf16.msra.mxu0 0
      %4681 = vmatprep.subr.bf16.mxu0 0
      %4682 = vmatpush1.bf16.msra.mxu0 0
      %4683 = vmatprep.subr.bf16.mxu0 0
      %4684 = vmatpush1.bf16.msra.mxu0 0
      %4685 = vmatprep.subr.bf16.mxu0 0
      %4686 = vmatpush1.bf16.msra.mxu0 0
      %4687 = vmatprep.subr.bf16.mxu0 0
      %4688 = vmatpush1.bf16.msra.mxu0 0
      %4689 = vmatprep.subr.bf16.mxu0 0
      %4690 = vmatpush1.bf16.msra.mxu0 0
      %4691 = vmatprep.subr.bf16.mxu0 0
      %4692 = vmatpush1.bf16.msra.mxu0 0
      %4693 = vmatprep.subr.bf16.mxu0 0
      %4694 = vmatpush1.bf16.msra.mxu0 0
      %4695 = vmatprep.subr.bf16.mxu0 0
      %4696 = vmatpush1.bf16.msra.mxu0 0
      %4697 = vmatprep.subr.bf16.mxu0 0
      %4698 = vmatpush1.bf16.msra.mxu0 0
      %4699 = vmatprep.subr.bf16.mxu0 0
      %4700 = vmatpush1.bf16.msra.mxu0 0
      %4701 = vmatprep.subr.bf16.mxu0 0
      %4702 = vmatpush1.bf16.msra.mxu0 0
      %4703 = vmatprep.subr.bf16.mxu0 0
      %4704 = vmatpush1.bf16.msra.mxu0 0
      %4705 = vmatprep.subr.bf16.mxu0 0
      %4706 = vmatpush1.bf16.msra.mxu0 0
      %4707 = vmatprep.subr.bf16.mxu0 0
      %4708 = vmatpush1.bf16.msra.mxu0 0
      %4709 = vmatprep.mubr.bf16.mxu0 0
      %4710 = vmatmul.mubr.bf16.gmra.mrb[0].mxu0 %v4663
      %v4711 = vpop.f32.mrb[0].mxu0
      %v4712 = vadd.f32 0.0, %v4711
      %v4713 = vpop.f32.mrb[0].mxu0
      %v4714 = vpop.f32.mrb[0].mxu0
      %v4715 = vadd.f32 0.0, %v4714
      %v4716 = vpop.f32.mrb[0].mxu0
      %4717 = vmatprep.mubr.bf16.mxu0 0
      %4718 = vmatmul.mubr.bf16.gmra.mrb[0].mxu0 %v4666
      %v4719 = vpop.f32.mrb[0].mxu0
      %v4720 = vadd.f32 0.0, %v4719
      %v4721 = vpop.f32.mrb[0].mxu0
      %v4722 = vpop.f32.mrb[0].mxu0
      %v4723 = vadd.f32 0.0, %v4722
      %v4724 = vpop.f32.mrb[0].mxu0
      %4725 = vmatprep.mubr.bf16.mxu0 0
      %4726 = vmatmul.mubr.bf16.gmra.mrb[0].mxu0 %v4669
      %v4727 = vpop.f32.mrb[0].mxu0
      %v4728 = vadd.f32 0.0, %v4727
      %v4729 = vpop.f32.mrb[0].mxu0
      %v4730 = vpop.f32.mrb[0].mxu0
      %v4731 = vadd.f32 0.0, %v4730
      %v4732 = vpop.f32.mrb[0].mxu0
      %4733 = vmatprep.mubr.bf16.mxu0 0
      %4734 = vmatmul.mubr.bf16.gmra.mrb[0].mxu0 %v4672
      %v4735 = vpop.f32.mrb[0].mxu0
      %v4736 = vadd.f32 0.0, %v4735
      %v4737 = vpop.f32.mrb[0].mxu0
      %v4738 = vpop.f32.mrb[0].mxu0
      %v4739 = vadd.f32 0.0, %v4738
      %v4740 = vpop.f32.mrb[0].mxu0
      %4741 = vdwg.mxu0
      %v4742 = vadd.f32 %v4512, %v4712
      %v4743 = vadd.f32 %v4513, %v4715
      %v4744 = vadd.f32 %v4514, %v4720
      %v4745 = vadd.f32 %v4515, %v4723
      %v4746 = vadd.f32 %v4516, %v4728
      %v4747 = vadd.f32 %v4517, %v4731
      %v4748 = vadd.f32 %v4518, %v4736
      %v4749 = vadd.f32 %v4519, %v4739
      %v4750 = vld [vmem:[%s4401] sm:$0xe]
      %v4751 = vld [vmem:[%s4401 + $0x8] sm:$0xe]
      %v4752 = vld [vmem:[%s4401 + $0x10] sm:$0xe]
      %v4753 = vld [vmem:[%s4401 + $0x18] sm:$0xe]
      %v4754 = vld [vmem:[%s4401 + $0x20] sm:$0xe]
      %v4755 = vld [vmem:[%s4401 + $0x28] sm:$0xe]
      %v4756 = vld [vmem:[%s4401 + $0x30] sm:$0xe]
      %v4757 = vld [vmem:[%s4401 + $0x38] sm:$0xe]
      %v4774 = vrot.slane %v4750, 5
      %v4775 = vrot.slane %v4774, 4
      %v4776 = vrot.slane %v4521, 5
      %v4777 = vsel %vm719, %v4775, %v4776
      %v4778 = vrot.slane %v4751, 5
      %v4779 = vrot.slane %v4778, 4
      %v4780 = vrot.slane %v4523, 5
      %v4781 = vsel %vm719, %v4779, %v4780
      %v4782 = vrot.slane %v4752, 5
      %v4783 = vrot.slane %v4782, 4
      %v4784 = vrot.slane %v4525, 5
      %v4785 = vsel %vm719, %v4783, %v4784
      %v4786 = vrot.slane %v4753, 5
      %v4787 = vrot.slane %v4786, 4
      %v4788 = vrot.slane %v4527, 5
      %v4789 = vsel %vm719, %v4787, %v4788
      %v4790 = vrot.slane %v4754, 5
      %v4791 = vrot.slane %v4790, 4
      %v4792 = vrot.slane %v4529, 5
      %v4793 = vsel %vm719, %v4791, %v4792
      %v4794 = vrot.slane %v4755, 5
      %v4795 = vrot.slane %v4794, 4
      %v4796 = vrot.slane %v4531, 5
      %v4797 = vsel %vm719, %v4795, %v4796
      %v4798 = vrot.slane %v4756, 5
      %v4799 = vrot.slane %v4798, 4
      %v4800 = vrot.slane %v4533, 5
      %v4801 = vsel %vm719, %v4799, %v4800
      %v4802 = vrot.slane %v4757, 5
      %v4803 = vrot.slane %v4802, 4
      %v4804 = vrot.slane %v4535, 5
      %v4805 = vsel %vm719, %v4803, %v4804
      %s4806 = scalar_lea.vmem %s3, 104
      %v4807 = vld [vmem:[%s4806] sm:$0xf]
      %v4808 = vunpack.c.l.b16 %v4777
      %v4809 = vunpack.c.l.b16 %v4781
      %v4810 = vunpack.c.l.b16 %v4785
      %v4811 = vunpack.c.l.b16 %v4789
      %v4812 = vunpack.c.l.b16 %v4793
      %v4813 = vunpack.c.l.b16 %v4797
      %v4814 = vunpack.c.l.b16 %v4801
      %v4815 = vunpack.c.l.b16 %v4805
      %v4816 = vpack.c.b16 %v4809, %v4808
      %v4817 = vpack.c.b16 %v4811, %v4810
      %v4818 = vpack.c.b16 %v4813, %v4812
      %v4819 = vpack.c.b16 %v4815, %v4814
      %v4821 = vsel %vm511, %v4816, 0
      %v4824 = vsel %vm511, %v4817, 0
      %v4827 = vsel %vm511, %v4818, 0
      %v4830 = vsel %vm511, %v4819, 0
      %v4833 = vsel %vm524, %v4807, 0
      %4835 = vmatprep.subr.bf16.mxu0 0
      %4836 = vmatpush1.bf16.msra.mxu0 %v4833
      %4837 = vmatprep.subr.bf16.mxu0 0
      %4838 = vmatpush1.bf16.msra.mxu0 0
      %4839 = vmatprep.subr.bf16.mxu0 0
      %4840 = vmatpush1.bf16.msra.mxu0 0
      %4841 = vmatprep.subr.bf16.mxu0 0
      %4842 = vmatpush1.bf16.msra.mxu0 0
      %4843 = vmatprep.subr.bf16.mxu0 0
      %4844 = vmatpush1.bf16.msra.mxu0 0
      %4845 = vmatprep.subr.bf16.mxu0 0
      %4846 = vmatpush1.bf16.msra.mxu0 0
      %4847 = vmatprep.subr.bf16.mxu0 0
      %4848 = vmatpush1.bf16.msra.mxu0 0
      %4849 = vmatprep.subr.bf16.mxu0 0
      %4850 = vmatpush1.bf16.msra.mxu0 0
      %4851 = vmatprep.subr.bf16.mxu0 0
      %4852 = vmatpush1.bf16.msra.mxu0 0
      %4853 = vmatprep.subr.bf16.mxu0 0
      %4854 = vmatpush1.bf16.msra.mxu0 0
      %4855 = vmatprep.subr.bf16.mxu0 0
      %4856 = vmatpush1.bf16.msra.mxu0 0
      %4857 = vmatprep.subr.bf16.mxu0 0
      %4858 = vmatpush1.bf16.msra.mxu0 0
      %4859 = vmatprep.subr.bf16.mxu0 0
      %4860 = vmatpush1.bf16.msra.mxu0 0
      %4861 = vmatprep.subr.bf16.mxu0 0
      %4862 = vmatpush1.bf16.msra.mxu0 0
      %4863 = vmatprep.subr.bf16.mxu0 0
      %4864 = vmatpush1.bf16.msra.mxu0 0
      %4865 = vmatprep.subr.bf16.mxu0 0
      %4866 = vmatpush1.bf16.msra.mxu0 0
      %4867 = vmatprep.mubr.bf16.mxu0 0
      %4868 = vmatmul.mubr.bf16.gmra.mrb[0].mxu0 %v4821
      %v4869 = vpop.f32.mrb[0].mxu0
      %v4870 = vadd.f32 0.0, %v4869
      %v4871 = vpop.f32.mrb[0].mxu0
      %v4872 = vpop.f32.mrb[0].mxu0
      %v4873 = vadd.f32 0.0, %v4872
      %v4874 = vpop.f32.mrb[0].mxu0
      %4875 = vmatprep.mubr.bf16.mxu0 0
      %4876 = vmatmul.mubr.bf16.gmra.mrb[0].mxu0 %v4824
      %v4877 = vpop.f32.mrb[0].mxu0
      %v4878 = vadd.f32 0.0, %v4877
      %v4879 = vpop.f32.mrb[0].mxu0
      %v4880 = vpop.f32.mrb[0].mxu0
      %v4881 = vadd.f32 0.0, %v4880
      %v4882 = vpop.f32.mrb[0].mxu0
      %4883 = vmatprep.mubr.bf16.mxu0 0
      %4884 = vmatmul.mubr.bf16.gmra.mrb[0].mxu0 %v4827
      %v4885 = vpop.f32.mrb[0].mxu0
      %v4886 = vadd.f32 0.0, %v4885
      %v4887 = vpop.f32.mrb[0].mxu0
      %v4888 = vpop.f32.mrb[0].mxu0
      %v4889 = vadd.f32 0.0, %v4888
      %v4890 = vpop.f32.mrb[0].mxu0
      %4891 = vmatprep.mubr.bf16.mxu0 0
      %4892 = vmatmul.mubr.bf16.gmra.mrb[0].mxu0 %v4830
      %v4893 = vpop.f32.mrb[0].mxu0
      %v4894 = vadd.f32 0.0, %v4893
      %v4895 = vpop.f32.mrb[0].mxu0
      %v4896 = vpop.f32.mrb[0].mxu0
      %v4897 = vadd.f32 0.0, %v4896
      %v4898 = vpop.f32.mrb[0].mxu0
      %4899 = vdwg.mxu0
      %v4900 = vadd.f32 %v4742, %v4870
      %v4901 = vadd.f32 %v4743, %v4873
      %v4902 = vadd.f32 %v4744, %v4878
      %v4903 = vadd.f32 %v4745, %v4881
      %v4904 = vadd.f32 %v4746, %v4886
      %v4905 = vadd.f32 %v4747, %v4889
      %v4906 = vadd.f32 %v4748, %v4894
      %v4907 = vadd.f32 %v4749, %v4897
      %v4908 = vpack.c.bf16 %v4900, %v4900
      %v4909 = vpack.c.bf16 %v4901, %v4901
      %v4910 = vpack.c.bf16 %v4902, %v4902
      %v4911 = vpack.c.bf16 %v4903, %v4903
      %v4912 = vpack.c.bf16 %v4904, %v4904
      %v4913 = vpack.c.bf16 %v4905, %v4905
      %v4914 = vpack.c.bf16 %v4906, %v4906
      %v4915 = vpack.c.bf16 %v4907, %v4907
      %vm4916 = vcmask 60416
      %4917 = vst.msk [vmem:[%s355] sm:$0xf] %vm4916, %v4908
      %4918 = vst.msk [vmem:[%s355 + $0x4] sm:$0xf] %vm4916, %v4909
      %4919 = vst.msk [vmem:[%s355 + $0x8] sm:$0xf] %vm4916, %v4910
      %4920 = vst.msk [vmem:[%s355 + $0xc] sm:$0xf] %vm4916, %v4911
      %4921 = vst.msk [vmem:[%s355 + $0x10] sm:$0xf] %vm4916, %v4912
      %4922 = vst.msk [vmem:[%s355 + $0x14] sm:$0xf] %vm4916, %v4913
      %4923 = vst.msk [vmem:[%s355 + $0x18] sm:$0xf] %vm4916, %v4914
      %4924 = vst.msk [vmem:[%s355 + $0x1c] sm:$0xf] %vm4916, %v4915
      %v4925 = vsel %vm511, %v4900, 0.0
      %v4926 = vsel %vm511, %v4901, 0.0
      %v4927 = vadd.f32 %v4925, %v4926
      %v4928 = vsel %vm511, %v4902, 0.0
      %v4929 = vadd.f32 %v4927, %v4928
      %v4930 = vsel %vm511, %v4903, 0.0
      %v4931 = vadd.f32 %v4929, %v4930
      %v4932 = vsel %vm511, %v4904, 0.0
      %v4933 = vadd.f32 %v4931, %v4932
      %v4934 = vsel %vm511, %v4905, 0.0
      %v4935 = vadd.f32 %v4933, %v4934
      %v4936 = vsel %vm511, %v4906, 0.0
      %v4937 = vadd.f32 %v4935, %v4936
      %v4938 = vsel %vm511, %v4907, 0.0
      %v4939 = vadd.f32 %v4937, %v4938
      %v4940 = vrot.slane %v4939, 4
      %v4941 = vadd.f32 %v4939, %v4940
      %v4942 = vrot.slane %v4941, 2
      %v4943 = vadd.f32 %v4941, %v4942
      %v4944 = vrot.slane %v4943, 1
      %v4945 = vadd.f32 %v4943, %v4944
      %vm4946 = vcmask 57344
      %4947 = vst.msk [vmem:[%s363] sm:$0x1] %vm4946, %v4945
      %v4948 = vmul.f32 %v4900, %v4900
      %v4949 = vmul.f32 %v4901, %v4901
      %v4950 = vmul.f32 %v4902, %v4902
      %v4951 = vmul.f32 %v4903, %v4903
      %v4952 = vmul.f32 %v4904, %v4904
      %v4953 = vmul.f32 %v4905, %v4905
      %v4954 = vmul.f32 %v4906, %v4906
      %v4955 = vmul.f32 %v4907, %v4907
      %v4956 = vsel %vm511, %v4948, 0.0
      %v4957 = vsel %vm511, %v4949, 0.0
      %v4958 = vadd.f32 %v4956, %v4957
      %v4959 = vsel %vm511, %v4950, 0.0
      %v4960 = vadd.f32 %v4958, %v4959
      %v4961 = vsel %vm511, %v4951, 0.0
      %v4962 = vadd.f32 %v4960, %v4961
      %v4963 = vsel %vm511, %v4952, 0.0
      %v4964 = vadd.f32 %v4962, %v4963
      %v4965 = vsel %vm511, %v4953, 0.0
      %v4966 = vadd.f32 %v4964, %v4965
      %v4967 = vsel %vm511, %v4954, 0.0
      %v4968 = vadd.f32 %v4966, %v4967
      %v4969 = vsel %vm511, %v4955, 0.0
      %v4970 = vadd.f32 %v4968, %v4969
      %v4971 = vrot.slane %v4970, 4
      %v4972 = vadd.f32 %v4970, %v4971
      %v4973 = vrot.slane %v4972, 2
      %v4974 = vadd.f32 %v4972, %v4973
      %v4975 = vrot.slane %v4974, 1
      %v4976 = vadd.f32 %v4974, %v4975
      %4977 = vst.msk [vmem:[%s363 + $0x1] sm:$0x1] %vm4946, %v4976
      %p4978 = scmp.lt.s32.totalorder %s21, 1
      %s4979 = scalar_select %p4978, %s21, 1
      %p4980 = scmp.lt.s32.totalorder %s22, 7
      %s4981 = scalar_select %p4980, %s22, 7
      %s4982 = smul.addr %s4981, 8
      %s4983 = smul.addr %s4979, 64
      %s4984 = sadd.s32 %s4982, %s4983
      %s4985 = smul.addr %s4984, 4
      %s4986 = scalar_lea.vmem %s4, %s4985
      %p4987 = scmp.lt.s32.totalorder %s21, 1
      %s4988 = scalar_select %p4987, %s21, 1
      %p4989 = scmp.lt.s32.totalorder %s22, 7
      %s4990 = scalar_select %p4989, %s22, 7
      %s4991 = smul.addr %s4988, 8
      %s4992 = sadd.s32 %s4990, %s4991
      %s4993 = smul.addr %s4992, 2
      %s4994 = scalar_lea.vmem %s5, %s4993
      // Predicated region
      $region37: #{residual_block_forward.4} parent=35 // pred_check
        %p4995 = pneg %p158
      $region38: #{residual_block_forward.4} parent=35 // pred_check_branch
        %4997 = sbr.rel (%p4995) target = $region40
      $region39: #{residual_block_forward.4} parent=35 // pred_region
        _
      $region40: #{residual_block_forward.4} parent=35 // pred_fallthru
        _
      // Predicated region
      $region41: #{residual_block_forward.4} parent=35 // pred_check
        %p4998 = pneg %p186
      $region42: #{residual_block_forward.4} parent=35 // pred_check_branch
        %5000 = sbr.rel (%p4998) target = $region44
      $region43: #{residual_block_forward.4} parent=35 // pred_region
        _
      $region44: #{residual_block_forward.4} parent=35 // pred_fallthru
        _
    $region36: #{residual_block_forward.4} parent=5 // pred_fallthru
      _
    %p5001 = scmp.le.s32.totalorder 2, %s12
    // Predicated region
    $region45: #{residual_block_forward.4} parent=5 // pred_check
      %p5002 = pneg %p5001
    $region46: #{residual_block_forward.4} parent=5 // pred_check_branch
      %5004 = sbr.rel (%p5002) target = $region48
    $region47: #{residual_block_forward.4} parent=5 // pred_region
      %s5005 = ssub.s32 %s12, 2
      // Predicated region
      $region49: #{residual_block_forward.4} parent=47 // pred_check
        %p5006 = pneg %p164
      $region50: #{residual_block_forward.4} parent=47 // pred_check_branch
        %5008 = sbr.rel (%p5006) target = $region52
      $region51: #{residual_block_forward.4} parent=47 // pred_region
        %p5009 = scmp.lt.s32.totalorder %s23, 1
        %s5010 = scalar_select %p5009, %s23, 1
        %p5011 = scmp.lt.s32.totalorder %s24, 7
        %s5012 = scalar_select %p5011, %s24, 7
        %s5013 = smul.addr %s5012, 8
        %s5014 = smul.addr %s5010, 64
        %s5015 = sadd.s32 %s5013, %s5014
        %s5016 = smul.addr %s5015, 4
        %s5017 = scalar_lea.vmem %s4, %s5016
      $region52: #{residual_block_forward.4} parent=47 // pred_fallthru
        _
      // Predicated region
      $region53: #{residual_block_forward.4} parent=47 // pred_check
        %p5018 = pneg %p192
      $region54: #{residual_block_forward.4} parent=47 // pred_check_branch
        %5020 = sbr.rel (%p5018) target = $region56
      $region55: #{residual_block_forward.4} parent=47 // pred_region
        %p5021 = scmp.lt.s32.totalorder %s23, 1
        %s5022 = scalar_select %p5021, %s23, 1
        %p5023 = scmp.lt.s32.totalorder %s24, 7
        %s5024 = scalar_select %p5023, %s24, 7
        %s5025 = smul.addr %s5022, 8
        %s5026 = sadd.s32 %s5024, %s5025
        %s5027 = smul.addr %s5026, 2
        %s5028 = scalar_lea.vmem %s5, %s5027
      $region56: #{residual_block_forward.4} parent=47 // pred_fallthru
        _
    $region48: #{residual_block_forward.4} parent=5 // pred_fallthru
      _
  $region6: #{residual_block_forward.4} parent=0 // loop_footer
    %s16 = sadd.s32 1, %s12
  $region7: #{residual_block_forward.4} parent=0 // loop_footer_branch
    %11 = sbr.rel target = $region3
  $region8: #{residual_block_forward.4} parent=0 // loop_exit
    _

</llo_original>
